<compile_context>
chip_gen: v5e
topology: v5e:2x2
jax: 0.10.0
libtpu: 0.0.40
codegen_flags: <defaults>
</compile_context>

<pallas_src>
import functools
import math

import jax
import jax.numpy as jnp
from jax.experimental import pallas as pl
from jax.experimental.pallas import tpu as pltpu


# ----------------------------------------------------------------------------
# Generation-aware VMEM limit (≈3/4 of physical, clamped to [32, 96] MiB).
# ----------------------------------------------------------------------------
@functools.lru_cache(maxsize=1)
def _vmem_limit():
    cap = 128 * 1024 * 1024
    try:
        info = pltpu.get_tpu_info()
        cap = int(getattr(info, "vmem_capacity_bytes", cap))
    except Exception:
        pass
    return max(32 * 1024 * 1024, min(cap * 3 // 4, 96 * 1024 * 1024))


def _pick_tile(dim, cap, *, must_divide=False, step=128):
    """Largest tile <= cap, preferring an exact (step-aligned) divisor of dim."""
    if dim <= cap:
        return dim
    t = (cap // step) * step
    while t >= step:
        if dim % t == 0:
            return t
        t -= step
    # No aligned divisor: full dim when exact division is required (K axis),
    # otherwise accept an overhang block.
    return dim if must_divide else (cap // step) * step


# ----------------------------------------------------------------------------
# Fused (LayerNorm) -> matmul -> (+bias) -> (QuickGELU) -> (+residual) kernel
# ----------------------------------------------------------------------------
def _matmul_kernel(*refs, has_bias, has_res, has_ln, ln_eps, activation):
    a_ref, w_ref = refs[0], refs[1]
    idx = 2
    b_ref = r_ref = lnw_ref = lnb_ref = None
    if has_bias:
        b_ref = refs[idx]; idx += 1
    if has_res:
        r_ref = refs[idx]; idx += 1
    if has_ln:
        lnw_ref = refs[idx]; lnb_ref = refs[idx + 1]; idx += 2
    o_ref = refs[idx]
    acc_ref = refs[idx + 1]

    k = pl.program_id(2)

    @pl.when(k == 0)
    def _init():
        acc_ref[...] = jnp.zeros_like(acc_ref)

    a = a_ref[...]                                   # bf16 tile
    if has_ln:
        # LN over the full feature dim (tk == K when has_ln); stats in f32.
        af = a.astype(jnp.float32)
        mean = jnp.mean(af, axis=-1, keepdims=True)
        xc = af - mean
        var = jnp.mean(xc * xc, axis=-1, keepdims=True)
        a = (xc * jax.lax.rsqrt(var + ln_eps) * lnw_ref[...]
             + lnb_ref[...]).astype(jnp.bfloat16)

    acc_ref[...] += jnp.dot(a, w_ref[...], preferred_element_type=jnp.float32)

    @pl.when(k == pl.num_programs(2) - 1)
    def _finalize():
        out = acc_ref[...]
        if has_bias:
            out = out + b_ref[...]
        if activation == "quick_gelu":               # CLIP QuickGELU, f32 epilogue
            out = out * jax.nn.sigmoid(1.702 * out)
        if has_res:
            out = out + r_ref[...].astype(jnp.float32)
        o_ref[...] = out.astype(o_ref.dtype)


def pallas_matmul(a, w, bias=None, *, residual=None, ln_w=None, ln_b=None,
                  ln_eps=1e-5, activation="none", out_dtype=jnp.float32,
                  tm=512, tn=1024, tk=1024):
    """(optional LN(a)) @ w + bias, optional QuickGELU, optional residual add.

    a:(M,K), w:(K,N), bias:(N,), residual:(M,N).  MXU runs in bf16 with f32
    accumulation.  When ln_w/ln_b are given, K is a single block (LN needs the
    full feature dim).  K always tiles exactly (no padded contraction).
    """
    M, K = a.shape
    K2, N = w.shape
    assert K == K2
    has_bias = bias is not None
    has_res = residual is not None
    has_ln = ln_w is not None

    tm = _pick_tile(M, tm)
    tn = _pick_tile(N, tn)
    tk = K if has_ln else _pick_tile(K, tk, must_divide=True)
    gm, gn, gk = pl.cdiv(M, tm), pl.cdiv(N, tn), pl.cdiv(K, tk)

    a = a.astype(jnp.bfloat16)                       # bf16 A DMA (LN stats upcast inside)
    w = w.astype(jnp.bfloat16)

    inputs = [a, w]
    in_specs = [pl.BlockSpec((tm, tk), lambda i, j, k: (i, k)),
                pl.BlockSpec((tk, tn), lambda i, j, k: (k, j))]
    # TODO(synk): optionally pipeline_mode=pl.Buffered(3) on the weight spec for
    # long-K contractions (c_proj) once validated on the target jax version.
    if has_bias:
        inputs.append(bias.reshape(1, N).astype(jnp.float32))
        in_specs.append(pl.BlockSpec((1, tn), lambda i, j, k: (0, j)))
    if has_res:
        inputs.append(residual)
        in_specs.append(pl.BlockSpec((tm, tn), lambda i, j, k: (i, j)))
    if has_ln:
        inputs.append(ln_w.reshape(1, K).astype(jnp.float32))
        inputs.append(ln_b.reshape(1, K).astype(jnp.float32))
        in_specs.append(pl.BlockSpec((1, K), lambda i, j, k: (0, 0)))
        in_specs.append(pl.BlockSpec((1, K), lambda i, j, k: (0, 0)))

    out_bytes = jnp.dtype(out_dtype).itemsize
    bytes_accessed = M * K * 2 + K * N * 2 + M * N * out_bytes
    if has_bias:
        bytes_accessed += N * 4
    if has_res:
        bytes_accessed += M * N * residual.dtype.itemsize
    if has_ln:
        bytes_accessed += 2 * K * 4
    cost = pl.CostEstimate(
        flops=2 * M * N * K,
        transcendentals=(M * N if activation == "quick_gelu" else 0),
        bytes_accessed=bytes_accessed)

    kernel = functools.partial(_matmul_kernel, has_bias=has_bias,
                               has_res=has_res, has_ln=has_ln,
                               ln_eps=ln_eps, activation=activation)
    return pl.pallas_call(
        kernel,
        out_shape=jax.ShapeDtypeStruct((M, N), out_dtype),
        grid=(gm, gn, gk),
        in_specs=in_specs,
        out_specs=pl.BlockSpec((tm, tn), lambda i, j, k: (i, j)),
        scratch_shapes=[pltpu.VMEM((tm, tn), jnp.float32)],
        cost_estimate=cost,
        compiler_params=pltpu.CompilerParams(
            dimension_semantics=("parallel", "parallel", "arbitrary"),
            vmem_limit_bytes=_vmem_limit()),
    )(*inputs)


# ----------------------------------------------------------------------------
# Standalone LayerNorm (only used for ln_pre), row-tiled, bf16 output stream.
# ----------------------------------------------------------------------------
def _layernorm_kernel(x_ref, w_ref, b_ref, o_ref, *, eps):
    x = x_ref[...].astype(jnp.float32)
    mean = jnp.mean(x, axis=-1, keepdims=True)
    xc = x - mean
    var = jnp.mean(xc * xc, axis=-1, keepdims=True)
    o_ref[...] = (xc * jax.lax.rsqrt(var + eps) * w_ref[...]
                  + b_ref[...]).astype(o_ref.dtype)


def pallas_layernorm(x, w, b, eps=1e-5, rows=512, out_dtype=jnp.bfloat16):
    M, D = x.shape
    rb = M if M <= rows else rows
    return pl.pallas_call(
        functools.partial(_layernorm_kernel, eps=eps),
        out_shape=jax.ShapeDtypeStruct((M, D), out_dtype),
        grid=(pl.cdiv(M, rb),),
        in_specs=[pl.BlockSpec((rb, D), lambda i: (i, 0)),
                  pl.BlockSpec((1, D), lambda i: (0, 0)),
                  pl.BlockSpec((1, D), lambda i: (0, 0))],
        out_specs=pl.BlockSpec((rb, D), lambda i: (i, 0)),
        compiler_params=pltpu.CompilerParams(
            dimension_semantics=("parallel",),
            vmem_limit_bytes=_vmem_limit()),
    )(x.astype(jnp.float32),
      w.reshape(1, D).astype(jnp.float32),
      b.reshape(1, D).astype(jnp.float32))


# ----------------------------------------------------------------------------
# Attention.  Packed QKV (B, Tp, 3W) -> (B, Tp, W) head-concatenated.
# Head (group) selection is done entirely via BlockSpec index maps: no dynamic
# lane-dim offsets, lane-dense 128-wide output blocks, heads axis parallel.
# Pad keys (Tp > t_real) are masked so padding does not change the softmax.
# ----------------------------------------------------------------------------
def _attention_kernel(q_ref, k_ref, v_ref, o_ref, *, hd, n_heads, scale,
                      t_real, q_off, k_off, v_off):
    Tp = o_ref.shape[1]
    mask_keys = t_real < Tp
    if mask_keys:
        valid = jax.lax.broadcasted_iota(jnp.int32, (1, Tp), 1) < t_real
    for h in range(n_heads):                              # static unrolled loop
        q = q_ref[0, :, q_off + h * hd: q_off + (h + 1) * hd]      # (Tp, hd) bf16
        k = k_ref[0, :, k_off + h * hd: k_off + (h + 1) * hd]
        v = v_ref[0, :, v_off + h * hd: v_off + (h + 1) * hd]
        q = (q.astype(jnp.float32) * scale).astype(k.dtype)        # fold 1/sqrt(hd)
        # QK^T without materializing k.T: contract the head dim directly.
        s = jax.lax.dot_general(q, k, (((1,), (1,)), ((), ())),
                                preferred_element_type=jnp.float32)  # (Tp, Tp)
        if mask_keys:
            s = jnp.where(valid, s, -1e30)
        s = s - jnp.max(s, axis=-1, keepdims=True)
        p = jnp.exp(s)
        p = p * pl.reciprocal(jnp.sum(p, axis=-1, keepdims=True))   # exact recip
        o = jnp.dot(p.astype(v.dtype), v, preferred_element_type=jnp.float32)
        o_ref[0, :, h * hd:(h + 1) * hd] = o.astype(o_ref.dtype)


def pallas_attention(qkv, heads, hd, t_real):
    """qkv: (B, Tp, 3*heads*hd) -> (B, Tp, heads*hd); keys >= t_real are masked."""
    B, Tp, threeW = qkv.shape
    W = heads * hd
    assert threeW == 3 * W
    scale = 1.0 / math.sqrt(hd)
    qkv = qkv.astype(jnp.bfloat16)

    aligned = (W % 128 == 0) and (hd <= 128) and (128 % hd == 0)
    if aligned:
        # 128-lane head groups; q/k/v column blocks chosen by index_map only.
        hpg = 128 // hd
        groups = W // 128
        k_blk0, v_blk0 = W // 128, 2 * W // 128
        kernel = functools.partial(_attention_kernel, hd=hd, n_heads=hpg,
                                   scale=scale, t_real=t_real,
                                   q_off=0, k_off=0, v_off=0)
        in_specs = [pl.BlockSpec((1, Tp, 128), lambda b, g: (b, 0, g)),
                    pl.BlockSpec((1, Tp, 128), lambda b, g: (b, 0, k_blk0 + g)),
                    pl.BlockSpec((1, Tp, 128), lambda b, g: (b, 0, v_blk0 + g))]
        out_spec = pl.BlockSpec((1, Tp, 128), lambda b, g: (b, 0, g))
        grid = (B, groups)
        sem = ("parallel", "parallel")
    else:
        # Small/odd widths: one full-width block per batch element; static
        # per-head offsets inside the kernel (no program_id-dependent slices).
        kernel = functools.partial(_attention_kernel, hd=hd, n_heads=heads,
                                   scale=scale, t_real=t_real,
                                   q_off=0, k_off=W, v_off=2 * W)
        in_specs = [pl.BlockSpec((1, Tp, 3 * W), lambda b: (b, 0, 0))] * 3
        out_spec = pl.BlockSpec((1, Tp, W), lambda b: (b, 0, 0))
        grid = (B,)
        sem = ("parallel",)

    # TODO(synk): for long sequences add flash-style T tiling; full-T blocks are
    # fine up to CLIP's T<=257.
    return pl.pallas_call(
        kernel,
        out_shape=jax.ShapeDtypeStruct((B, Tp, W), jnp.bfloat16),
        grid=grid,
        in_specs=in_specs,
        out_specs=out_spec,
        compiler_params=pltpu.CompilerParams(
            dimension_semantics=sem,
            vmem_limit_bytes=_vmem_limit()),
    )(qkv, qkv, qkv)


# ----------------------------------------------------------------------------
# Bilinear interpolation (align_corners=False): out = Ah @ x @ Aw^T, all 3*B
# planes handled in a single grid step (negligible FLOPs, avoid per-plane
# grid-step overhead).
# ----------------------------------------------------------------------------
def bilinear_matrix(out_size, in_size):
    scale = in_size / out_size
    dst = jnp.arange(out_size, dtype=jnp.float32)
    src = jnp.clip((dst + 0.5) * scale - 0.5, 0.0, in_size - 1)
    lo = jnp.floor(src).astype(jnp.int32)
    hi = jnp.minimum(lo + 1, in_size - 1)
    w_hi = src - lo.astype(jnp.float32)
    w_lo = 1.0 - w_hi
    m = jnp.zeros((out_size, in_size), jnp.float32)
    m = m.at[jnp.arange(out_size), lo].add(w_lo)
    m = m.at[jnp.arange(out_size), hi].add(w_hi)
    return m


def _resize_kernel(x_ref, ah_ref, awt_ref, o_ref):
    ah = ah_ref[...]
    awt = awt_ref[...]
    for n in range(x_ref.shape[0]):                 # static #planes = 3*B
        t = jnp.dot(ah, x_ref[n].astype(jnp.float32),
                    preferred_element_type=jnp.float32)            # (R, Wm)
        o_ref[n] = jnp.dot(t, awt, preferred_element_type=jnp.float32)


def pallas_bilinear_resize(x, R):
    """x: (N, Hm, Wm) -> (N, R, R), bilinear, align_corners=False."""
    N, Hm, Wm = x.shape
    Ah = bilinear_matrix(R, Hm)          # (R, Hm)
    AwT = bilinear_matrix(R, Wm).T       # (Wm, R)
    return pl.pallas_call(
        _resize_kernel,
        out_shape=jax.ShapeDtypeStruct((N, R, R), jnp.float32),
        grid=(1,),
        in_specs=[pl.BlockSpec((N, Hm, Wm), lambda i: (0, 0, 0)),
                  pl.BlockSpec((R, Hm), lambda i: (0, 0)),
                  pl.BlockSpec((Wm, R), lambda i: (0, 0))],
        out_specs=pl.BlockSpec((N, R, R), lambda i: (0, 0, 0)),
        compiler_params=pltpu.CompilerParams(vmem_limit_bytes=_vmem_limit()),
    )(x.astype(jnp.float32), Ah, AwT)


# ----------------------------------------------------------------------------
# Model forward (CLIP VisionTransformer on the interpolated mask embedding)
# ----------------------------------------------------------------------------
def vision_transformer(params, x_img, cfg):
    B = x_img.shape[0]
    P, W, R = cfg["patch"], cfg["width"], cfg["res"]
    g = R // P
    T = g * g + 1
    Tp = ((T + 7) // 8) * 8             # token pad to sublane multiple; keys masked
    heads = cfg["heads"]
    hd = W // heads

    # conv1 (stride = kernel = P, no bias) as a patch matmul (im2col is glue).
    patches = (x_img.reshape(B, 3, g, P, g, P)
               .transpose(0, 2, 4, 1, 3, 5)
               .reshape(B * g * g, 3 * P * P))
    x = pallas_matmul(patches, params["conv1_w"]).reshape(B, g * g, W)

    cls = jnp.broadcast_to(params["class_embedding"].reshape(1, 1, W), (B, 1, W))
    x = jnp.concatenate([cls, x], axis=1) + params["positional_embedding"][None]
    if Tp > T:
        x = jnp.pad(x, ((0, 0), (0, Tp - T), (0, 0)))   # zero pad rows (masked later)

    # ln_pre -> bf16 residual stream.
    x = pallas_layernorm(x.reshape(B * Tp, W),
                         params["ln_pre_w"], params["ln_pre_b"])    # (B*Tp, W) bf16

    for lp in params["layers"]:
        # Attention block: fused LN1 + QKV projection -> attention -> out_proj
        # with fused residual add.
        qkv = pallas_matmul(x, lp["in_proj_w"], lp["in_proj_b"],
                            ln_w=lp["ln1_w"], ln_b=lp["ln1_b"],
                            out_dtype=jnp.bfloat16)                  # (B*Tp, 3W)
        attn = pallas_attention(qkv.reshape(B, Tp, 3 * W), heads, hd, T)
        x = pallas_matmul(attn.reshape(B * Tp, W),
                          lp["out_proj_w"], lp["out_proj_b"],
                          residual=x, out_dtype=jnp.bfloat16)        # (B*Tp, W)

        # MLP: fused LN2 + c_fc + QuickGELU, then c_proj + residual.
        h = pallas_matmul(x, lp["c_fc_w"], lp["c_fc_b"],
                          ln_w=lp["ln2_w"], ln_b=lp["ln2_b"],
                          activation="quick_gelu",
                          out_dtype=jnp.bfloat16)                    # (B*Tp, 4W)
        x = pallas_matmul(h, lp["c_proj_w"], lp["c_proj_b"],
                          residual=x, out_dtype=jnp.bfloat16)        # (B*Tp, W)

    cls_tok = x.reshape(B, Tp, W)[:, 0, :]                           # (B, W)
    # fused ln_post + output projection (no bias), f32 output
    return pallas_matmul(cls_tok, params["proj"],
                         ln_w=params["ln_post_w"], ln_b=params["ln_post_b"])


def mask_encoder_forward(params, mask_tokens, cfg):
    B, Hm, Wm = mask_tokens.shape
    R = cfg["res"]
    emb = params["embedding"][mask_tokens]                      # (B, Hm, Wm, 3) gather
    x = emb.transpose(0, 3, 1, 2).reshape(B * 3, Hm, Wm)        # NCHW, flat channels
    z = pallas_bilinear_resize(x, R).reshape(B, 3, R, R)
    return vision_transformer(params, z, cfg)


# ----------------------------------------------------------------------------
# Deterministic parameter init (synthetic).  Matmul weights are stored bf16 and
# already transposed to (in_features, out_features); e.g. "in_proj_w" here is
# torch's attn.in_proj_weight.T, "conv1_w" is conv1.weight.reshape(W,-1).T.
# ----------------------------------------------------------------------------
def init_params(key, cfg):
    W, P, R, E = cfg["width"], cfg["patch"], cfg["res"], cfg["embed_dim"]
    g = R // P
    T = g * g + 1
    keys = iter(jax.random.split(key, 8 + 12 * cfg["layers"]))

    def nrm(shape, scale=0.02, dtype=jnp.float32):
        return (jax.random.normal(next(keys), shape, jnp.float32) * scale).astype(dtype)

    bf = jnp.bfloat16
    params = {
        "embedding": nrm((cfg["num_embeddings"], 3), 1.0),
        "conv1_w": nrm((3 * P * P, W), dtype=bf),
        "class_embedding": nrm((W,)),
        "positional_embedding": nrm((T, W)),
        "ln_pre_w": jnp.ones((W,), jnp.float32),
        "ln_pre_b": jnp.zeros((W,), jnp.float32),
        "ln_post_w": jnp.ones((W,), jnp.float32),
        "ln_post_b": jnp.zeros((W,), jnp.float32),
        "proj": nrm((W, E), dtype=bf),
        "layers": [],
    }
    for _ in range(cfg["layers"]):
        params["layers"].append({
            "ln1_w": jnp.ones((W,), jnp.float32),
            "ln1_b": jnp.zeros((W,), jnp.float32),
            "in_proj_w": nrm((W, 3 * W), dtype=bf),
            "in_proj_b": nrm((3 * W,)),
            "out_proj_w": nrm((W, W), dtype=bf),
            "out_proj_b": nrm((W,)),
            "ln2_w": jnp.ones((W,), jnp.float32),
            "ln2_b": jnp.zeros((W,), jnp.float32),
            "c_fc_w": nrm((W, 4 * W), dtype=bf),
            "c_fc_b": nrm((4 * W,)),
            "c_proj_w": nrm((4 * W, W), dtype=bf),
            "c_proj_b": nrm((W,)),
        })
    return params


if __name__ == "__main__":
    # Small config consistent with the module (heads = width // 64).
    cfg = dict(num_embeddings=19, res=32, patch=16, width=64,
               layers=2, heads=1, embed_dim=32)

    key = jax.random.PRNGKey(0)
    k_param, k_mask = jax.random.split(key)
    params = init_params(k_param, cfg)

    B, Hm, Wm = 2, 8, 8
    mask = jax.random.randint(k_mask, (B, Hm, Wm), 0, cfg["num_embeddings"],
                              dtype=jnp.int32)

    fwd = jax.jit(functools.partial(mask_encoder_forward, cfg=cfg))
    out = fwd(params, mask)
    jax.block_until_ready(out)
    assert out.shape == (B, cfg["embed_dim"])
    assert jnp.all(jnp.isfinite(out))
    print("KERNEL_OK")
</pallas_src>

<mosaic_0001>
module attributes {stable_mosaic.version = 11 : i64} {
  func.func @_resize_kernel(%arg0: i32, %arg1: memref<6x8x8xf32, #tpu.memory_space<vmem>>, %arg2: memref<32x8xf32, #tpu.memory_space<vmem>>, %arg3: memref<8x32xf32, #tpu.memory_space<vmem>>, %arg4: memref<6x32x32xf32, #tpu.memory_space<vmem>>) attributes {dimension_semantics = [#tpu.dimension_semantics<arbitrary>], iteration_bounds = array<i64: 1>, scalar_prefetch = 0 : i64, scratch_operands = 0 : i64, tpu.core_type = #tpu.core_type<tc>, window_params = [{pipeline_mode = #tpu.pipeline_mode<synchronous>, transform_indices = @transform_0, window_bounds = array<i64: 6, 8, 8>}, {pipeline_mode = #tpu.pipeline_mode<synchronous>, transform_indices = @transform_1, window_bounds = array<i64: 32, 8>}, {pipeline_mode = #tpu.pipeline_mode<synchronous>, transform_indices = @transform_2, window_bounds = array<i64: 8, 32>}, {pipeline_mode = #tpu.pipeline_mode<synchronous>, transform_indices = @transform_3, window_bounds = array<i64: 6, 32, 32>}]} {
    %c0 = arith.constant 0 : index
    %c0_0 = arith.constant 0 : index
    %0 = vector.load %arg2[%c0, %c0_0] : memref<32x8xf32, #tpu.memory_space<vmem>>, vector<32x8xf32>
    %c0_1 = arith.constant 0 : index
    %c0_2 = arith.constant 0 : index
    %1 = vector.load %arg3[%c0_1, %c0_2] : memref<8x32xf32, #tpu.memory_space<vmem>>, vector<8x32xf32>
    %c0_3 = arith.constant 0 : index
    %c0_4 = arith.constant 0 : index
    %c0_5 = arith.constant 0 : index
    %2 = vector.load %arg1[%c0_3, %c0_4, %c0_5] : memref<6x8x8xf32, #tpu.memory_space<vmem>>, vector<1x8x8xf32>
    %3 = vector.shape_cast %2 : vector<1x8x8xf32> to vector<8x8xf32>
    %cst = arith.constant dense<0.000000e+00> : vector<32x8xf32>
    %4 = tpu.matmul %0, %3, %cst {dimension_numbers = #tpu.dot_dimension_numbers<[1], [0], [0], [1], [0, 0, 1, 1], [], []>} : vector<32x8xf32>, vector<8x8xf32>, vector<32x8xf32> -> vector<32x8xf32>
    %cst_6 = arith.constant dense<0.000000e+00> : vector<32x32xf32>
    %5 = tpu.matmul %4, %1, %cst_6 {dimension_numbers = #tpu.dot_dimension_numbers<[1], [0], [0], [1], [0, 0, 1, 1], [], []>} : vector<32x8xf32>, vector<8x32xf32>, vector<32x32xf32> -> vector<32x32xf32>
    %c0_7 = arith.constant 0 : index
    %c0_8 = arith.constant 0 : index
    %c0_9 = arith.constant 0 : index
    %6 = vector.load %arg4[%c0_7, %c0_8, %c0_9] : memref<6x32x32xf32, #tpu.memory_space<vmem>>, vector<1x32x32xf32>
    %7 = vector.shape_cast %6 : vector<1x32x32xf32> to vector<32x32xf32>
    %8 = vector.shape_cast %5 : vector<32x32xf32> to vector<1x32x32xf32>
    tpu.vector_store %arg4[%c0_7, %c0_8, %c0_9], %8 {strides = array<i32>} : memref<6x32x32xf32, #tpu.memory_space<vmem>>, vector<1x32x32xf32>,
    %c1 = arith.constant 1 : index
    %c0_10 = arith.constant 0 : index
    %c0_11 = arith.constant 0 : index
    %9 = vector.load %arg1[%c1, %c0_10, %c0_11] : memref<6x8x8xf32, #tpu.memory_space<vmem>>, vector<1x8x8xf32>
    %10 = vector.shape_cast %9 : vector<1x8x8xf32> to vector<8x8xf32>
    %cst_12 = arith.constant dense<0.000000e+00> : vector<32x8xf32>
    %11 = tpu.matmul %0, %10, %cst_12 {dimension_numbers = #tpu.dot_dimension_numbers<[1], [0], [0], [1], [0, 0, 1, 1], [], []>} : vector<32x8xf32>, vector<8x8xf32>, vector<32x8xf32> -> vector<32x8xf32>
    %cst_13 = arith.constant dense<0.000000e+00> : vector<32x32xf32>
    %12 = tpu.matmul %11, %1, %cst_13 {dimension_numbers = #tpu.dot_dimension_numbers<[1], [0], [0], [1], [0, 0, 1, 1], [], []>} : vector<32x8xf32>, vector<8x32xf32>, vector<32x32xf32> -> vector<32x32xf32>
    %c1_14 = arith.constant 1 : index
    %c0_15 = arith.constant 0 : index
    %c0_16 = arith.constant 0 : index
    %13 = vector.load %arg4[%c1_14, %c0_15, %c0_16] : memref<6x32x32xf32, #tpu.memory_space<vmem>>, vector<1x32x32xf32>
    %14 = vector.shape_cast %13 : vector<1x32x32xf32> to vector<32x32xf32>
    %15 = vector.shape_cast %12 : vector<32x32xf32> to vector<1x32x32xf32>
    tpu.vector_store %arg4[%c1_14, %c0_15, %c0_16], %15 {strides = array<i32>} : memref<6x32x32xf32, #tpu.memory_space<vmem>>, vector<1x32x32xf32>,
    %c2 = arith.constant 2 : index
    %c0_17 = arith.constant 0 : index
    %c0_18 = arith.constant 0 : index
    %16 = vector.load %arg1[%c2, %c0_17, %c0_18] : memref<6x8x8xf32, #tpu.memory_space<vmem>>, vector<1x8x8xf32>
    %17 = vector.shape_cast %16 : vector<1x8x8xf32> to vector<8x8xf32>
    %cst_19 = arith.constant dense<0.000000e+00> : vector<32x8xf32>
    %18 = tpu.matmul %0, %17, %cst_19 {dimension_numbers = #tpu.dot_dimension_numbers<[1], [0], [0], [1], [0, 0, 1, 1], [], []>} : vector<32x8xf32>, vector<8x8xf32>, vector<32x8xf32> -> vector<32x8xf32>
    %cst_20 = arith.constant dense<0.000000e+00> : vector<32x32xf32>
    %19 = tpu.matmul %18, %1, %cst_20 {dimension_numbers = #tpu.dot_dimension_numbers<[1], [0], [0], [1], [0, 0, 1, 1], [], []>} : vector<32x8xf32>, vector<8x32xf32>, vector<32x32xf32> -> vector<32x32xf32>
    %c2_21 = arith.constant 2 : index
    %c0_22 = arith.constant 0 : index
    %c0_23 = arith.constant 0 : index
    %20 = vector.load %arg4[%c2_21, %c0_22, %c0_23] : memref<6x32x32xf32, #tpu.memory_space<vmem>>, vector<1x32x32xf32>
    %21 = vector.shape_cast %20 : vector<1x32x32xf32> to vector<32x32xf32>
    %22 = vector.shape_cast %19 : vector<32x32xf32> to vector<1x32x32xf32>
    tpu.vector_store %arg4[%c2_21, %c0_22, %c0_23], %22 {strides = array<i32>} : memref<6x32x32xf32, #tpu.memory_space<vmem>>, vector<1x32x32xf32>,
    %c3 = arith.constant 3 : index
    %c0_24 = arith.constant 0 : index
    %c0_25 = arith.constant 0 : index
    %23 = vector.load %arg1[%c3, %c0_24, %c0_25] : memref<6x8x8xf32, #tpu.memory_space<vmem>>, vector<1x8x8xf32>
    %24 = vector.shape_cast %23 : vector<1x8x8xf32> to vector<8x8xf32>
    %cst_26 = arith.constant dense<0.000000e+00> : vector<32x8xf32>
    %25 = tpu.matmul %0, %24, %cst_26 {dimension_numbers = #tpu.dot_dimension_numbers<[1], [0], [0], [1], [0, 0, 1, 1], [], []>} : vector<32x8xf32>, vector<8x8xf32>, vector<32x8xf32> -> vector<32x8xf32>
    %cst_27 = arith.constant dense<0.000000e+00> : vector<32x32xf32>
    %26 = tpu.matmul %25, %1, %cst_27 {dimension_numbers = #tpu.dot_dimension_numbers<[1], [0], [0], [1], [0, 0, 1, 1], [], []>} : vector<32x8xf32>, vector<8x32xf32>, vector<32x32xf32> -> vector<32x32xf32>
    %c3_28 = arith.constant 3 : index
    %c0_29 = arith.constant 0 : index
    %c0_30 = arith.constant 0 : index
    %27 = vector.load %arg4[%c3_28, %c0_29, %c0_30] : memref<6x32x32xf32, #tpu.memory_space<vmem>>, vector<1x32x32xf32>
    %28 = vector.shape_cast %27 : vector<1x32x32xf32> to vector<32x32xf32>
    %29 = vector.shape_cast %26 : vector<32x32xf32> to vector<1x32x32xf32>
    tpu.vector_store %arg4[%c3_28, %c0_29, %c0_30], %29 {strides = array<i32>} : memref<6x32x32xf32, #tpu.memory_space<vmem>>, vector<1x32x32xf32>,
    %c4 = arith.constant 4 : index
    %c0_31 = arith.constant 0 : index
    %c0_32 = arith.constant 0 : index
    %30 = vector.load %arg1[%c4, %c0_31, %c0_32] : memref<6x8x8xf32, #tpu.memory_space<vmem>>, vector<1x8x8xf32>
    %31 = vector.shape_cast %30 : vector<1x8x8xf32> to vector<8x8xf32>
    %cst_33 = arith.constant dense<0.000000e+00> : vector<32x8xf32>
    %32 = tpu.matmul %0, %31, %cst_33 {dimension_numbers = #tpu.dot_dimension_numbers<[1], [0], [0], [1], [0, 0, 1, 1], [], []>} : vector<32x8xf32>, vector<8x8xf32>, vector<32x8xf32> -> vector<32x8xf32>
    %cst_34 = arith.constant dense<0.000000e+00> : vector<32x32xf32>
    %33 = tpu.matmul %32, %1, %cst_34 {dimension_numbers = #tpu.dot_dimension_numbers<[1], [0], [0], [1], [0, 0, 1, 1], [], []>} : vector<32x8xf32>, vector<8x32xf32>, vector<32x32xf32> -> vector<32x32xf32>
    %c4_35 = arith.constant 4 : index
    %c0_36 = arith.constant 0 : index
    %c0_37 = arith.constant 0 : index
    %34 = vector.load %arg4[%c4_35, %c0_36, %c0_37] : memref<6x32x32xf32, #tpu.memory_space<vmem>>, vector<1x32x32xf32>
    %35 = vector.shape_cast %34 : vector<1x32x32xf32> to vector<32x32xf32>
    %36 = vector.shape_cast %33 : vector<32x32xf32> to vector<1x32x32xf32>
    tpu.vector_store %arg4[%c4_35, %c0_36, %c0_37], %36 {strides = array<i32>} : memref<6x32x32xf32, #tpu.memory_space<vmem>>, vector<1x32x32xf32>,
    %c5 = arith.constant 5 : index
    %c0_38 = arith.constant 0 : index
    %c0_39 = arith.constant 0 : index
    %37 = vector.load %arg1[%c5, %c0_38, %c0_39] : memref<6x8x8xf32, #tpu.memory_space<vmem>>, vector<1x8x8xf32>
    %38 = vector.shape_cast %37 : vector<1x8x8xf32> to vector<8x8xf32>
    %cst_40 = arith.constant dense<0.000000e+00> : vector<32x8xf32>
    %39 = tpu.matmul %0, %38, %cst_40 {dimension_numbers = #tpu.dot_dimension_numbers<[1], [0], [0], [1], [0, 0, 1, 1], [], []>} : vector<32x8xf32>, vector<8x8xf32>, vector<32x8xf32> -> vector<32x8xf32>
    %cst_41 = arith.constant dense<0.000000e+00> : vector<32x32xf32>
    %40 = tpu.matmul %39, %1, %cst_41 {dimension_numbers = #tpu.dot_dimension_numbers<[1], [0], [0], [1], [0, 0, 1, 1], [], []>} : vector<32x8xf32>, vector<8x32xf32>, vector<32x32xf32> -> vector<32x32xf32>
    %c5_42 = arith.constant 5 : index
    %c0_43 = arith.constant 0 : index
    %c0_44 = arith.constant 0 : index
    %41 = vector.load %arg4[%c5_42, %c0_43, %c0_44] : memref<6x32x32xf32, #tpu.memory_space<vmem>>, vector<1x32x32xf32>
    %42 = vector.shape_cast %41 : vector<1x32x32xf32> to vector<32x32xf32>
    %43 = vector.shape_cast %40 : vector<32x32xf32> to vector<1x32x32xf32>
    tpu.vector_store %arg4[%c5_42, %c0_43, %c0_44], %43 {strides = array<i32>} : memref<6x32x32xf32, #tpu.memory_space<vmem>>, vector<1x32x32xf32>,
    return
  }
  func.func @transform_0(%arg0: i32) -> (i32, i32, i32) {
    %c0_i32 = arith.constant 0 : i32
    %c0_i32_0 = arith.constant 0 : i32
    %c0_i32_1 = arith.constant 0 : i32
    %c0_i32_2 = arith.constant 0 : i32
    return %c0_i32, %c0_i32_0, %c0_i32_1 : i32, i32, i32
  }
  func.func @transform_1(%arg0: i32) -> (i32, i32) {
    %c0_i32 = arith.constant 0 : i32
    %c0_i32_0 = arith.constant 0 : i32
    %c0_i32_1 = arith.constant 0 : i32
    return %c0_i32, %c0_i32_0 : i32, i32
  }
  func.func @transform_2(%arg0: i32) -> (i32, i32) {
    %c0_i32 = arith.constant 0 : i32
    %c0_i32_0 = arith.constant 0 : i32
    %c0_i32_1 = arith.constant 0 : i32
    return %c0_i32, %c0_i32_0 : i32, i32
  }
  func.func @transform_3(%arg0: i32) -> (i32, i32, i32) {
    %c0_i32 = arith.constant 0 : i32
    %c0_i32_0 = arith.constant 0 : i32
    %c0_i32_1 = arith.constant 0 : i32
    %c0_i32_2 = arith.constant 0 : i32
    return %c0_i32, %c0_i32_0, %c0_i32_1 : i32, i32, i32
  }
}

module attributes {stable_mosaic.version = 11 : i64} {
  func.func @_matmul_kernel(%arg0: i32, %arg1: i32, %arg2: i32, %arg3: memref<8x768xbf16, #tpu.memory_space<vmem>>, %arg4: memref<768x64xbf16, #tpu.memory_space<vmem>>, %arg5: memref<8x64xf32, #tpu.memory_space<vmem>>, %arg6: memref<8x64xf32, #tpu.memory_space<vmem>>) attributes {dimension_semantics = [#tpu.dimension_semantics<parallel>, #tpu.dimension_semantics<parallel>, #tpu.dimension_semantics<arbitrary>], iteration_bounds = array<i64: 1, 1, 1>, scalar_prefetch = 0 : i64, scratch_operands = 1 : i64, tpu.core_type = #tpu.core_type<tc>, window_params = [{transform_indices = @transform_0, window_bounds = array<i64: 8, 768>}, {transform_indices = @transform_1, window_bounds = array<i64: 768, 64>}, {transform_indices = @transform_2, window_bounds = array<i64: 8, 64>}]} {
    %c0_i32 = arith.constant 0 : i32
    %0 = arith.cmpi eq, %arg2, %c0_i32 : i32
    %1 = arith.extui %0 : i1 to i32
    %c0_i32_0 = arith.constant 0 : i32
    %2 = arith.cmpi ne, %1, %c0_i32_0 : i32
    scf.if %2 {
      %cst_10 = arith.constant 0.000000e+00 : f32
      %12 = vector.broadcast %cst_10 : f32 to vector<8x64xf32>
      %c0_11 = arith.constant 0 : index
      %c0_12 = arith.constant 0 : index
      %13 = vector.load %arg6[%c0_11, %c0_12] : memref<8x64xf32, #tpu.memory_space<vmem>>, vector<8x64xf32>
      tpu.vector_store %arg6[%c0_11, %c0_12], %12 {strides = array<i32>} : memref<8x64xf32, #tpu.memory_space<vmem>>, vector<8x64xf32>,
    } else {
    }
    %c0 = arith.constant 0 : index
    %c0_1 = arith.constant 0 : index
    %3 = vector.load %arg3[%c0, %c0_1] : memref<8x768xbf16, #tpu.memory_space<vmem>>, vector<8x768xbf16>
    %c0_2 = arith.constant 0 : index
    %c0_3 = arith.constant 0 : index
    %4 = vector.load %arg6[%c0_2, %c0_3] : memref<8x64xf32, #tpu.memory_space<vmem>>, vector<8x64xf32>
    %c0_4 = arith.constant 0 : index
    %c0_5 = arith.constant 0 : index
    %5 = vector.load %arg4[%c0_4, %c0_5] : memref<768x64xbf16, #tpu.memory_space<vmem>>, vector<768x64xbf16>
    %cst = arith.constant dense<0.000000e+00> : vector<8x64xf32>
    %6 = tpu.matmul %3, %5, %cst {dimension_numbers = #tpu.dot_dimension_numbers<[1], [0], [0], [1], [0, 0, 1, 1], [], []>} : vector<8x768xbf16>, vector<768x64xbf16>, vector<8x64xf32> -> vector<8x64xf32>
    %7 = arith.addf %4, %6 : vector<8x64xf32>
    %c0_6 = arith.constant 0 : index
    %c0_7 = arith.constant 0 : index
    %8 = vector.load %arg6[%c0_6, %c0_7] : memref<8x64xf32, #tpu.memory_space<vmem>>, vector<8x64xf32>
    tpu.vector_store %arg6[%c0_6, %c0_7], %7 {strides = array<i32>} : memref<8x64xf32, #tpu.memory_space<vmem>>, vector<8x64xf32>,
    %c0_i32_8 = arith.constant 0 : i32
    %9 = arith.cmpi eq, %arg2, %c0_i32_8 : i32
    %10 = arith.extui %9 : i1 to i32
    %c0_i32_9 = arith.constant 0 : i32
    %11 = arith.cmpi ne, %10, %c0_i32_9 : i32
    scf.if %11 {
      %c0_10 = arith.constant 0 : index
      %c0_11 = arith.constant 0 : index
      %12 = vector.load %arg6[%c0_10, %c0_11] : memref<8x64xf32, #tpu.memory_space<vmem>>, vector<8x64xf32>
      %c0_12 = arith.constant 0 : index
      %c0_13 = arith.constant 0 : index
      %13 = vector.load %arg5[%c0_12, %c0_13] : memref<8x64xf32, #tpu.memory_space<vmem>>, vector<8x64xf32>
      tpu.vector_store %arg5[%c0_12, %c0_13], %12 {strides = array<i32>} : memref<8x64xf32, #tpu.memory_space<vmem>>, vector<8x64xf32>,
    } else {
    }
    return
  }
  func.func @transform_0(%arg0: i32, %arg1: i32, %arg2: i32) -> (i32, i32) {
    %c0_i32 = arith.constant 0 : i32
    return %arg0, %arg2 : i32, i32
  }
  func.func @transform_1(%arg0: i32, %arg1: i32, %arg2: i32) -> (i32, i32) {
    %c0_i32 = arith.constant 0 : i32
    return %arg2, %arg1 : i32, i32
  }
  func.func @transform_2(%arg0: i32, %arg1: i32, %arg2: i32) -> (i32, i32) {
    %c0_i32 = arith.constant 0 : i32
    return %arg0, %arg1 : i32, i32
  }
}

module attributes {stable_mosaic.version = 11 : i64} {
  func.func @_layernorm_kernel(%arg0: i32, %arg1: memref<16x64xf32, #tpu.memory_space<vmem>>, %arg2: memref<1x64xf32, #tpu.memory_space<vmem>>, %arg3: memref<1x64xf32, #tpu.memory_space<vmem>>, %arg4: memref<16x64xbf16, #tpu.memory_space<vmem>>) attributes {dimension_semantics = [#tpu.dimension_semantics<parallel>], iteration_bounds = array<i64: 1>, scalar_prefetch = 0 : i64, scratch_operands = 0 : i64, tpu.core_type = #tpu.core_type<tc>, window_params = [{transform_indices = @transform_0, window_bounds = array<i64: 16, 64>}, {pipeline_mode = #tpu.pipeline_mode<synchronous>, transform_indices = @transform_1, window_bounds = array<i64: 1, 64>}, {pipeline_mode = #tpu.pipeline_mode<synchronous>, transform_indices = @transform_2, window_bounds = array<i64: 1, 64>}, {transform_indices = @transform_3, window_bounds = array<i64: 16, 64>}]} {
    %c0 = arith.constant 0 : index
    %c0_0 = arith.constant 0 : index
    %0 = vector.load %arg1[%c0, %c0_0] : memref<16x64xf32, #tpu.memory_space<vmem>>, vector<16x64xf32>
    %cst = arith.constant dense<0.000000e+00> : vector<16xf32>
    %1 = vector.multi_reduction <add>, %0, %cst [1] : vector<16x64xf32> to vector<16xf32>
    %2 = vector.shape_cast %1 : vector<16xf32> to vector<16x1xf32>
    %cst_1 = arith.constant 6.400000e+01 : f32
    %3 = vector.broadcast %cst_1 : f32 to vector<16x1xf32>
    %4 = arith.divf %2, %3 : vector<16x1xf32>
    %5 = vector.broadcast %4 : vector<16x1xf32> to vector<16x64xf32>
    %6 = arith.subf %0, %5 : vector<16x64xf32>
    %7 = arith.mulf %6, %6 : vector<16x64xf32>
    %cst_2 = arith.constant dense<0.000000e+00> : vector<16xf32>
    %8 = vector.multi_reduction <add>, %7, %cst_2 [1] : vector<16x64xf32> to vector<16xf32>
    %9 = vector.shape_cast %8 : vector<16xf32> to vector<16x1xf32>
    %cst_3 = arith.constant 6.400000e+01 : f32
    %10 = vector.broadcast %cst_3 : f32 to vector<16x1xf32>
    %11 = arith.divf %9, %10 : vector<16x1xf32>
    %cst_4 = arith.constant 9.99999974E-6 : f32
    %12 = vector.broadcast %cst_4 : f32 to vector<16x1xf32>
    %13 = arith.addf %11, %12 : vector<16x1xf32>
    %14 = math.rsqrt %13 : vector<16x1xf32>
    %15 = vector.broadcast %14 : vector<16x1xf32> to vector<16x64xf32>
    %16 = arith.mulf %6, %15 : vector<16x64xf32>
    %c0_5 = arith.constant 0 : index
    %c0_6 = arith.constant 0 : index
    %17 = vector.load %arg2[%c0_5, %c0_6] : memref<1x64xf32, #tpu.memory_space<vmem>>, vector<1x64xf32>
    %18 = vector.broadcast %17 : vector<1x64xf32> to vector<16x64xf32>
    %19 = arith.mulf %16, %18 : vector<16x64xf32>
    %c0_7 = arith.constant 0 : index
    %c0_8 = arith.constant 0 : index
    %20 = vector.load %arg3[%c0_7, %c0_8] : memref<1x64xf32, #tpu.memory_space<vmem>>, vector<1x64xf32>
    %21 = vector.broadcast %20 : vector<1x64xf32> to vector<16x64xf32>
    %22 = arith.addf %19, %21 : vector<16x64xf32>
    %23 = arith.truncf %22 : vector<16x64xf32> to vector<16x64xbf16>
    %c0_9 = arith.constant 0 : index
    %c0_10 = arith.constant 0 : index
    %24 = vector.load %arg4[%c0_9, %c0_10] : memref<16x64xbf16, #tpu.memory_space<vmem>>, vector<16x64xbf16>
    tpu.vector_store %arg4[%c0_9, %c0_10], %23 {strides = array<i32>} : memref<16x64xbf16, #tpu.memory_space<vmem>>, vector<16x64xbf16>,
    return
  }
  func.func @transform_0(%arg0: i32) -> (i32, i32) {
    %c0_i32 = arith.constant 0 : i32
    %c0_i32_0 = arith.constant 0 : i32
    return %arg0, %c0_i32 : i32, i32
  }
  func.func @transform_1(%arg0: i32) -> (i32, i32) {
    %c0_i32 = arith.constant 0 : i32
    %c0_i32_0 = arith.constant 0 : i32
    %c0_i32_1 = arith.constant 0 : i32
    return %c0_i32, %c0_i32_0 : i32, i32
  }
  func.func @transform_2(%arg0: i32) -> (i32, i32) {
    %c0_i32 = arith.constant 0 : i32
    %c0_i32_0 = arith.constant 0 : i32
    %c0_i32_1 = arith.constant 0 : i32
    return %c0_i32, %c0_i32_0 : i32, i32
  }
  func.func @transform_3(%arg0: i32) -> (i32, i32) {
    %c0_i32 = arith.constant 0 : i32
    %c0_i32_0 = arith.constant 0 : i32
    return %arg0, %c0_i32 : i32, i32
  }
}

module attributes {stable_mosaic.version = 11 : i64} {
  func.func @_matmul_kernel(%arg0: i32, %arg1: i32, %arg2: i32, %arg3: memref<16x64xbf16, #tpu.memory_space<vmem>>, %arg4: memref<64x192xbf16, #tpu.memory_space<vmem>>, %arg5: memref<1x192xf32, #tpu.memory_space<vmem>>, %arg6: memref<1x64xf32, #tpu.memory_space<vmem>>, %arg7: memref<1x64xf32, #tpu.memory_space<vmem>>, %arg8: memref<16x192xbf16, #tpu.memory_space<vmem>>, %arg9: memref<16x192xf32, #tpu.memory_space<vmem>>) attributes {dimension_semantics = [#tpu.dimension_semantics<parallel>, #tpu.dimension_semantics<parallel>, #tpu.dimension_semantics<arbitrary>], iteration_bounds = array<i64: 1, 1, 1>, scalar_prefetch = 0 : i64, scratch_operands = 1 : i64, tpu.core_type = #tpu.core_type<tc>, window_params = [{transform_indices = @transform_0, window_bounds = array<i64: 16, 64>}, {transform_indices = @transform_1, window_bounds = array<i64: 64, 192>}, {transform_indices = @transform_2, window_bounds = array<i64: 1, 192>}, {pipeline_mode = #tpu.pipeline_mode<synchronous>, transform_indices = @transform_3, window_bounds = array<i64: 1, 64>}, {pipeline_mode = #tpu.pipeline_mode<synchronous>, transform_indices = @transform_4, window_bounds = array<i64: 1, 64>}, {transform_indices = @transform_5, window_bounds = array<i64: 16, 192>}]} {
    %c0_i32 = arith.constant 0 : i32
    %0 = arith.cmpi eq, %arg2, %c0_i32 : i32
    %1 = arith.extui %0 : i1 to i32
    %c0_i32_0 = arith.constant 0 : i32
    %2 = arith.cmpi ne, %1, %c0_i32_0 : i32
    scf.if %2 {
      %cst_19 = arith.constant 0.000000e+00 : f32
      %36 = vector.broadcast %cst_19 : f32 to vector<16x192xf32>
      %c0_20 = arith.constant 0 : index
      %c0_21 = arith.constant 0 : index
      %37 = vector.load %arg9[%c0_20, %c0_21] : memref<16x192xf32, #tpu.memory_space<vmem>>, vector<16x192xf32>
      tpu.vector_store %arg9[%c0_20, %c0_21], %36 {strides = array<i32>} : memref<16x192xf32, #tpu.memory_space<vmem>>, vector<16x192xf32>,
    } else {
    }
    %c0 = arith.constant 0 : index
    %c0_1 = arith.constant 0 : index
    %3 = vector.load %arg3[%c0, %c0_1] : memref<16x64xbf16, #tpu.memory_space<vmem>>, vector<16x64xbf16>
    %4 = arith.extf %3 : vector<16x64xbf16> to vector<16x64xf32>
    %cst = arith.constant dense<0.000000e+00> : vector<16xf32>
    %5 = vector.multi_reduction <add>, %4, %cst [1] : vector<16x64xf32> to vector<16xf32>
    %6 = vector.shape_cast %5 : vector<16xf32> to vector<16x1xf32>
    %cst_2 = arith.constant 6.400000e+01 : f32
    %7 = vector.broadcast %cst_2 : f32 to vector<16x1xf32>
    %8 = arith.divf %6, %7 : vector<16x1xf32>
    %9 = vector.broadcast %8 : vector<16x1xf32> to vector<16x64xf32>
    %10 = arith.subf %4, %9 : vector<16x64xf32>
    %11 = arith.mulf %10, %10 : vector<16x64xf32>
    %cst_3 = arith.constant dense<0.000000e+00> : vector<16xf32>
    %12 = vector.multi_reduction <add>, %11, %cst_3 [1] : vector<16x64xf32> to vector<16xf32>
    %13 = vector.shape_cast %12 : vector<16xf32> to vector<16x1xf32>
    %cst_4 = arith.constant 6.400000e+01 : f32
    %14 = vector.broadcast %cst_4 : f32 to vector<16x1xf32>
    %15 = arith.divf %13, %14 : vector<16x1xf32>
    %cst_5 = arith.constant 9.99999974E-6 : f32
    %16 = vector.broadcast %cst_5 : f32 to vector<16x1xf32>
    %17 = arith.addf %15, %16 : vector<16x1xf32>
    %18 = math.rsqrt %17 : vector<16x1xf32>
    %19 = vector.broadcast %18 : vector<16x1xf32> to vector<16x64xf32>
    %20 = arith.mulf %10, %19 : vector<16x64xf32>
    %c0_6 = arith.constant 0 : index
    %c0_7 = arith.constant 0 : index
    %21 = vector.load %arg6[%c0_6, %c0_7] : memref<1x64xf32, #tpu.memory_space<vmem>>, vector<1x64xf32>
    %22 = vector.broadcast %21 : vector<1x64xf32> to vector<16x64xf32>
    %23 = arith.mulf %20, %22 : vector<16x64xf32>
    %c0_8 = arith.constant 0 : index
    %c0_9 = arith.constant 0 : index
    %24 = vector.load %arg7[%c0_8, %c0_9] : memref<1x64xf32, #tpu.memory_space<vmem>>, vector<1x64xf32>
    %25 = vector.broadcast %24 : vector<1x64xf32> to vector<16x64xf32>
    %26 = arith.addf %23, %25 : vector<16x64xf32>
    %27 = arith.truncf %26 : vector<16x64xf32> to vector<16x64xbf16>
    %c0_10 = arith.constant 0 : index
    %c0_11 = arith.constant 0 : index
    %28 = vector.load %arg9[%c0_10, %c0_11] : memref<16x192xf32, #tpu.memory_space<vmem>>, vector<16x192xf32>
    %c0_12 = arith.constant 0 : index
    %c0_13 = arith.constant 0 : index
    %29 = vector.load %arg4[%c0_12, %c0_13] : memref<64x192xbf16, #tpu.memory_space<vmem>>, vector<64x192xbf16>
    %cst_14 = arith.constant dense<0.000000e+00> : vector<16x192xf32>
    %30 = tpu.matmul %27, %29, %cst_14 {dimension_numbers = #tpu.dot_dimension_numbers<[1], [0], [0], [1], [0, 0, 1, 1], [], []>} : vector<16x64xbf16>, vector<64x192xbf16>, vector<16x192xf32> -> vector<16x192xf32>
    %31 = arith.addf %28, %30 : vector<16x192xf32>
    %c0_15 = arith.constant 0 : index
    %c0_16 = arith.constant 0 : index
    %32 = vector.load %arg9[%c0_15, %c0_16] : memref<16x192xf32, #tpu.memory_space<vmem>>, vector<16x192xf32>
    tpu.vector_store %arg9[%c0_15, %c0_16], %31 {strides = array<i32>} : memref<16x192xf32, #tpu.memory_space<vmem>>, vector<16x192xf32>,
    %c0_i32_17 = arith.constant 0 : i32
    %33 = arith.cmpi eq, %arg2, %c0_i32_17 : i32
    %34 = arith.extui %33 : i1 to i32
    %c0_i32_18 = arith.constant 0 : i32
    %35 = arith.cmpi ne, %34, %c0_i32_18 : i32
    scf.if %35 {
      %c0_19 = arith.constant 0 : index
      %c0_20 = arith.constant 0 : index
      %36 = vector.load %arg9[%c0_19, %c0_20] : memref<16x192xf32, #tpu.memory_space<vmem>>, vector<16x192xf32>
      %c0_21 = arith.constant 0 : index
      %c0_22 = arith.constant 0 : index
      %37 = vector.load %arg5[%c0_21, %c0_22] : memref<1x192xf32, #tpu.memory_space<vmem>>, vector<1x192xf32>
      %38 = vector.broadcast %37 : vector<1x192xf32> to vector<16x192xf32>
      %39 = arith.addf %36, %38 : vector<16x192xf32>
      %40 = arith.truncf %39 : vector<16x192xf32> to vector<16x192xbf16>
      %c0_23 = arith.constant 0 : index
      %c0_24 = arith.constant 0 : index
      %41 = vector.load %arg8[%c0_23, %c0_24] : memref<16x192xbf16, #tpu.memory_space<vmem>>, vector<16x192xbf16>
      tpu.vector_store %arg8[%c0_23, %c0_24], %40 {strides = array<i32>} : memref<16x192xbf16, #tpu.memory_space<vmem>>, vector<16x192xbf16>,
    } else {
    }
    return
  }
  func.func @transform_0(%arg0: i32, %arg1: i32, %arg2: i32) -> (i32, i32) {
    %c0_i32 = arith.constant 0 : i32
    return %arg0, %arg2 : i32, i32
  }
  func.func @transform_1(%arg0: i32, %arg1: i32, %arg2: i32) -> (i32, i32) {
    %c0_i32 = arith.constant 0 : i32
    return %arg2, %arg1 : i32, i32
  }
  func.func @transform_2(%arg0: i32, %arg1: i32, %arg2: i32) -> (i32, i32) {
    %c0_i32 = arith.constant 0 : i32
    %c0_i32_0 = arith.constant 0 : i32
    return %c0_i32, %arg1 : i32, i32
  }
  func.func @transform_3(%arg0: i32, %arg1: i32, %arg2: i32) -> (i32, i32) {
    %c0_i32 = arith.constant 0 : i32
    %c0_i32_0 = arith.constant 0 : i32
    %c0_i32_1 = arith.constant 0 : i32
    return %c0_i32, %c0_i32_0 : i32, i32
  }
  func.func @transform_4(%arg0: i32, %arg1: i32, %arg2: i32) -> (i32, i32) {
    %c0_i32 = arith.constant 0 : i32
    %c0_i32_0 = arith.constant 0 : i32
    %c0_i32_1 = arith.constant 0 : i32
    return %c0_i32, %c0_i32_0 : i32, i32
  }
  func.func @transform_5(%arg0: i32, %arg1: i32, %arg2: i32) -> (i32, i32) {
    %c0_i32 = arith.constant 0 : i32
    return %arg0, %arg1 : i32, i32
  }
}

module attributes {stable_mosaic.version = 11 : i64} {
  func.func @_attention_kernel(%arg0: i32, %arg1: memref<1x8x192xbf16, #tpu.memory_space<vmem>>, %arg2: memref<1x8x192xbf16, #tpu.memory_space<vmem>>, %arg3: memref<1x8x192xbf16, #tpu.memory_space<vmem>>, %arg4: memref<1x8x64xbf16, #tpu.memory_space<vmem>>) attributes {dimension_semantics = [#tpu.dimension_semantics<parallel>], iteration_bounds = array<i64: 2>, scalar_prefetch = 0 : i64, scratch_operands = 0 : i64, tpu.core_type = #tpu.core_type<tc>, window_params = [{transform_indices = @transform_0, window_bounds = array<i64: 1, 8, 192>}, {transform_indices = @transform_1, window_bounds = array<i64: 1, 8, 192>}, {transform_indices = @transform_2, window_bounds = array<i64: 1, 8, 192>}, {transform_indices = @transform_3, window_bounds = array<i64: 1, 8, 64>}]} {
    %0 = tpu.iota {dimensions = array<i32: 1>} : vector<1x8xi32>
    %c5_i32 = arith.constant 5 : i32
    %1 = vector.broadcast %c5_i32 : i32 to vector<1x8xi32>
    %2 = arith.cmpi slt, %0, %1 : vector<1x8xi32>
    %c0 = arith.constant 0 : index
    %c0_0 = arith.constant 0 : index
    %c0_1 = arith.constant 0 : index
    %3 = vector.load %arg1[%c0, %c0_0, %c0_1] : memref<1x8x192xbf16, #tpu.memory_space<vmem>>, vector<1x8x64xbf16>
    %4 = vector.shape_cast %3 : vector<1x8x64xbf16> to vector<8x64xbf16>
    %c0_2 = arith.constant 0 : index
    %c0_3 = arith.constant 0 : index
    %c64 = arith.constant 64 : index
    %5 = vector.load %arg2[%c0_2, %c0_3, %c64] : memref<1x8x192xbf16, #tpu.memory_space<vmem>>, vector<1x8x64xbf16>
    %6 = vector.shape_cast %5 : vector<1x8x64xbf16> to vector<8x64xbf16>
    %c0_4 = arith.constant 0 : index
    %c0_5 = arith.constant 0 : index
    %c128 = arith.constant 128 : index
    %7 = vector.load %arg3[%c0_4, %c0_5, %c128] : memref<1x8x192xbf16, #tpu.memory_space<vmem>>, vector<1x8x64xbf16>
    %8 = vector.shape_cast %7 : vector<1x8x64xbf16> to vector<8x64xbf16>
    %9 = arith.extf %4 : vector<8x64xbf16> to vector<8x64xf32>
    %cst = arith.constant 1.250000e-01 : f32
    %10 = vector.broadcast %cst : f32 to vector<8x64xf32>
    %11 = arith.mulf %9, %10 : vector<8x64xf32>
    %12 = arith.truncf %11 : vector<8x64xf32> to vector<8x64xbf16>
    %cst_6 = arith.constant dense<0.000000e+00> : vector<8x8xf32>
    %13 = tpu.matmul %12, %6, %cst_6 {dimension_numbers = #tpu.dot_dimension_numbers<[1], [1], [0], [0], [0, 0, 1, 0], [], []>} : vector<8x64xbf16>, vector<8x64xbf16>, vector<8x8xf32> -> vector<8x8xf32>
    %cst_7 = arith.constant -1.000000e+30 : f32
    %14 = vector.shape_cast %2 : vector<1x8xi1> to vector<1x8xi1>
    %15 = vector.broadcast %14 : vector<1x8xi1> to vector<8x8xi1>
    %16 = vector.broadcast %cst_7 : f32 to vector<8x8xf32>
    %17 = arith.select %15, %13, %16 : vector<8x8xi1>, vector<8x8xf32>
    %cst_8 = arith.constant dense<0xFF800000> : vector<8xf32>
    %18 = vector.multi_reduction <maximumf>, %17, %cst_8 [1] : vector<8x8xf32> to vector<8xf32>
    %19 = vector.shape_cast %18 : vector<8xf32> to vector<8x1xf32>
    %20 = vector.broadcast %19 : vector<8x1xf32> to vector<8x8xf32>
    %21 = arith.subf %17, %20 : vector<8x8xf32>
    %22 = math.exp %21 : vector<8x8xf32>
    %cst_9 = arith.constant dense<0.000000e+00> : vector<8xf32>
    %23 = vector.multi_reduction <add>, %22, %cst_9 [1] : vector<8x8xf32> to vector<8xf32>
    %24 = vector.shape_cast %23 : vector<8xf32> to vector<8x1xf32>
    %25 = tpu.reciprocal %24 : vector<8x1xf32> -> vector<8x1xf32>
    %26 = vector.broadcast %25 : vector<8x1xf32> to vector<8x8xf32>
    %27 = arith.mulf %22, %26 : vector<8x8xf32>
    %28 = arith.truncf %27 : vector<8x8xf32> to vector<8x8xbf16>
    %cst_10 = arith.constant dense<0.000000e+00> : vector<8x64xf32>
    %29 = tpu.matmul %28, %8, %cst_10 {dimension_numbers = #tpu.dot_dimension_numbers<[1], [0], [0], [1], [0, 0, 1, 1], [], []>} : vector<8x8xbf16>, vector<8x64xbf16>, vector<8x64xf32> -> vector<8x64xf32>
    %30 = arith.truncf %29 : vector<8x64xf32> to vector<8x64xbf16>
    %c0_11 = arith.constant 0 : index
    %c0_12 = arith.constant 0 : index
    %c0_13 = arith.constant 0 : index
    %31 = vector.load %arg4[%c0_11, %c0_12, %c0_13] : memref<1x8x64xbf16, #tpu.memory_space<vmem>>, vector<1x8x64xbf16>
    %32 = vector.shape_cast %31 : vector<1x8x64xbf16> to vector<8x64xbf16>
    %33 = vector.shape_cast %30 : vector<8x64xbf16> to vector<1x8x64xbf16>
    tpu.vector_store %arg4[%c0_11, %c0_12, %c0_13], %33 {strides = array<i32>} : memref<1x8x64xbf16, #tpu.memory_space<vmem>>, vector<1x8x64xbf16>,
    return
  }
  func.func @transform_0(%arg0: i32) -> (i32, i32, i32) {
    %c0_i32 = arith.constant 0 : i32
    %c0_i32_0 = arith.constant 0 : i32
    %c0_i32_1 = arith.constant 0 : i32
    return %arg0, %c0_i32, %c0_i32_0 : i32, i32, i32
  }
  func.func @transform_1(%arg0: i32) -> (i32, i32, i32) {
    %c0_i32 = arith.constant 0 : i32
    %c0_i32_0 = arith.constant 0 : i32
    %c0_i32_1 = arith.constant 0 : i32
    return %arg0, %c0_i32, %c0_i32_0 : i32, i32, i32
  }
  func.func @transform_2(%arg0: i32) -> (i32, i32, i32) {
    %c0_i32 = arith.constant 0 : i32
    %c0_i32_0 = arith.constant 0 : i32
    %c0_i32_1 = arith.constant 0 : i32
    return %arg0, %c0_i32, %c0_i32_0 : i32, i32, i32
  }
  func.func @transform_3(%arg0: i32) -> (i32, i32, i32) {
    %c0_i32 = arith.constant 0 : i32
    %c0_i32_0 = arith.constant 0 : i32
    %c0_i32_1 = arith.constant 0 : i32
    return %arg0, %c0_i32, %c0_i32_0 : i32, i32, i32
  }
}

module attributes {stable_mosaic.version = 11 : i64} {
  func.func @_matmul_kernel(%arg0: i32, %arg1: i32, %arg2: i32, %arg3: memref<16x64xbf16, #tpu.memory_space<vmem>>, %arg4: memref<64x64xbf16, #tpu.memory_space<vmem>>, %arg5: memref<1x64xf32, #tpu.memory_space<vmem>>, %arg6: memref<16x64xbf16, #tpu.memory_space<vmem>>, %arg7: memref<16x64xbf16, #tpu.memory_space<vmem>>, %arg8: memref<16x64xf32, #tpu.memory_space<vmem>>) attributes {dimension_semantics = [#tpu.dimension_semantics<parallel>, #tpu.dimension_semantics<parallel>, #tpu.dimension_semantics<arbitrary>], iteration_bounds = array<i64: 1, 1, 1>, scalar_prefetch = 0 : i64, scratch_operands = 1 : i64, tpu.core_type = #tpu.core_type<tc>, window_params = [{transform_indices = @transform_0, window_bounds = array<i64: 16, 64>}, {transform_indices = @transform_1, window_bounds = array<i64: 64, 64>}, {transform_indices = @transform_2, window_bounds = array<i64: 1, 64>}, {transform_indices = @transform_3, window_bounds = array<i64: 16, 64>}, {transform_indices = @transform_4, window_bounds = array<i64: 16, 64>}]} {
    %c0_i32 = arith.constant 0 : i32
    %0 = arith.cmpi eq, %arg2, %c0_i32 : i32
    %1 = arith.extui %0 : i1 to i32
    %c0_i32_0 = arith.constant 0 : i32
    %2 = arith.cmpi ne, %1, %c0_i32_0 : i32
    scf.if %2 {
      %cst_10 = arith.constant 0.000000e+00 : f32
      %12 = vector.broadcast %cst_10 : f32 to vector<16x64xf32>
      %c0_11 = arith.constant 0 : index
      %c0_12 = arith.constant 0 : index
      %13 = vector.load %arg8[%c0_11, %c0_12] : memref<16x64xf32, #tpu.memory_space<vmem>>, vector<16x64xf32>
      tpu.vector_store %arg8[%c0_11, %c0_12], %12 {strides = array<i32>} : memref<16x64xf32, #tpu.memory_space<vmem>>, vector<16x64xf32>,
    } else {
    }
    %c0 = arith.constant 0 : index
    %c0_1 = arith.constant 0 : index
    %3 = vector.load %arg3[%c0, %c0_1] : memref<16x64xbf16, #tpu.memory_space<vmem>>, vector<16x64xbf16>
    %c0_2 = arith.constant 0 : index
    %c0_3 = arith.constant 0 : index
    %4 = vector.load %arg8[%c0_2, %c0_3] : memref<16x64xf32, #tpu.memory_space<vmem>>, vector<16x64xf32>
    %c0_4 = arith.constant 0 : index
    %c0_5 = arith.constant 0 : index
    %5 = vector.load %arg4[%c0_4, %c0_5] : memref<64x64xbf16, #tpu.memory_space<vmem>>, vector<64x64xbf16>
    %cst = arith.constant dense<0.000000e+00> : vector<16x64xf32>
    %6 = tpu.matmul %3, %5, %cst {dimension_numbers = #tpu.dot_dimension_numbers<[1], [0], [0], [1], [0, 0, 1, 1], [], []>} : vector<16x64xbf16>, vector<64x64xbf16>, vector<16x64xf32> -> vector<16x64xf32>
    %7 = arith.addf %4, %6 : vector<16x64xf32>
    %c0_6 = arith.constant 0 : index
    %c0_7 = arith.constant 0 : index
    %8 = vector.load %arg8[%c0_6, %c0_7] : memref<16x64xf32, #tpu.memory_space<vmem>>, vector<16x64xf32>
    tpu.vector_store %arg8[%c0_6, %c0_7], %7 {strides = array<i32>} : memref<16x64xf32, #tpu.memory_space<vmem>>, vector<16x64xf32>,
    %c0_i32_8 = arith.constant 0 : i32
    %9 = arith.cmpi eq, %arg2, %c0_i32_8 : i32
    %10 = arith.extui %9 : i1 to i32
    %c0_i32_9 = arith.constant 0 : i32
    %11 = arith.cmpi ne, %10, %c0_i32_9 : i32
    scf.if %11 {
      %c0_10 = arith.constant 0 : index
      %c0_11 = arith.constant 0 : index
      %12 = vector.load %arg8[%c0_10, %c0_11] : memref<16x64xf32, #tpu.memory_space<vmem>>, vector<16x64xf32>
      %c0_12 = arith.constant 0 : index
      %c0_13 = arith.constant 0 : index
      %13 = vector.load %arg5[%c0_12, %c0_13] : memref<1x64xf32, #tpu.memory_space<vmem>>, vector<1x64xf32>
      %14 = vector.broadcast %13 : vector<1x64xf32> to vector<16x64xf32>
      %15 = arith.addf %12, %14 : vector<16x64xf32>
      %c0_14 = arith.constant 0 : index
      %c0_15 = arith.constant 0 : index
      %16 = vector.load %arg6[%c0_14, %c0_15] : memref<16x64xbf16, #tpu.memory_space<vmem>>, vector<16x64xbf16>
      %17 = arith.extf %16 : vector<16x64xbf16> to vector<16x64xf32>
      %18 = arith.addf %15, %17 : vector<16x64xf32>
      %19 = arith.truncf %18 : vector<16x64xf32> to vector<16x64xbf16>
      %c0_16 = arith.constant 0 : index
      %c0_17 = arith.constant 0 : index
      %20 = vector.load %arg7[%c0_16, %c0_17] : memref<16x64xbf16, #tpu.memory_space<vmem>>, vector<16x64xbf16>
      tpu.vector_store %arg7[%c0_16, %c0_17], %19 {strides = array<i32>} : memref<16x64xbf16, #tpu.memory_space<vmem>>, vector<16x64xbf16>,
    } else {
    }
    return
  }
  func.func @transform_0(%arg0: i32, %arg1: i32, %arg2: i32) -> (i32, i32) {
    %c0_i32 = arith.constant 0 : i32
    return %arg0, %arg2 : i32, i32
  }
  func.func @transform_1(%arg0: i32, %arg1: i32, %arg2: i32) -> (i32, i32) {
    %c0_i32 = arith.constant 0 : i32
    return %arg2, %arg1 : i32, i32
  }
  func.func @transform_2(%arg0: i32, %arg1: i32, %arg2: i32) -> (i32, i32) {
    %c0_i32 = arith.constant 0 : i32
    %c0_i32_0 = arith.constant 0 : i32
    return %c0_i32, %arg1 : i32, i32
  }
  func.func @transform_3(%arg0: i32, %arg1: i32, %arg2: i32) -> (i32, i32) {
    %c0_i32 = arith.constant 0 : i32
    return %arg0, %arg1 : i32, i32
  }
  func.func @transform_4(%arg0: i32, %arg1: i32, %arg2: i32) -> (i32, i32) {
    %c0_i32 = arith.constant 0 : i32
    return %arg0, %arg1 : i32, i32
  }
}

module attributes {stable_mosaic.version = 11 : i64} {
  func.func @_matmul_kernel(%arg0: i32, %arg1: i32, %arg2: i32, %arg3: memref<16x64xbf16, #tpu.memory_space<vmem>>, %arg4: memref<64x256xbf16, #tpu.memory_space<vmem>>, %arg5: memref<1x256xf32, #tpu.memory_space<vmem>>, %arg6: memref<1x64xf32, #tpu.memory_space<vmem>>, %arg7: memref<1x64xf32, #tpu.memory_space<vmem>>, %arg8: memref<16x256xbf16, #tpu.memory_space<vmem>>, %arg9: memref<16x256xf32, #tpu.memory_space<vmem>>) attributes {dimension_semantics = [#tpu.dimension_semantics<parallel>, #tpu.dimension_semantics<parallel>, #tpu.dimension_semantics<arbitrary>], iteration_bounds = array<i64: 1, 1, 1>, scalar_prefetch = 0 : i64, scratch_operands = 1 : i64, tpu.core_type = #tpu.core_type<tc>, window_params = [{transform_indices = @transform_0, window_bounds = array<i64: 16, 64>}, {transform_indices = @transform_1, window_bounds = array<i64: 64, 256>}, {transform_indices = @transform_2, window_bounds = array<i64: 1, 256>}, {pipeline_mode = #tpu.pipeline_mode<synchronous>, transform_indices = @transform_3, window_bounds = array<i64: 1, 64>}, {pipeline_mode = #tpu.pipeline_mode<synchronous>, transform_indices = @transform_4, window_bounds = array<i64: 1, 64>}, {transform_indices = @transform_5, window_bounds = array<i64: 16, 256>}]} {
    %c0_i32 = arith.constant 0 : i32
    %0 = arith.cmpi eq, %arg2, %c0_i32 : i32
    %1 = arith.extui %0 : i1 to i32
    %c0_i32_0 = arith.constant 0 : i32
    %2 = arith.cmpi ne, %1, %c0_i32_0 : i32
    scf.if %2 {
      %cst_19 = arith.constant 0.000000e+00 : f32
      %36 = vector.broadcast %cst_19 : f32 to vector<16x256xf32>
      %c0_20 = arith.constant 0 : index
      %c0_21 = arith.constant 0 : index
      %37 = vector.load %arg9[%c0_20, %c0_21] : memref<16x256xf32, #tpu.memory_space<vmem>>, vector<16x256xf32>
      tpu.vector_store %arg9[%c0_20, %c0_21], %36 {strides = array<i32>} : memref<16x256xf32, #tpu.memory_space<vmem>>, vector<16x256xf32>,
    } else {
    }
    %c0 = arith.constant 0 : index
    %c0_1 = arith.constant 0 : index
    %3 = vector.load %arg3[%c0, %c0_1] : memref<16x64xbf16, #tpu.memory_space<vmem>>, vector<16x64xbf16>
    %4 = arith.extf %3 : vector<16x64xbf16> to vector<16x64xf32>
    %cst = arith.constant dense<0.000000e+00> : vector<16xf32>
    %5 = vector.multi_reduction <add>, %4, %cst [1] : vector<16x64xf32> to vector<16xf32>
    %6 = vector.shape_cast %5 : vector<16xf32> to vector<16x1xf32>
    %cst_2 = arith.constant 6.400000e+01 : f32
    %7 = vector.broadcast %cst_2 : f32 to vector<16x1xf32>
    %8 = arith.divf %6, %7 : vector<16x1xf32>
    %9 = vector.broadcast %8 : vector<16x1xf32> to vector<16x64xf32>
    %10 = arith.subf %4, %9 : vector<16x64xf32>
    %11 = arith.mulf %10, %10 : vector<16x64xf32>
    %cst_3 = arith.constant dense<0.000000e+00> : vector<16xf32>
    %12 = vector.multi_reduction <add>, %11, %cst_3 [1] : vector<16x64xf32> to vector<16xf32>
    %13 = vector.shape_cast %12 : vector<16xf32> to vector<16x1xf32>
    %cst_4 = arith.constant 6.400000e+01 : f32
    %14 = vector.broadcast %cst_4 : f32 to vector<16x1xf32>
    %15 = arith.divf %13, %14 : vector<16x1xf32>
    %cst_5 = arith.constant 9.99999974E-6 : f32
    %16 = vector.broadcast %cst_5 : f32 to vector<16x1xf32>
    %17 = arith.addf %15, %16 : vector<16x1xf32>
    %18 = math.rsqrt %17 : vector<16x1xf32>
    %19 = vector.broadcast %18 : vector<16x1xf32> to vector<16x64xf32>
    %20 = arith.mulf %10, %19 : vector<16x64xf32>
    %c0_6 = arith.constant 0 : index
    %c0_7 = arith.constant 0 : index
    %21 = vector.load %arg6[%c0_6, %c0_7] : memref<1x64xf32, #tpu.memory_space<vmem>>, vector<1x64xf32>
    %22 = vector.broadcast %21 : vector<1x64xf32> to vector<16x64xf32>
    %23 = arith.mulf %20, %22 : vector<16x64xf32>
    %c0_8 = arith.constant 0 : index
    %c0_9 = arith.constant 0 : index
    %24 = vector.load %arg7[%c0_8, %c0_9] : memref<1x64xf32, #tpu.memory_space<vmem>>, vector<1x64xf32>
    %25 = vector.broadcast %24 : vector<1x64xf32> to vector<16x64xf32>
    %26 = arith.addf %23, %25 : vector<16x64xf32>
    %27 = arith.truncf %26 : vector<16x64xf32> to vector<16x64xbf16>
    %c0_10 = arith.constant 0 : index
    %c0_11 = arith.constant 0 : index
    %28 = vector.load %arg9[%c0_10, %c0_11] : memref<16x256xf32, #tpu.memory_space<vmem>>, vector<16x256xf32>
    %c0_12 = arith.constant 0 : index
    %c0_13 = arith.constant 0 : index
    %29 = vector.load %arg4[%c0_12, %c0_13] : memref<64x256xbf16, #tpu.memory_space<vmem>>, vector<64x256xbf16>
    %cst_14 = arith.constant dense<0.000000e+00> : vector<16x256xf32>
    %30 = tpu.matmul %27, %29, %cst_14 {dimension_numbers = #tpu.dot_dimension_numbers<[1], [0], [0], [1], [0, 0, 1, 1], [], []>} : vector<16x64xbf16>, vector<64x256xbf16>, vector<16x256xf32> -> vector<16x256xf32>
    %31 = arith.addf %28, %30 : vector<16x256xf32>
    %c0_15 = arith.constant 0 : index
    %c0_16 = arith.constant 0 : index
    %32 = vector.load %arg9[%c0_15, %c0_16] : memref<16x256xf32, #tpu.memory_space<vmem>>, vector<16x256xf32>
    tpu.vector_store %arg9[%c0_15, %c0_16], %31 {strides = array<i32>} : memref<16x256xf32, #tpu.memory_space<vmem>>, vector<16x256xf32>,
    %c0_i32_17 = arith.constant 0 : i32
    %33 = arith.cmpi eq, %arg2, %c0_i32_17 : i32
    %34 = arith.extui %33 : i1 to i32
    %c0_i32_18 = arith.constant 0 : i32
    %35 = arith.cmpi ne, %34, %c0_i32_18 : i32
    scf.if %35 {
      %c0_19 = arith.constant 0 : index
      %c0_20 = arith.constant 0 : index
      %36 = vector.load %arg9[%c0_19, %c0_20] : memref<16x256xf32, #tpu.memory_space<vmem>>, vector<16x256xf32>
      %c0_21 = arith.constant 0 : index
      %c0_22 = arith.constant 0 : index
      %37 = vector.load %arg5[%c0_21, %c0_22] : memref<1x256xf32, #tpu.memory_space<vmem>>, vector<1x256xf32>
      %38 = vector.broadcast %37 : vector<1x256xf32> to vector<16x256xf32>
      %39 = arith.addf %36, %38 : vector<16x256xf32>
      %cst_23 = arith.constant 1.702000e+00 : f32
      %40 = vector.broadcast %cst_23 : f32 to vector<16x256xf32>
      %41 = arith.mulf %40, %39 : vector<16x256xf32>
      %42 = arith.negf %41 : vector<16x256xf32>
      %43 = math.exp %42 : vector<16x256xf32>
      %cst_24 = arith.constant 1.000000e+00 : f32
      %44 = vector.broadcast %cst_24 : f32 to vector<16x256xf32>
      %45 = arith.addf %44, %43 : vector<16x256xf32>
      %46 = arith.divf %44, %45 : vector<16x256xf32>
      %47 = arith.mulf %39, %46 : vector<16x256xf32>
      %48 = arith.truncf %47 : vector<16x256xf32> to vector<16x256xbf16>
      %c0_25 = arith.constant 0 : index
      %c0_26 = arith.constant 0 : index
      %49 = vector.load %arg8[%c0_25, %c0_26] : memref<16x256xbf16, #tpu.memory_space<vmem>>, vector<16x256xbf16>
      tpu.vector_store %arg8[%c0_25, %c0_26], %48 {strides = array<i32>} : memref<16x256xbf16, #tpu.memory_space<vmem>>, vector<16x256xbf16>,
    } else {
    }
    return
  }
  func.func @transform_0(%arg0: i32, %arg1: i32, %arg2: i32) -> (i32, i32) {
    %c0_i32 = arith.constant 0 : i32
    return %arg0, %arg2 : i32, i32
  }
  func.func @transform_1(%arg0: i32, %arg1: i32, %arg2: i32) -> (i32, i32) {
    %c0_i32 = arith.constant 0 : i32
    return %arg2, %arg1 : i32, i32
  }
  func.func @transform_2(%arg0: i32, %arg1: i32, %arg2: i32) -> (i32, i32) {
    %c0_i32 = arith.constant 0 : i32
    %c0_i32_0 = arith.constant 0 : i32
    return %c0_i32, %arg1 : i32, i32
  }
  func.func @transform_3(%arg0: i32, %arg1: i32, %arg2: i32) -> (i32, i32) {
    %c0_i32 = arith.constant 0 : i32
    %c0_i32_0 = arith.constant 0 : i32
    %c0_i32_1 = arith.constant 0 : i32
    return %c0_i32, %c0_i32_0 : i32, i32
  }
  func.func @transform_4(%arg0: i32, %arg1: i32, %arg2: i32) -> (i32, i32) {
    %c0_i32 = arith.constant 0 : i32
    %c0_i32_0 = arith.constant 0 : i32
    %c0_i32_1 = arith.constant 0 : i32
    return %c0_i32, %c0_i32_0 : i32, i32
  }
  func.func @transform_5(%arg0: i32, %arg1: i32, %arg2: i32) -> (i32, i32) {
    %c0_i32 = arith.constant 0 : i32
    return %arg0, %arg1 : i32, i32
  }
}

module attributes {stable_mosaic.version = 11 : i64} {
  func.func @_matmul_kernel(%arg0: i32, %arg1: i32, %arg2: i32, %arg3: memref<16x256xbf16, #tpu.memory_space<vmem>>, %arg4: memref<256x64xbf16, #tpu.memory_space<vmem>>, %arg5: memref<1x64xf32, #tpu.memory_space<vmem>>, %arg6: memref<16x64xbf16, #tpu.memory_space<vmem>>, %arg7: memref<16x64xbf16, #tpu.memory_space<vmem>>, %arg8: memref<16x64xf32, #tpu.memory_space<vmem>>) attributes {dimension_semantics = [#tpu.dimension_semantics<parallel>, #tpu.dimension_semantics<parallel>, #tpu.dimension_semantics<arbitrary>], iteration_bounds = array<i64: 1, 1, 1>, scalar_prefetch = 0 : i64, scratch_operands = 1 : i64, tpu.core_type = #tpu.core_type<tc>, window_params = [{transform_indices = @transform_0, window_bounds = array<i64: 16, 256>}, {transform_indices = @transform_1, window_bounds = array<i64: 256, 64>}, {transform_indices = @transform_2, window_bounds = array<i64: 1, 64>}, {transform_indices = @transform_3, window_bounds = array<i64: 16, 64>}, {transform_indices = @transform_4, window_bounds = array<i64: 16, 64>}]} {
    %c0_i32 = arith.constant 0 : i32
    %0 = arith.cmpi eq, %arg2, %c0_i32 : i32
    %1 = arith.extui %0 : i1 to i32
    %c0_i32_0 = arith.constant 0 : i32
    %2 = arith.cmpi ne, %1, %c0_i32_0 : i32
    scf.if %2 {
      %cst_10 = arith.constant 0.000000e+00 : f32
      %12 = vector.broadcast %cst_10 : f32 to vector<16x64xf32>
      %c0_11 = arith.constant 0 : index
      %c0_12 = arith.constant 0 : index
      %13 = vector.load %arg8[%c0_11, %c0_12] : memref<16x64xf32, #tpu.memory_space<vmem>>, vector<16x64xf32>
      tpu.vector_store %arg8[%c0_11, %c0_12], %12 {strides = array<i32>} : memref<16x64xf32, #tpu.memory_space<vmem>>, vector<16x64xf32>,
    } else {
    }
    %c0 = arith.constant 0 : index
    %c0_1 = arith.constant 0 : index
    %3 = vector.load %arg3[%c0, %c0_1] : memref<16x256xbf16, #tpu.memory_space<vmem>>, vector<16x256xbf16>
    %c0_2 = arith.constant 0 : index
    %c0_3 = arith.constant 0 : index
    %4 = vector.load %arg8[%c0_2, %c0_3] : memref<16x64xf32, #tpu.memory_space<vmem>>, vector<16x64xf32>
    %c0_4 = arith.constant 0 : index
    %c0_5 = arith.constant 0 : index
    %5 = vector.load %arg4[%c0_4, %c0_5] : memref<256x64xbf16, #tpu.memory_space<vmem>>, vector<256x64xbf16>
    %cst = arith.constant dense<0.000000e+00> : vector<16x64xf32>
    %6 = tpu.matmul %3, %5, %cst {dimension_numbers = #tpu.dot_dimension_numbers<[1], [0], [0], [1], [0, 0, 1, 1], [], []>} : vector<16x256xbf16>, vector<256x64xbf16>, vector<16x64xf32> -> vector<16x64xf32>
    %7 = arith.addf %4, %6 : vector<16x64xf32>
    %c0_6 = arith.constant 0 : index
    %c0_7 = arith.constant 0 : index
    %8 = vector.load %arg8[%c0_6, %c0_7] : memref<16x64xf32, #tpu.memory_space<vmem>>, vector<16x64xf32>
    tpu.vector_store %arg8[%c0_6, %c0_7], %7 {strides = array<i32>} : memref<16x64xf32, #tpu.memory_space<vmem>>, vector<16x64xf32>,
    %c0_i32_8 = arith.constant 0 : i32
    %9 = arith.cmpi eq, %arg2, %c0_i32_8 : i32
    %10 = arith.extui %9 : i1 to i32
    %c0_i32_9 = arith.constant 0 : i32
    %11 = arith.cmpi ne, %10, %c0_i32_9 : i32
    scf.if %11 {
      %c0_10 = arith.constant 0 : index
      %c0_11 = arith.constant 0 : index
      %12 = vector.load %arg8[%c0_10, %c0_11] : memref<16x64xf32, #tpu.memory_space<vmem>>, vector<16x64xf32>
      %c0_12 = arith.constant 0 : index
      %c0_13 = arith.constant 0 : index
      %13 = vector.load %arg5[%c0_12, %c0_13] : memref<1x64xf32, #tpu.memory_space<vmem>>, vector<1x64xf32>
      %14 = vector.broadcast %13 : vector<1x64xf32> to vector<16x64xf32>
      %15 = arith.addf %12, %14 : vector<16x64xf32>
      %c0_14 = arith.constant 0 : index
      %c0_15 = arith.constant 0 : index
      %16 = vector.load %arg6[%c0_14, %c0_15] : memref<16x64xbf16, #tpu.memory_space<vmem>>, vector<16x64xbf16>
      %17 = arith.extf %16 : vector<16x64xbf16> to vector<16x64xf32>
      %18 = arith.addf %15, %17 : vector<16x64xf32>
      %19 = arith.truncf %18 : vector<16x64xf32> to vector<16x64xbf16>
      %c0_16 = arith.constant 0 : index
      %c0_17 = arith.constant 0 : index
      %20 = vector.load %arg7[%c0_16, %c0_17] : memref<16x64xbf16, #tpu.memory_space<vmem>>, vector<16x64xbf16>
      tpu.vector_store %arg7[%c0_16, %c0_17], %19 {strides = array<i32>} : memref<16x64xbf16, #tpu.memory_space<vmem>>, vector<16x64xbf16>,
    } else {
    }
    return
  }
  func.func @transform_0(%arg0: i32, %arg1: i32, %arg2: i32) -> (i32, i32) {
    %c0_i32 = arith.constant 0 : i32
    return %arg0, %arg2 : i32, i32
  }
  func.func @transform_1(%arg0: i32, %arg1: i32, %arg2: i32) -> (i32, i32) {
    %c0_i32 = arith.constant 0 : i32
    return %arg2, %arg1 : i32, i32
  }
  func.func @transform_2(%arg0: i32, %arg1: i32, %arg2: i32) -> (i32, i32) {
    %c0_i32 = arith.constant 0 : i32
    %c0_i32_0 = arith.constant 0 : i32
    return %c0_i32, %arg1 : i32, i32
  }
  func.func @transform_3(%arg0: i32, %arg1: i32, %arg2: i32) -> (i32, i32) {
    %c0_i32 = arith.constant 0 : i32
    return %arg0, %arg1 : i32, i32
  }
  func.func @transform_4(%arg0: i32, %arg1: i32, %arg2: i32) -> (i32, i32) {
    %c0_i32 = arith.constant 0 : i32
    return %arg0, %arg1 : i32, i32
  }
}

module attributes {stable_mosaic.version = 11 : i64} {
  func.func @_matmul_kernel(%arg0: i32, %arg1: i32, %arg2: i32, %arg3: memref<2x64xbf16, #tpu.memory_space<vmem>>, %arg4: memref<64x32xbf16, #tpu.memory_space<vmem>>, %arg5: memref<1x64xf32, #tpu.memory_space<vmem>>, %arg6: memref<1x64xf32, #tpu.memory_space<vmem>>, %arg7: memref<2x32xf32, #tpu.memory_space<vmem>>, %arg8: memref<2x32xf32, #tpu.memory_space<vmem>>) attributes {dimension_semantics = [#tpu.dimension_semantics<parallel>, #tpu.dimension_semantics<parallel>, #tpu.dimension_semantics<arbitrary>], iteration_bounds = array<i64: 1, 1, 1>, scalar_prefetch = 0 : i64, scratch_operands = 1 : i64, tpu.core_type = #tpu.core_type<tc>, window_params = [{transform_indices = @transform_0, window_bounds = array<i64: 2, 64>}, {transform_indices = @transform_1, window_bounds = array<i64: 64, 32>}, {pipeline_mode = #tpu.pipeline_mode<synchronous>, transform_indices = @transform_2, window_bounds = array<i64: 1, 64>}, {pipeline_mode = #tpu.pipeline_mode<synchronous>, transform_indices = @transform_3, window_bounds = array<i64: 1, 64>}, {transform_indices = @transform_4, window_bounds = array<i64: 2, 32>}]} {
    %c0_i32 = arith.constant 0 : i32
    %0 = arith.cmpi eq, %arg2, %c0_i32 : i32
    %1 = arith.extui %0 : i1 to i32
    %c0_i32_0 = arith.constant 0 : i32
    %2 = arith.cmpi ne, %1, %c0_i32_0 : i32
    scf.if %2 {
      %cst_19 = arith.constant 0.000000e+00 : f32
      %36 = vector.broadcast %cst_19 : f32 to vector<2x32xf32>
      %c0_20 = arith.constant 0 : index
      %c0_21 = arith.constant 0 : index
      %37 = vector.load %arg8[%c0_20, %c0_21] : memref<2x32xf32, #tpu.memory_space<vmem>>, vector<2x32xf32>
      tpu.vector_store %arg8[%c0_20, %c0_21], %36 {strides = array<i32>} : memref<2x32xf32, #tpu.memory_space<vmem>>, vector<2x32xf32>,
    } else {
    }
    %c0 = arith.constant 0 : index
    %c0_1 = arith.constant 0 : index
    %3 = vector.load %arg3[%c0, %c0_1] : memref<2x64xbf16, #tpu.memory_space<vmem>>, vector<2x64xbf16>
    %4 = arith.extf %3 : vector<2x64xbf16> to vector<2x64xf32>
    %cst = arith.constant dense<0.000000e+00> : vector<2xf32>
    %5 = vector.multi_reduction <add>, %4, %cst [1] : vector<2x64xf32> to vector<2xf32>
    %6 = vector.shape_cast %5 : vector<2xf32> to vector<2x1xf32>
    %cst_2 = arith.constant 6.400000e+01 : f32
    %7 = vector.broadcast %cst_2 : f32 to vector<2x1xf32>
    %8 = arith.divf %6, %7 : vector<2x1xf32>
    %9 = vector.broadcast %8 : vector<2x1xf32> to vector<2x64xf32>
    %10 = arith.subf %4, %9 : vector<2x64xf32>
    %11 = arith.mulf %10, %10 : vector<2x64xf32>
    %cst_3 = arith.constant dense<0.000000e+00> : vector<2xf32>
    %12 = vector.multi_reduction <add>, %11, %cst_3 [1] : vector<2x64xf32> to vector<2xf32>
    %13 = vector.shape_cast %12 : vector<2xf32> to vector<2x1xf32>
    %cst_4 = arith.constant 6.400000e+01 : f32
    %14 = vector.broadcast %cst_4 : f32 to vector<2x1xf32>
    %15 = arith.divf %13, %14 : vector<2x1xf32>
    %cst_5 = arith.constant 9.99999974E-6 : f32
    %16 = vector.broadcast %cst_5 : f32 to vector<2x1xf32>
    %17 = arith.addf %15, %16 : vector<2x1xf32>
    %18 = math.rsqrt %17 : vector<2x1xf32>
    %19 = vector.broadcast %18 : vector<2x1xf32> to vector<2x64xf32>
    %20 = arith.mulf %10, %19 : vector<2x64xf32>
    %c0_6 = arith.constant 0 : index
    %c0_7 = arith.constant 0 : index
    %21 = vector.load %arg5[%c0_6, %c0_7] : memref<1x64xf32, #tpu.memory_space<vmem>>, vector<1x64xf32>
    %22 = vector.broadcast %21 : vector<1x64xf32> to vector<2x64xf32>
    %23 = arith.mulf %20, %22 : vector<2x64xf32>
    %c0_8 = arith.constant 0 : index
    %c0_9 = arith.constant 0 : index
    %24 = vector.load %arg6[%c0_8, %c0_9] : memref<1x64xf32, #tpu.memory_space<vmem>>, vector<1x64xf32>
    %25 = vector.broadcast %24 : vector<1x64xf32> to vector<2x64xf32>
    %26 = arith.addf %23, %25 : vector<2x64xf32>
    %27 = arith.truncf %26 : vector<2x64xf32> to vector<2x64xbf16>
    %c0_10 = arith.constant 0 : index
    %c0_11 = arith.constant 0 : index
    %28 = vector.load %arg8[%c0_10, %c0_11] : memref<2x32xf32, #tpu.memory_space<vmem>>, vector<2x32xf32>
    %c0_12 = arith.constant 0 : index
    %c0_13 = arith.constant 0 : index
    %29 = vector.load %arg4[%c0_12, %c0_13] : memref<64x32xbf16, #tpu.memory_space<vmem>>, vector<64x32xbf16>
    %cst_14 = arith.constant dense<0.000000e+00> : vector<2x32xf32>
    %30 = tpu.matmul %27, %29, %cst_14 {dimension_numbers = #tpu.dot_dimension_numbers<[1], [0], [0], [1], [0, 0, 1, 1], [], []>} : vector<2x64xbf16>, vector<64x32xbf16>, vector<2x32xf32> -> vector<2x32xf32>
    %31 = arith.addf %28, %30 : vector<2x32xf32>
    %c0_15 = arith.constant 0 : index
    %c0_16 = arith.constant 0 : index
    %32 = vector.load %arg8[%c0_15, %c0_16] : memref<2x32xf32, #tpu.memory_space<vmem>>, vector<2x32xf32>
    tpu.vector_store %arg8[%c0_15, %c0_16], %31 {strides = array<i32>} : memref<2x32xf32, #tpu.memory_space<vmem>>, vector<2x32xf32>,
    %c0_i32_17 = arith.constant 0 : i32
    %33 = arith.cmpi eq, %arg2, %c0_i32_17 : i32
    %34 = arith.extui %33 : i1 to i32
    %c0_i32_18 = arith.constant 0 : i32
    %35 = arith.cmpi ne, %34, %c0_i32_18 : i32
    scf.if %35 {
      %c0_19 = arith.constant 0 : index
      %c0_20 = arith.constant 0 : index
      %36 = vector.load %arg8[%c0_19, %c0_20] : memref<2x32xf32, #tpu.memory_space<vmem>>, vector<2x32xf32>
      %c0_21 = arith.constant 0 : index
      %c0_22 = arith.constant 0 : index
      %37 = vector.load %arg7[%c0_21, %c0_22] : memref<2x32xf32, #tpu.memory_space<vmem>>, vector<2x32xf32>
      tpu.vector_store %arg7[%c0_21, %c0_22], %36 {strides = array<i32>} : memref<2x32xf32, #tpu.memory_space<vmem>>, vector<2x32xf32>,
    } else {
    }
    return
  }
  func.func @transform_0(%arg0: i32, %arg1: i32, %arg2: i32) -> (i32, i32) {
    %c0_i32 = arith.constant 0 : i32
    return %arg0, %arg2 : i32, i32
  }
  func.func @transform_1(%arg0: i32, %arg1: i32, %arg2: i32) -> (i32, i32) {
    %c0_i32 = arith.constant 0 : i32
    return %arg2, %arg1 : i32, i32
  }
  func.func @transform_2(%arg0: i32, %arg1: i32, %arg2: i32) -> (i32, i32) {
    %c0_i32 = arith.constant 0 : i32
    %c0_i32_0 = arith.constant 0 : i32
    %c0_i32_1 = arith.constant 0 : i32
    return %c0_i32, %c0_i32_0 : i32, i32
  }
  func.func @transform_3(%arg0: i32, %arg1: i32, %arg2: i32) -> (i32, i32) {
    %c0_i32 = arith.constant 0 : i32
    %c0_i32_0 = arith.constant 0 : i32
    %c0_i32_1 = arith.constant 0 : i32
    return %c0_i32, %c0_i32_0 : i32, i32
  }
  func.func @transform_4(%arg0: i32, %arg1: i32, %arg2: i32) -> (i32, i32) {
    %c0_i32 = arith.constant 0 : i32
    return %arg0, %arg1 : i32, i32
  }
}

</mosaic_0001>

<llo_original>
// kernel: mask_encoder_forward.14
$region0: #{mask_encoder_forward.14}
  #allocation0 [shape = 'u32[]', space=smem, size = 0x4, offset = 0x4, fixed_abs, tag = 'smem constant byte address 0x4 - core index']
  #allocation1 [shape = 'u32[72,128]{1,0:T(1,128)}', space=vmem, size = 0x9000, scoped, tag = 'internal scratch']
  %s0 = inlined_call_operand.vmem [shape: f32[6,8,8], index: 0, kind: input, shape index: {}]
  %s1 = inlined_call_operand.vmem [shape: f32[32,8], index: 1, kind: input, shape index: {}]
  %s2 = inlined_call_operand.vmem [shape: f32[8,32], index: 2, kind: input, shape index: {}]
  %s3 = inlined_call_operand.vmem [shape: f32[6,32,32], index: 3, kind: output, shape index: {}]
  %s4 = sld [smem:[#allocation0]]
  $region22: #{mask_encoder_forward.14} parent=0
    _
  %s6 = ssub.s32 1, %s4
  %s7 = scalar_select 0, %s6, %s4
  // Predicated region
  $region2: #{mask_encoder_forward.14} parent=0 // pred_check
    _
  $region3: #{mask_encoder_forward.14} parent=0 // pred_check_branch
    %9 = sbr.rel (0) target = $region5
  $region4: #{mask_encoder_forward.14} parent=0 // pred_region
    _
  $region5: #{mask_encoder_forward.14} parent=0 // pred_fallthru
    _
  // Predicated region
  $region6: #{mask_encoder_forward.14} parent=0 // pred_check
    _
  $region7: #{mask_encoder_forward.14} parent=0 // pred_check_branch
    %11 = sbr.rel (0) target = $region9
  $region8: #{mask_encoder_forward.14} parent=0 // pred_region
    _
  $region9: #{mask_encoder_forward.14} parent=0 // pred_fallthru
    _
  // Predicated region
  $region10: #{mask_encoder_forward.14} parent=0 // pred_check
    _
  $region11: #{mask_encoder_forward.14} parent=0 // pred_check_branch
    %13 = sbr.rel (0) target = $region13
  $region12: #{mask_encoder_forward.14} parent=0 // pred_region
    _
  $region13: #{mask_encoder_forward.14} parent=0 // pred_fallthru
    _
  %v14 = vld [vmem:[%s1] sm:$0xff]
  %v15 = vld [vmem:[%s1 + $0x8] sm:$0xff]
  %v16 = vld [vmem:[%s1 + $0x10] sm:$0xff]
  %v17 = vld [vmem:[%s1 + $0x18] sm:$0xff]
  %v18 = vld [vmem:[%s2] sm:$0xff]
  %v19 = vld [vmem:[%s0] sm:$0xff]
  %vm20 = vcmask 64512
  %v22 = vsel %vm20, %v14, 0
  %v25 = vsel %vm20, %v15, 0
  %v28 = vsel %vm20, %v16, 0
  %v31 = vsel %vm20, %v17, 0
  %33 = vmatpush.msra.mxu0 0.0
  %34 = vmatpush.msra.mxu0 0.0
  %35 = vmatpush.msra.mxu0 0.0
  %36 = vmatpush.msra.mxu0 0.0
  %37 = vmatpush.msra.mxu0 0.0
  %38 = vmatpush.msra.mxu0 0.0
  %39 = vmatpush.msra.mxu0 0.0
  %40 = vmatpush.msra.mxu0 0.0
  %41 = vmatpush.msra.mxu0 0.0
  %42 = vmatpush.msra.mxu0 0.0
  %43 = vmatpush.msra.mxu0 0.0
  %44 = vmatpush.msra.mxu0 0.0
  %45 = vmatpush.msra.mxu0 0.0
  %46 = vmatpush.msra.mxu0 0.0
  %47 = vmatpush.msra.mxu0 0.0
  %48 = vmatpush.msra.mxu0 %v19
  %49 = vmatmul.f32.gmra.mxu0 %v22
  %v50 = vpop.f32.mrf.mxu0
  %v51 = vadd.f32 0.0, %v50
  %52 = vmatmul.f32.gmra.mxu0 %v25
  %v53 = vpop.f32.mrf.mxu0
  %v54 = vadd.f32 0.0, %v53
  %55 = vmatmul.f32.gmra.mxu0 %v28
  %v56 = vpop.f32.mrf.mxu0
  %v57 = vadd.f32 0.0, %v56
  %58 = vmatmul.f32.gmra.mxu0 %v31
  %v59 = vpop.f32.mrf.mxu0
  %v60 = vadd.f32 0.0, %v59
  %61 = vdwg.mxu0
  %v63 = vsel %vm20, %v51, 0
  %v66 = vsel %vm20, %v54, 0
  %v69 = vsel %vm20, %v57, 0
  %v72 = vsel %vm20, %v60, 0
  %74 = vmatpush.msra.mxu0 0.0
  %75 = vmatpush.msra.mxu0 0.0
  %76 = vmatpush.msra.mxu0 0.0
  %77 = vmatpush.msra.mxu0 0.0
  %78 = vmatpush.msra.mxu0 0.0
  %79 = vmatpush.msra.mxu0 0.0
  %80 = vmatpush.msra.mxu0 0.0
  %81 = vmatpush.msra.mxu0 0.0
  %82 = vmatpush.msra.mxu0 0.0
  %83 = vmatpush.msra.mxu0 0.0
  %84 = vmatpush.msra.mxu0 0.0
  %85 = vmatpush.msra.mxu0 0.0
  %86 = vmatpush.msra.mxu0 0.0
  %87 = vmatpush.msra.mxu0 0.0
  %88 = vmatpush.msra.mxu0 0.0
  %89 = vmatpush.msra.mxu0 %v18
  %90 = vmatmul.f32.gmra.mxu0 %v63
  %v91 = vpop.f32.mrf.mxu0
  %v92 = vadd.f32 0.0, %v91
  %93 = vmatmul.f32.gmra.mxu0 %v66
  %v94 = vpop.f32.mrf.mxu0
  %v95 = vadd.f32 0.0, %v94
  %96 = vmatmul.f32.gmra.mxu0 %v69
  %v97 = vpop.f32.mrf.mxu0
  %v98 = vadd.f32 0.0, %v97
  %99 = vmatmul.f32.gmra.mxu0 %v72
  %v100 = vpop.f32.mrf.mxu0
  %v101 = vadd.f32 0.0, %v100
  %102 = vdwg.mxu0
  %vm103 = vcmask 261120
  %104 = vst.msk [vmem:[%s3] sm:$0xff] %vm103, %v92
  %105 = vst.msk [vmem:[%s3 + $0x8] sm:$0xff] %vm103, %v95
  %106 = vst.msk [vmem:[%s3 + $0x10] sm:$0xff] %vm103, %v98
  %107 = vst.msk [vmem:[%s3 + $0x18] sm:$0xff] %vm103, %v101
  %s108 = scalar_lea.vmem %s0, 8
  %v109 = vld [vmem:[%s108] sm:$0xff]
  %110 = vmatpush.msra.mxu0 0.0
  %111 = vmatpush.msra.mxu0 0.0
  %112 = vmatpush.msra.mxu0 0.0
  %113 = vmatpush.msra.mxu0 0.0
  %114 = vmatpush.msra.mxu0 0.0
  %115 = vmatpush.msra.mxu0 0.0
  %116 = vmatpush.msra.mxu0 0.0
  %117 = vmatpush.msra.mxu0 0.0
  %118 = vmatpush.msra.mxu0 0.0
  %119 = vmatpush.msra.mxu0 0.0
  %120 = vmatpush.msra.mxu0 0.0
  %121 = vmatpush.msra.mxu0 0.0
  %122 = vmatpush.msra.mxu0 0.0
  %123 = vmatpush.msra.mxu0 0.0
  %124 = vmatpush.msra.mxu0 0.0
  %125 = vmatpush.msra.mxu0 %v109
  %126 = vmatmul.f32.gmra.mxu0 %v22
  %v127 = vpop.f32.mrf.mxu0
  %v128 = vadd.f32 0.0, %v127
  %129 = vmatmul.f32.gmra.mxu0 %v25
  %v130 = vpop.f32.mrf.mxu0
  %v131 = vadd.f32 0.0, %v130
  %132 = vmatmul.f32.gmra.mxu0 %v28
  %v133 = vpop.f32.mrf.mxu0
  %v134 = vadd.f32 0.0, %v133
  %135 = vmatmul.f32.gmra.mxu0 %v31
  %v136 = vpop.f32.mrf.mxu0
  %v137 = vadd.f32 0.0, %v136
  %138 = vdwg.mxu0
  %v140 = vsel %vm20, %v128, 0
  %v143 = vsel %vm20, %v131, 0
  %v146 = vsel %vm20, %v134, 0
  %v149 = vsel %vm20, %v137, 0
  %151 = vmatpush.msra.mxu0 0.0
  %152 = vmatpush.msra.mxu0 0.0
  %153 = vmatpush.msra.mxu0 0.0
  %154 = vmatpush.msra.mxu0 0.0
  %155 = vmatpush.msra.mxu0 0.0
  %156 = vmatpush.msra.mxu0 0.0
  %157 = vmatpush.msra.mxu0 0.0
  %158 = vmatpush.msra.mxu0 0.0
  %159 = vmatpush.msra.mxu0 0.0
  %160 = vmatpush.msra.mxu0 0.0
  %161 = vmatpush.msra.mxu0 0.0
  %162 = vmatpush.msra.mxu0 0.0
  %163 = vmatpush.msra.mxu0 0.0
  %164 = vmatpush.msra.mxu0 0.0
  %165 = vmatpush.msra.mxu0 0.0
  %166 = vmatpush.msra.mxu0 %v18
  %167 = vmatmul.f32.gmra.mxu0 %v140
  %v168 = vpop.f32.mrf.mxu0
  %v169 = vadd.f32 0.0, %v168
  %170 = vmatmul.f32.gmra.mxu0 %v143
  %v171 = vpop.f32.mrf.mxu0
  %v172 = vadd.f32 0.0, %v171
  %173 = vmatmul.f32.gmra.mxu0 %v146
  %v174 = vpop.f32.mrf.mxu0
  %v175 = vadd.f32 0.0, %v174
  %176 = vmatmul.f32.gmra.mxu0 %v149
  %v177 = vpop.f32.mrf.mxu0
  %v178 = vadd.f32 0.0, %v177
  %179 = vdwg.mxu0
  %s180 = scalar_lea.vmem %s3, 32
  %181 = vst.msk [vmem:[%s180] sm:$0xff] %vm103, %v169
  %182 = vst.msk [vmem:[%s180 + $0x8] sm:$0xff] %vm103, %v172
  %183 = vst.msk [vmem:[%s180 + $0x10] sm:$0xff] %vm103, %v175
  %184 = vst.msk [vmem:[%s180 + $0x18] sm:$0xff] %vm103, %v178
  %s185 = scalar_lea.vmem %s0, 16
  %v186 = vld [vmem:[%s185] sm:$0xff]
  %187 = vmatpush.msra.mxu0 0.0
  %188 = vmatpush.msra.mxu0 0.0
  %189 = vmatpush.msra.mxu0 0.0
  %190 = vmatpush.msra.mxu0 0.0
  %191 = vmatpush.msra.mxu0 0.0
  %192 = vmatpush.msra.mxu0 0.0
  %193 = vmatpush.msra.mxu0 0.0
  %194 = vmatpush.msra.mxu0 0.0
  %195 = vmatpush.msra.mxu0 0.0
  %196 = vmatpush.msra.mxu0 0.0
  %197 = vmatpush.msra.mxu0 0.0
  %198 = vmatpush.msra.mxu0 0.0
  %199 = vmatpush.msra.mxu0 0.0
  %200 = vmatpush.msra.mxu0 0.0
  %201 = vmatpush.msra.mxu0 0.0
  %202 = vmatpush.msra.mxu0 %v186
  %203 = vmatmul.f32.gmra.mxu0 %v22
  %v204 = vpop.f32.mrf.mxu0
  %v205 = vadd.f32 0.0, %v204
  %206 = vmatmul.f32.gmra.mxu0 %v25
  %v207 = vpop.f32.mrf.mxu0
  %v208 = vadd.f32 0.0, %v207
  %209 = vmatmul.f32.gmra.mxu0 %v28
  %v210 = vpop.f32.mrf.mxu0
  %v211 = vadd.f32 0.0, %v210
  %212 = vmatmul.f32.gmra.mxu0 %v31
  %v213 = vpop.f32.mrf.mxu0
  %v214 = vadd.f32 0.0, %v213
  %215 = vdwg.mxu0
  %v217 = vsel %vm20, %v205, 0
  %v220 = vsel %vm20, %v208, 0
  %v223 = vsel %vm20, %v211, 0
  %v226 = vsel %vm20, %v214, 0
  %228 = vmatpush.msra.mxu0 0.0
  %229 = vmatpush.msra.mxu0 0.0
  %230 = vmatpush.msra.mxu0 0.0
  %231 = vmatpush.msra.mxu0 0.0
  %232 = vmatpush.msra.mxu0 0.0
  %233 = vmatpush.msra.mxu0 0.0
  %234 = vmatpush.msra.mxu0 0.0
  %235 = vmatpush.msra.mxu0 0.0
  %236 = vmatpush.msra.mxu0 0.0
  %237 = vmatpush.msra.mxu0 0.0
  %238 = vmatpush.msra.mxu0 0.0
  %239 = vmatpush.msra.mxu0 0.0
  %240 = vmatpush.msra.mxu0 0.0
  %241 = vmatpush.msra.mxu0 0.0
  %242 = vmatpush.msra.mxu0 0.0
  %243 = vmatpush.msra.mxu0 %v18
  %244 = vmatmul.f32.gmra.mxu0 %v217
  %v245 = vpop.f32.mrf.mxu0
  %v246 = vadd.f32 0.0, %v245
  %247 = vmatmul.f32.gmra.mxu0 %v220
  %v248 = vpop.f32.mrf.mxu0
  %v249 = vadd.f32 0.0, %v248
  %250 = vmatmul.f32.gmra.mxu0 %v223
  %v251 = vpop.f32.mrf.mxu0
  %v252 = vadd.f32 0.0, %v251
  %253 = vmatmul.f32.gmra.mxu0 %v226
  %v254 = vpop.f32.mrf.mxu0
  %v255 = vadd.f32 0.0, %v254
  %256 = vdwg.mxu0
  %s257 = scalar_lea.vmem %s3, 64
  %258 = vst.msk [vmem:[%s257] sm:$0xff] %vm103, %v246
  %259 = vst.msk [vmem:[%s257 + $0x8] sm:$0xff] %vm103, %v249
  %260 = vst.msk [vmem:[%s257 + $0x10] sm:$0xff] %vm103, %v252
  %261 = vst.msk [vmem:[%s257 + $0x18] sm:$0xff] %vm103, %v255
  %s262 = scalar_lea.vmem %s0, 24
  %v263 = vld [vmem:[%s262] sm:$0xff]
  %264 = vmatpush.msra.mxu0 0.0
  %265 = vmatpush.msra.mxu0 0.0
  %266 = vmatpush.msra.mxu0 0.0
  %267 = vmatpush.msra.mxu0 0.0
  %268 = vmatpush.msra.mxu0 0.0
  %269 = vmatpush.msra.mxu0 0.0
  %270 = vmatpush.msra.mxu0 0.0
  %271 = vmatpush.msra.mxu0 0.0
  %272 = vmatpush.msra.mxu0 0.0
  %273 = vmatpush.msra.mxu0 0.0
  %274 = vmatpush.msra.mxu0 0.0
  %275 = vmatpush.msra.mxu0 0.0
  %276 = vmatpush.msra.mxu0 0.0
  %277 = vmatpush.msra.mxu0 0.0
  %278 = vmatpush.msra.mxu0 0.0
  %279 = vmatpush.msra.mxu0 %v263
  %280 = vmatmul.f32.gmra.mxu0 %v22
  %v281 = vpop.f32.mrf.mxu0
  %v282 = vadd.f32 0.0, %v281
  %283 = vmatmul.f32.gmra.mxu0 %v25
  %v284 = vpop.f32.mrf.mxu0
  %v285 = vadd.f32 0.0, %v284
  %286 = vmatmul.f32.gmra.mxu0 %v28
  %v287 = vpop.f32.mrf.mxu0
  %v288 = vadd.f32 0.0, %v287
  %289 = vmatmul.f32.gmra.mxu0 %v31
  %v290 = vpop.f32.mrf.mxu0
  %v291 = vadd.f32 0.0, %v290
  %292 = vdwg.mxu0
  %v294 = vsel %vm20, %v282, 0
  %v297 = vsel %vm20, %v285, 0
  %v300 = vsel %vm20, %v288, 0
  %v303 = vsel %vm20, %v291, 0
  %305 = vmatpush.msra.mxu0 0.0
  %306 = vmatpush.msra.mxu0 0.0
  %307 = vmatpush.msra.mxu0 0.0
  %308 = vmatpush.msra.mxu0 0.0
  %309 = vmatpush.msra.mxu0 0.0
  %310 = vmatpush.msra.mxu0 0.0
  %311 = vmatpush.msra.mxu0 0.0
  %312 = vmatpush.msra.mxu0 0.0
  %313 = vmatpush.msra.mxu0 0.0
  %314 = vmatpush.msra.mxu0 0.0
  %315 = vmatpush.msra.mxu0 0.0
  %316 = vmatpush.msra.mxu0 0.0
  %317 = vmatpush.msra.mxu0 0.0
  %318 = vmatpush.msra.mxu0 0.0
  %319 = vmatpush.msra.mxu0 0.0
  %320 = vmatpush.msra.mxu0 %v18
  %321 = vmatmul.f32.gmra.mxu0 %v294
  %v322 = vpop.f32.mrf.mxu0
  %v323 = vadd.f32 0.0, %v322
  %324 = vmatmul.f32.gmra.mxu0 %v297
  %v325 = vpop.f32.mrf.mxu0
  %v326 = vadd.f32 0.0, %v325
  %327 = vmatmul.f32.gmra.mxu0 %v300
  %v328 = vpop.f32.mrf.mxu0
  %v329 = vadd.f32 0.0, %v328
  %330 = vmatmul.f32.gmra.mxu0 %v303
  %v331 = vpop.f32.mrf.mxu0
  %v332 = vadd.f32 0.0, %v331
  %333 = vdwg.mxu0
  %s334 = scalar_lea.vmem %s3, 96
  %335 = vst.msk [vmem:[%s334] sm:$0xff] %vm103, %v323
  %336 = vst.msk [vmem:[%s334 + $0x8] sm:$0xff] %vm103, %v326
  %337 = vst.msk [vmem:[%s334 + $0x10] sm:$0xff] %vm103, %v329
  %338 = vst.msk [vmem:[%s334 + $0x18] sm:$0xff] %vm103, %v332
  %s339 = scalar_lea.vmem %s0, 32
  %v340 = vld [vmem:[%s339] sm:$0xff]
  %341 = vmatpush.msra.mxu0 0.0
  %342 = vmatpush.msra.mxu0 0.0
  %343 = vmatpush.msra.mxu0 0.0
  %344 = vmatpush.msra.mxu0 0.0
  %345 = vmatpush.msra.mxu0 0.0
  %346 = vmatpush.msra.mxu0 0.0
  %347 = vmatpush.msra.mxu0 0.0
  %348 = vmatpush.msra.mxu0 0.0
  %349 = vmatpush.msra.mxu0 0.0
  %350 = vmatpush.msra.mxu0 0.0
  %351 = vmatpush.msra.mxu0 0.0
  %352 = vmatpush.msra.mxu0 0.0
  %353 = vmatpush.msra.mxu0 0.0
  %354 = vmatpush.msra.mxu0 0.0
  %355 = vmatpush.msra.mxu0 0.0
  %356 = vmatpush.msra.mxu0 %v340
  %357 = vmatmul.f32.gmra.mxu0 %v22
  %v358 = vpop.f32.mrf.mxu0
  %v359 = vadd.f32 0.0, %v358
  %360 = vmatmul.f32.gmra.mxu0 %v25
  %v361 = vpop.f32.mrf.mxu0
  %v362 = vadd.f32 0.0, %v361
  %363 = vmatmul.f32.gmra.mxu0 %v28
  %v364 = vpop.f32.mrf.mxu0
  %v365 = vadd.f32 0.0, %v364
  %366 = vmatmul.f32.gmra.mxu0 %v31
  %v367 = vpop.f32.mrf.mxu0
  %v368 = vadd.f32 0.0, %v367
  %369 = vdwg.mxu0
  %v371 = vsel %vm20, %v359, 0
  %v374 = vsel %vm20, %v362, 0
  %v377 = vsel %vm20, %v365, 0
  %v380 = vsel %vm20, %v368, 0
  %382 = vmatpush.msra.mxu0 0.0
  %383 = vmatpush.msra.mxu0 0.0
  %384 = vmatpush.msra.mxu0 0.0
  %385 = vmatpush.msra.mxu0 0.0
  %386 = vmatpush.msra.mxu0 0.0
  %387 = vmatpush.msra.mxu0 0.0
  %388 = vmatpush.msra.mxu0 0.0
  %389 = vmatpush.msra.mxu0 0.0
  %390 = vmatpush.msra.mxu0 0.0
  %391 = vmatpush.msra.mxu0 0.0
  %392 = vmatpush.msra.mxu0 0.0
  %393 = vmatpush.msra.mxu0 0.0
  %394 = vmatpush.msra.mxu0 0.0
  %395 = vmatpush.msra.mxu0 0.0
  %396 = vmatpush.msra.mxu0 0.0
  %397 = vmatpush.msra.mxu0 %v18
  %398 = vmatmul.f32.gmra.mxu0 %v371
  %v399 = vpop.f32.mrf.mxu0
  %v400 = vadd.f32 0.0, %v399
  %401 = vmatmul.f32.gmra.mxu0 %v374
  %v402 = vpop.f32.mrf.mxu0
  %v403 = vadd.f32 0.0, %v402
  %404 = vmatmul.f32.gmra.mxu0 %v377
  %v405 = vpop.f32.mrf.mxu0
  %v406 = vadd.f32 0.0, %v405
  %407 = vmatmul.f32.gmra.mxu0 %v380
  %v408 = vpop.f32.mrf.mxu0
  %v409 = vadd.f32 0.0, %v408
  %410 = vdwg.mxu0
  %s411 = scalar_lea.vmem %s3, 128
  %412 = vst.msk [vmem:[%s411] sm:$0xff] %vm103, %v400
  %413 = vst.msk [vmem:[%s411 + $0x8] sm:$0xff] %vm103, %v403
  %414 = vst.msk [vmem:[%s411 + $0x10] sm:$0xff] %vm103, %v406
  %415 = vst.msk [vmem:[%s411 + $0x18] sm:$0xff] %vm103, %v409
  %s416 = scalar_lea.vmem %s0, 40
  %v417 = vld [vmem:[%s416] sm:$0xff]
  %418 = vmatpush.msra.mxu0 0.0
  %419 = vmatpush.msra.mxu0 0.0
  %420 = vmatpush.msra.mxu0 0.0
  %421 = vmatpush.msra.mxu0 0.0
  %422 = vmatpush.msra.mxu0 0.0
  %423 = vmatpush.msra.mxu0 0.0
  %424 = vmatpush.msra.mxu0 0.0
  %425 = vmatpush.msra.mxu0 0.0
  %426 = vmatpush.msra.mxu0 0.0
  %427 = vmatpush.msra.mxu0 0.0
  %428 = vmatpush.msra.mxu0 0.0
  %429 = vmatpush.msra.mxu0 0.0
  %430 = vmatpush.msra.mxu0 0.0
  %431 = vmatpush.msra.mxu0 0.0
  %432 = vmatpush.msra.mxu0 0.0
  %433 = vmatpush.msra.mxu0 %v417
  %434 = vmatmul.f32.gmra.mxu0 %v22
  %v435 = vpop.f32.mrf.mxu0
  %v436 = vadd.f32 0.0, %v435
  %437 = vmatmul.f32.gmra.mxu0 %v25
  %v438 = vpop.f32.mrf.mxu0
  %v439 = vadd.f32 0.0, %v438
  %440 = vmatmul.f32.gmra.mxu0 %v28
  %v441 = vpop.f32.mrf.mxu0
  %v442 = vadd.f32 0.0, %v441
  %443 = vmatmul.f32.gmra.mxu0 %v31
  %v444 = vpop.f32.mrf.mxu0
  %v445 = vadd.f32 0.0, %v444
  %446 = vdwg.mxu0
  %v448 = vsel %vm20, %v436, 0
  %v451 = vsel %vm20, %v439, 0
  %v454 = vsel %vm20, %v442, 0
  %v457 = vsel %vm20, %v445, 0
  %459 = vmatpush.msra.mxu0 0.0
  %460 = vmatpush.msra.mxu0 0.0
  %461 = vmatpush.msra.mxu0 0.0
  %462 = vmatpush.msra.mxu0 0.0
  %463 = vmatpush.msra.mxu0 0.0
  %464 = vmatpush.msra.mxu0 0.0
  %465 = vmatpush.msra.mxu0 0.0
  %466 = vmatpush.msra.mxu0 0.0
  %467 = vmatpush.msra.mxu0 0.0
  %468 = vmatpush.msra.mxu0 0.0
  %469 = vmatpush.msra.mxu0 0.0
  %470 = vmatpush.msra.mxu0 0.0
  %471 = vmatpush.msra.mxu0 0.0
  %472 = vmatpush.msra.mxu0 0.0
  %473 = vmatpush.msra.mxu0 0.0
  %474 = vmatpush.msra.mxu0 %v18
  %475 = vmatmul.f32.gmra.mxu0 %v448
  %v476 = vpop.f32.mrf.mxu0
  %v477 = vadd.f32 0.0, %v476
  %478 = vmatmul.f32.gmra.mxu0 %v451
  %v479 = vpop.f32.mrf.mxu0
  %v480 = vadd.f32 0.0, %v479
  %481 = vmatmul.f32.gmra.mxu0 %v454
  %v482 = vpop.f32.mrf.mxu0
  %v483 = vadd.f32 0.0, %v482
  %484 = vmatmul.f32.gmra.mxu0 %v457
  %v485 = vpop.f32.mrf.mxu0
  %v486 = vadd.f32 0.0, %v485
  %487 = vdwg.mxu0
  %s488 = scalar_lea.vmem %s3, 160
  %489 = vst.msk [vmem:[%s488] sm:$0xff] %vm103, %v477
  %490 = vst.msk [vmem:[%s488 + $0x8] sm:$0xff] %vm103, %v480
  %491 = vst.msk [vmem:[%s488 + $0x10] sm:$0xff] %vm103, %v483
  %492 = vst.msk [vmem:[%s488 + $0x18] sm:$0xff] %vm103, %v486
  // Predicated region
  $region14: #{mask_encoder_forward.14} parent=0 // pred_check
    _
  $region15: #{mask_encoder_forward.14} parent=0 // pred_check_branch
    %494 = sbr.rel (0) target = $region17
  $region16: #{mask_encoder_forward.14} parent=0 // pred_region
    _
  $region17: #{mask_encoder_forward.14} parent=0 // pred_fallthru
    _
  // Predicated region
  $region18: #{mask_encoder_forward.14} parent=0 // pred_check
    _
  $region19: #{mask_encoder_forward.14} parent=0 // pred_check_branch
    %496 = sbr.rel (0) target = $region21
  $region20: #{mask_encoder_forward.14} parent=0 // pred_region
    _
  $region21: #{mask_encoder_forward.14} parent=0 // pred_fallthru
    _

// kernel: mask_encoder_forward.16
$region0: #{mask_encoder_forward.16}
  #allocation0 [shape = 'u32[]', space=smem, size = 0x4, offset = 0x4, fixed_abs, tag = 'smem constant byte address 0x4 - core index']
  #allocation1 [shape = 'u32[72,128]{1,0:T(1,128)}', space=vmem, size = 0x9000, scoped, tag = 'internal scratch']
  %s0 = inlined_call_operand.vmem [shape: f32[16,64], index: 0, kind: input, shape index: {}]
  %s1 = inlined_call_operand.vmem [shape: f32[1,64], index: 1, kind: input, shape index: {}]
  %s2 = inlined_call_operand.vmem [shape: f32[1,64], index: 2, kind: input, shape index: {}]
  %s3 = inlined_call_operand.vmem [shape: bf16[16,64], index: 3, kind: output, shape index: {}]
  %s4 = sld [smem:[#allocation0]]
  $region22: #{mask_encoder_forward.16} parent=0
    _
  %s6 = ssub.s32 1, %s4
  %s7 = scalar_select 0, %s6, %s4
  // Predicated region
  $region2: #{mask_encoder_forward.16} parent=0 // pred_check
    _
  $region3: #{mask_encoder_forward.16} parent=0 // pred_check_branch
    %9 = sbr.rel (0) target = $region5
  $region4: #{mask_encoder_forward.16} parent=0 // pred_region
    _
  $region5: #{mask_encoder_forward.16} parent=0 // pred_fallthru
    _
  // Predicated region
  $region6: #{mask_encoder_forward.16} parent=0 // pred_check
    _
  $region7: #{mask_encoder_forward.16} parent=0 // pred_check_branch
    %11 = sbr.rel (0) target = $region9
  $region8: #{mask_encoder_forward.16} parent=0 // pred_region
    _
  $region9: #{mask_encoder_forward.16} parent=0 // pred_fallthru
    _
  // Predicated region
  $region10: #{mask_encoder_forward.16} parent=0 // pred_check
    _
  $region11: #{mask_encoder_forward.16} parent=0 // pred_check_branch
    %13 = sbr.rel (0) target = $region13
  $region12: #{mask_encoder_forward.16} parent=0 // pred_region
    _
  $region13: #{mask_encoder_forward.16} parent=0 // pred_fallthru
    _
  %v14 = vld [vmem:[%s0] sm:$0xff]
  %v15 = vld [vmem:[%s0 + $0x8] sm:$0xff]
  %vm16 = vcmask 523264
  %v17 = vsel %vm16, %v14, 0.0
  %18 = vadd.xlane.f32.xlu0 %v17
  %v19 = vpop.xlane.xlu0 %18
  %v20 = vsel %vm16, %v15, 0.0
  %21 = vadd.xlane.f32.xlu0 %v20
  %v22 = vpop.xlane.xlu0 %21
  %v23 = vrcp.pop 64.0
  %v24 = vmul.f32 64.0, %v23
  %v25 = vsub.f32 1.0, %v24
  %v26 = vmul.f32 %v23, %v25
  %v27 = vadd.f32 %v23, %v26
  %vm28 = vweird.f32 %v23
  %v29 = vsel %vm28, %v23, %v27
  %v30 = vmul.f32 %v19, %v29
  %v31 = vmul.f32 %v22, %v29
  %v32 = vsub.f32 %v14, %v30
  %v33 = vsub.f32 %v15, %v31
  %v34 = vmul.f32 %v32, %v32
  %v35 = vmul.f32 %v33, %v33
  %v36 = vsel %vm16, %v34, 0.0
  %37 = vadd.xlane.f32.xlu0 %v36
  %v38 = vpop.xlane.xlu0 %37
  %v39 = vsel %vm16, %v35, 0.0
  %40 = vadd.xlane.f32.xlu0 %v39
  %v41 = vpop.xlane.xlu0 %40
  %v42 = vmul.f32 %v38, %v29
  %v43 = vmul.f32 %v41, %v29
  %v44 = vadd.f32 %v42, 1e-05
  %v45 = vadd.f32 %v43, 1e-05
  %v46 = vrsqrt.pop %v44
  %v47 = vmul.f32 %v46, %v44
  %v48 = vmul.f32 %v47, %v46
  %v49 = vmul.f32 0.5, %v48
  %v50 = vsub.f32 1.5, %v49
  %v51 = vmul.f32 %v46, %v50
  %vm52 = vweird.f32 %v44
  %vm53 = vweird.f32 %v46
  %vm54 = vmor %vm52, %vm53
  %v55 = vsel %vm54, %v46, %v51
  %v56 = vrsqrt.pop %v45
  %v57 = vmul.f32 %v56, %v45
  %v58 = vmul.f32 %v57, %v56
  %v59 = vmul.f32 0.5, %v58
  %v60 = vsub.f32 1.5, %v59
  %v61 = vmul.f32 %v56, %v60
  %vm62 = vweird.f32 %v45
  %vm63 = vweird.f32 %v56
  %vm64 = vmor %vm62, %vm63
  %v65 = vsel %vm64, %v56, %v61
  %v66 = vmul.f32 %v32, %v55
  %v67 = vmul.f32 %v33, %v65
  %v68 = vld [vmem:[%s1] sm:$0x1]
  %v70 = vperm.slane %v68, 0
  %v72 = vmul.f32 %v66, %v70
  %v73 = vmul.f32 %v67, %v70
  %v74 = vld [vmem:[%s2] sm:$0x1]
  %v76 = vperm.slane %v74, 0
  %v78 = vadd.f32 %v72, %v76
  %v79 = vadd.f32 %v73, %v76
  %v80 = vpack.c.bf16 %v78, %v78
  %v81 = vpack.c.bf16 %v79, %v79
  %vm82 = vcmask 519168
  %83 = vst.msk [vmem:[%s3] sm:$0xf] %vm82, %v80
  %84 = vst.msk [vmem:[%s3 + $0x4] sm:$0xf] %vm82, %v81
  // Predicated region
  $region14: #{mask_encoder_forward.16} parent=0 // pred_check
    _
  $region15: #{mask_encoder_forward.16} parent=0 // pred_check_branch
    %86 = sbr.rel (0) target = $region17
  $region16: #{mask_encoder_forward.16} parent=0 // pred_region
    _
  $region17: #{mask_encoder_forward.16} parent=0 // pred_fallthru
    _
  // Predicated region
  $region18: #{mask_encoder_forward.16} parent=0 // pred_check
    _
  $region19: #{mask_encoder_forward.16} parent=0 // pred_check_branch
    %88 = sbr.rel (0) target = $region21
  $region20: #{mask_encoder_forward.16} parent=0 // pred_region
    _
  $region21: #{mask_encoder_forward.16} parent=0 // pred_fallthru
    _

// kernel: mask_encoder_forward.18
$region0: #{mask_encoder_forward.18}
  #allocation0 [shape = 'u32[]', space=smem, size = 0x4, offset = 0x4, fixed_abs, tag = 'smem constant byte address 0x4 - core index']
  #allocation1 [shape = 'u32[72,128]{1,0:T(1,128)}', space=vmem, size = 0x9000, scoped, tag = 'internal scratch']
  %s0 = inlined_call_operand.vmem [shape: bf16[2,8,192], index: 0, kind: input, shape index: {}, may-alias: {0,1,2}]
  %s1 = inlined_call_operand.vmem [shape: bf16[2,8,192], index: 1, kind: input, shape index: {}, may-alias: {0,1,2}]
  %s2 = inlined_call_operand.vmem [shape: bf16[2,8,192], index: 2, kind: input, shape index: {}, may-alias: {0,1,2}]
  %s3 = inlined_call_operand.vmem [shape: bf16[2,8,64], index: 3, kind: output, shape index: {}]
  %s4 = sld [smem:[#allocation0]]
  $region45: #{mask_encoder_forward.18} parent=0
    _
  %s6 = ssub.s32 1, %s4
  %s7 = scalar_select 0, %s6, %s4
  loop: start=0, step=1, limit=4
  $region2: #{mask_encoder_forward.18} parent=0 // loop_pre_header
    _
  $region3: #{mask_encoder_forward.18} parent=0 // loop_header
    %s9 = sphi 0, %s13
    %p10 = scmp.ge.s32.totalorder %s9, 4
    %s19 = sphi 0, %s21
    %s22 = sphi 0, %s19
    %s23 = sphi 0, %s22
    %s39 = sphi 0, %s23
    %s45 = sphi 0, %s47
    %s48 = sphi 0, %s45
    %s49 = sphi 0, %s48
    %s65 = sphi 0, %s49
    %s71 = sphi 0, %s73
    %s74 = sphi 0, %s71
    %s75 = sphi 0, %s74
    %s91 = sphi 0, %s75
    %s97 = sphi 0, %s99
    %s100 = sphi 0, %s97
    %s101 = sphi 0, %s100
    %s117 = sphi 0, %s101
  $region4: #{mask_encoder_forward.18} parent=0 // loop_header_branch
    %12 = sbr.rel (%p10) target = $region8
  $region5: #{mask_encoder_forward.18} parent=0 // loop_body
    %s14 = ssub.s32 %s9, 1
    %s15 = ssub.s32 %s9, 2
    %s16 = sadd.s32 %s9, 1
    %s17 = ssub.s32 %s9, %s16
    %p18 = scmp.eq.s32.totalorder %s17, 0
    %s20 = sadd.s32 %s19, 1
    %s21 = scalar_select %p18, %s19, %s20
    %p24 = pneg %p18
    %p25 = scmp.eq.s32.totalorder %s9, 1
    %p26 = por %p24, %p25
    %p27 = scmp.ne.s32.totalorder %s19, %s22
    %p28 = scmp.eq.s32.totalorder %s9, 0
    %p29 = por %p27, %p28
    %p30 = scmp.ne.s32.totalorder %s19, %s22
    %p31 = scmp.eq.s32.totalorder %s14, 1
    %p32 = por %p30, %p31
    %p33 = scmp.ne.s32.totalorder %s22, %s23
    %p34 = scmp.eq.s32.totalorder %s14, 0
    %p35 = por %p33, %p34
    %p36 = scmp.ne.s32.totalorder %s22, %s23
    %p37 = scmp.eq.s32.totalorder %s15, 1
    %p38 = por %p36, %p37
    %p40 = scmp.ne.s32.totalorder %s23, %s39
    %p41 = scmp.eq.s32.totalorder %s15, 0
    %p42 = por %p40, %p41
    %s43 = ssub.s32 %s9, %s16
    %p44 = scmp.eq.s32.totalorder %s43, 0
    %s46 = sadd.s32 %s45, 1
    %s47 = scalar_select %p44, %s45, %s46
    %p50 = pneg %p44
    %p51 = scmp.eq.s32.totalorder %s9, 1
    %p52 = por %p50, %p51
    %p53 = scmp.ne.s32.totalorder %s45, %s48
    %p54 = scmp.eq.s32.totalorder %s9, 0
    %p55 = por %p53, %p54
    %p56 = scmp.ne.s32.totalorder %s45, %s48
    %p57 = scmp.eq.s32.totalorder %s14, 1
    %p58 = por %p56, %p57
    %p59 = scmp.ne.s32.totalorder %s48, %s49
    %p60 = scmp.eq.s32.totalorder %s14, 0
    %p61 = por %p59, %p60
    %p62 = scmp.ne.s32.totalorder %s48, %s49
    %p63 = scmp.eq.s32.totalorder %s15, 1
    %p64 = por %p62, %p63
    %p66 = scmp.ne.s32.totalorder %s49, %s65
    %p67 = scmp.eq.s32.totalorder %s15, 0
    %p68 = por %p66, %p67
    %s69 = ssub.s32 %s9, %s16
    %p70 = scmp.eq.s32.totalorder %s69, 0
    %s72 = sadd.s32 %s71, 1
    %s73 = scalar_select %p70, %s71, %s72
    %p76 = pneg %p70
    %p77 = scmp.eq.s32.totalorder %s9, 1
    %p78 = por %p76, %p77
    %p79 = scmp.ne.s32.totalorder %s71, %s74
    %p80 = scmp.eq.s32.totalorder %s9, 0
    %p81 = por %p79, %p80
    %p82 = scmp.ne.s32.totalorder %s71, %s74
    %p83 = scmp.eq.s32.totalorder %s14, 1
    %p84 = por %p82, %p83
    %p85 = scmp.ne.s32.totalorder %s74, %s75
    %p86 = scmp.eq.s32.totalorder %s14, 0
    %p87 = por %p85, %p86
    %p88 = scmp.ne.s32.totalorder %s74, %s75
    %p89 = scmp.eq.s32.totalorder %s15, 1
    %p90 = por %p88, %p89
    %p92 = scmp.ne.s32.totalorder %s75, %s91
    %p93 = scmp.eq.s32.totalorder %s15, 0
    %p94 = por %p92, %p93
    %s95 = ssub.s32 %s9, %s16
    %p96 = scmp.eq.s32.totalorder %s95, 0
    %s98 = sadd.s32 %s97, 1
    %s99 = scalar_select %p96, %s97, %s98
    %p102 = pneg %p96
    %p103 = scmp.eq.s32.totalorder %s9, 1
    %p104 = por %p102, %p103
    %p105 = scmp.ne.s32.totalorder %s97, %s100
    %p106 = scmp.eq.s32.totalorder %s9, 0
    %p107 = por %p105, %p106
    %p108 = scmp.ne.s32.totalorder %s97, %s100
    %p109 = scmp.eq.s32.totalorder %s14, 1
    %p110 = por %p108, %p109
    %p111 = scmp.ne.s32.totalorder %s100, %s101
    %p112 = scmp.eq.s32.totalorder %s14, 0
    %p113 = por %p111, %p112
    %p114 = scmp.ne.s32.totalorder %s100, %s101
    %p115 = scmp.eq.s32.totalorder %s15, 1
    %p116 = por %p114, %p115
    %p118 = scmp.ne.s32.totalorder %s101, %s117
    %p119 = scmp.eq.s32.totalorder %s15, 0
    %p120 = por %p118, %p119
    %p121 = scmp.le.s32.totalorder 1, %s9
    %p122 = scmp.lt.s32.totalorder %s9, 3
    %p123 = pnand %p121, %p122
    %p124 = pneg %p123
    // Predicated region
    $region9: #{mask_encoder_forward.18} parent=5 // pred_check
      _
    $region10: #{mask_encoder_forward.18} parent=5 // pred_check_branch
      %126 = sbr.rel (%p123) target = $region12
    $region11: #{mask_encoder_forward.18} parent=5 // pred_region
      %s127 = ssub.s32 %s9, 1
    $region12: #{mask_encoder_forward.18} parent=5 // pred_fallthru
      _
    %p128 = scmp.lt.s32.totalorder %s9, 2
    // Predicated region
    $region13: #{mask_encoder_forward.18} parent=5 // pred_check
      %p129 = pneg %p128
    $region14: #{mask_encoder_forward.18} parent=5 // pred_check_branch
      %131 = sbr.rel (%p129) target = $region16
    $region15: #{mask_encoder_forward.18} parent=5 // pred_region
      // Predicated region
      $region17: #{mask_encoder_forward.18} parent=15 // pred_check
        %p132 = pneg %p29
      $region18: #{mask_encoder_forward.18} parent=15 // pred_check_branch
        %134 = sbr.rel (%p132) target = $region20
      $region19: #{mask_encoder_forward.18} parent=15 // pred_region
        %p135 = scmp.lt.s32.totalorder %s9, 1
        %s136 = scalar_select %p135, %s9, 1
        %s137 = smul.addr %s136, 2
        %s138 = smul.addr %s137, 4
        %s139 = scalar_lea.vmem %s0, %s138
      $region20: #{mask_encoder_forward.18} parent=15 // pred_fallthru
        _
      // Predicated region
      $region21: #{mask_encoder_forward.18} parent=15 // pred_check
        %p140 = pneg %p55
      $region22: #{mask_encoder_forward.18} parent=15 // pred_check_branch
        %142 = sbr.rel (%p140) target = $region24
      $region23: #{mask_encoder_forward.18} parent=15 // pred_region
        %p143 = scmp.lt.s32.totalorder %s9, 1
        %s144 = scalar_select %p143, %s9, 1
        %s145 = smul.addr %s144, 2
        %s146 = smul.addr %s145, 4
        %s147 = scalar_lea.vmem %s1, %s146
      $region24: #{mask_encoder_forward.18} parent=15 // pred_fallthru
        _
      // Predicated region
      $region25: #{mask_encoder_forward.18} parent=15 // pred_check
        %p148 = pneg %p81
      $region26: #{mask_encoder_forward.18} parent=15 // pred_check_branch
        %150 = sbr.rel (%p148) target = $region28
      $region27: #{mask_encoder_forward.18} parent=15 // pred_region
        %p151 = scmp.lt.s32.totalorder %s9, 1
        %s152 = scalar_select %p151, %s9, 1
        %s153 = smul.addr %s152, 2
        %s154 = smul.addr %s153, 4
        %s155 = scalar_lea.vmem %s2, %s154
      $region28: #{mask_encoder_forward.18} parent=15 // pred_fallthru
        _
    $region16: #{mask_encoder_forward.18} parent=5 // pred_fallthru
      _
    %p156 = scmp.le.s32.totalorder 1, %s9
    %p157 = scmp.lt.s32.totalorder %s9, 3
    %p158 = pnand %p156, %p157
    %p159 = pneg %p158
    // Predicated region
    $region29: #{mask_encoder_forward.18} parent=5 // pred_check
      _
    $region30: #{mask_encoder_forward.18} parent=5 // pred_check_branch
      %161 = sbr.rel (%p158) target = $region32
    $region31: #{mask_encoder_forward.18} parent=5 // pred_region
      %s162 = ssub.s32 %s9, 1
      %p163 = scmp.lt.s32.totalorder %s14, 1
      %s164 = scalar_select %p163, %s14, 1
      %s165 = smul.addr %s164, 2
      %s166 = smul.addr %s165, 4
      %s167 = scalar_lea.vmem %s0, %s166
      %p168 = pneg %p35
      %p169 = pneg %p32
      %p170 = scmp.lt.s32.totalorder %s14, 1
      %s171 = scalar_select %p170, %s14, 1
      %s172 = smul.addr %s171, 2
      %s173 = smul.addr %s172, 4
      %s174 = scalar_lea.vmem %s1, %s173
      %p175 = pneg %p61
      %p176 = pneg %p58
      %p177 = scmp.lt.s32.totalorder %s14, 1
      %s178 = scalar_select %p177, %s14, 1
      %s179 = smul.addr %s178, 2
      %s180 = smul.addr %s179, 4
      %s181 = scalar_lea.vmem %s2, %s180
      %p182 = pneg %p87
      %p183 = pneg %p84
      %p184 = pneg %p113
      %p185 = pneg %p110
      %p186 = scmp.lt.s32.totalorder %s14, 1
      %s187 = scalar_select %p186, %s14, 1
      %s188 = smul.addr %s187, 4
      %s189 = scalar_lea.vmem %s3, %s188
      %p190 = scmp.lt.s32.totalorder %s14, 1
      %s191 = scalar_select %p190, %s14, 1
      %s192 = smul.addr %s191, 2
      %s193 = smul.addr %s192, 4
      %s194 = scalar_lea.vmem %s0, %s193
      %p195 = scmp.lt.s32.totalorder %s14, 1
      %s196 = scalar_select %p195, %s14, 1
      %s197 = smul.addr %s196, 2
      %s198 = smul.addr %s197, 4
      %s199 = scalar_lea.vmem %s1, %s198
      %p200 = scmp.lt.s32.totalorder %s14, 1
      %s201 = scalar_select %p200, %s14, 1
      %s202 = smul.addr %s201, 2
      %s203 = smul.addr %s202, 4
      %s204 = scalar_lea.vmem %s2, %s203
      %p205 = scmp.lt.s32.totalorder %s14, 1
      %s206 = scalar_select %p205, %s14, 1
      %s207 = smul.addr %s206, 4
      %s208 = scalar_lea.vmem %s3, %s207
      %v210 = vlaneseq
      %v211 = vand.u32 %v210, 127
      %vm212 = vcmp.lt.s32.totalorder %v211, 5
      %v213 = vld [vmem:[%s194] sm:$0xf]
      %v214 = vld [vmem:[%s199] sm:$0xf]
      %v215 = vld [vmem:[%s204 + $0x4] sm:$0xf]
      %v216 = vunpack.c.l.bf16 %v213
      %v217 = vmul.f32 %v216, 0.125
      %v218 = vpack.c.bf16 %v217, %v217
      %v220 = vunpack.c.l.b16 %v214
      %v221 = vpack.c.b16 %v220, %v220
      %222 = vrot.lane.b32.xlu0 %v221, 64
      %v223 = vpop.permute.xlu0 %222
      %vm224 = vcmask 523264
      %v226 = vsel %vm224, %v218, 0
      %v229 = vsel %vm224, %v223, 0
      %231 = vmatpush.bf16.xpose.msra.mxu0 0
      %232 = vmatpush.bf16.xpose.msra.mxu0 0
      %233 = vmatpush.bf16.xpose.msra.mxu0 0
      %234 = vmatpush.bf16.xpose.msra.mxu0 0
      %235 = vmatpush.bf16.xpose.msra.mxu0 0
      %236 = vmatpush.bf16.xpose.msra.mxu0 0
      %237 = vmatpush.bf16.xpose.msra.mxu0 0
      %238 = vmatpush.bf16.xpose.msra.mxu0 %v229
      %239 = vmatmul.bf16.gmra.mxu0 %v226
      %v240 = vpop.f32.mrf.mxu0
      %v241 = vadd.f32 0.0, %v240
      %v242 = vpop.f32.mrf.mxu0
      %243 = vdwg.mxu0
      %v244 = vsel %vm212, 1, 0
      %vm245 = vcmp.eq.s32.totalorder %v244, 1
      %v246 = vsel %vm245, %v241, -1e+30
      %vm247 = vcmask 64512
      %v248 = vsel %vm247, %v246, -inf
      %249 = vmax.xlane.f32.xlu0 %v248
      %v250 = vpop.xlane.xlu0 %249
      %v251 = vsub.f32 %v246, %v250
      %v252 = vmul.f32 %v251, 1.442695
      %v253 = vpow.pop %v252
      %v254 = vsel %vm247, %v253, 0.0
      %255 = vadd.xlane.f32.xlu0 %v254
      %v256 = vpop.xlane.xlu0 %255
      %v257 = vrcp.pop %v256
      %v258 = vmul.f32 %v256, %v257
      %v259 = vsub.f32 1.0, %v258
      %v260 = vmul.f32 %v257, %v259
      %v261 = vadd.f32 %v257, %v260
      %vm262 = vweird.f32 %v256
      %vm263 = vweird.f32 %v257
      %vm264 = vmor %vm262, %vm263
      %v265 = vsel %vm264, %v257, %v261
      %v266 = vand.u32 2147483647, %v256
      %vm267 = vcmp.eq.f32.partialorder %v266, 8.507059e+37
      %v268 = vand.u32 %v256, 2147483648
      %v269 = vor.u32 1.1754944e-38, %v268
      %v270 = vsel %vm267, %v269, %v265
      %v271 = vmul.f32 %v253, %v270
      %v272 = vpack.c.bf16 %v271, %v271
      %v274 = vsel %vm247, %v272, 0
      %vm276 = vcmask 1043456
      %v278 = vsel %vm276, %v215, 0
      %280 = vmatpush.bf16.msra.mxu0 0
      %281 = vmatpush.bf16.msra.mxu0 0
      %282 = vmatpush.bf16.msra.mxu0 0
      %283 = vmatpush.bf16.msra.mxu0 0
      %284 = vmatpush.bf16.msra.mxu0 0
      %285 = vmatpush.bf16.msra.mxu0 0
      %286 = vmatpush.bf16.msra.mxu0 0
      %287 = vmatpush.bf16.msra.mxu0 %v278
      %288 = vmatmul.bf16.gmra.mxu0 %v274
      %v289 = vpop.f32.mrf.mxu0
      %v290 = vadd.f32 0.0, %v289
      %v291 = vpop.f32.mrf.mxu0
      %292 = vdwg.mxu0
      %v293 = vpack.c.bf16 %v290, %v290
      %vm294 = vcmask 519168
      %295 = vst.msk [vmem:[%s208] sm:$0xf] %vm294, %v293
      %p296 = scmp.lt.s32.totalorder %s14, 1
      %s297 = scalar_select %p296, %s14, 1
      %s298 = smul.addr %s297, 4
      %s299 = scalar_lea.vmem %s3, %s298
      // Predicated region
      $region33: #{mask_encoder_forward.18} parent=31 // pred_check
        %p300 = pneg %p110
      $region34: #{mask_encoder_forward.18} parent=31 // pred_check_branch
        %302 = sbr.rel (%p300) target = $region36
      $region35: #{mask_encoder_forward.18} parent=31 // pred_region
        _
      $region36: #{mask_encoder_forward.18} parent=31 // pred_fallthru
        _
    $region32: #{mask_encoder_forward.18} parent=5 // pred_fallthru
      _
    %p303 = scmp.le.s32.totalorder 2, %s9
    // Predicated region
    $region37: #{mask_encoder_forward.18} parent=5 // pred_check
      %p304 = pneg %p303
    $region38: #{mask_encoder_forward.18} parent=5 // pred_check_branch
      %306 = sbr.rel (%p304) target = $region40
    $region39: #{mask_encoder_forward.18} parent=5 // pred_region
      %s307 = ssub.s32 %s9, 2
      // Predicated region
      $region41: #{mask_encoder_forward.18} parent=39 // pred_check
        %p308 = pneg %p116
      $region42: #{mask_encoder_forward.18} parent=39 // pred_check_branch
        %310 = sbr.rel (%p308) target = $region44
      $region43: #{mask_encoder_forward.18} parent=39 // pred_region
        %p311 = scmp.lt.s32.totalorder %s15, 1
        %s312 = scalar_select %p311, %s15, 1
        %s313 = smul.addr %s312, 4
        %s314 = scalar_lea.vmem %s3, %s313
      $region44: #{mask_encoder_forward.18} parent=39 // pred_fallthru
        _
    $region40: #{mask_encoder_forward.18} parent=5 // pred_fallthru
      _
  $region6: #{mask_encoder_forward.18} parent=0 // loop_footer
    %s13 = sadd.s32 1, %s9
  $region7: #{mask_encoder_forward.18} parent=0 // loop_footer_branch
    %8 = sbr.rel target = $region3
  $region8: #{mask_encoder_forward.18} parent=0 // loop_exit
    _

// kernel: mask_encoder_forward.17
$region0: #{mask_encoder_forward.17}
  #allocation0 [shape = 'u32[]', space=smem, size = 0x4, offset = 0x4, fixed_abs, tag = 'smem constant byte address 0x4 - core index']
  #allocation1 [shape = 'u32[72,128]{1,0:T(1,128)}', space=vmem, size = 0x9000, scoped, tag = 'internal scratch']
  #allocation2 [shape = 'f32[16,192]{1,0:T(8,128)}', space=vmem, size = 0x4000, scoped, tag = 'scratch operand']
  %s0 = inlined_call_operand.vmem [shape: bf16[16,64], index: 0, kind: input, shape index: {}]
  %s1 = inlined_call_operand.vmem [shape: bf16[64,192], index: 1, kind: input, shape index: {}]
  %s2 = inlined_call_operand.vmem [shape: f32[1,192], index: 2, kind: input, shape index: {}]
  %s3 = inlined_call_operand.vmem [shape: f32[1,64], index: 3, kind: input, shape index: {}]
  %s4 = inlined_call_operand.vmem [shape: f32[1,64], index: 4, kind: input, shape index: {}]
  %s5 = inlined_call_operand.vmem [shape: bf16[16,192], index: 5, kind: output, shape index: {}]
  %s6 = sld [smem:[#allocation0]]
  $region38: #{mask_encoder_forward.17} parent=0
    _
  %s8 = ssub.s32 1, %s6
  %s9 = scalar_select 0, %s8, %s6
  // Predicated region
  $region2: #{mask_encoder_forward.17} parent=0 // pred_check
    _
  $region3: #{mask_encoder_forward.17} parent=0 // pred_check_branch
    %11 = sbr.rel (0) target = $region5
  $region4: #{mask_encoder_forward.17} parent=0 // pred_region
    _
  $region5: #{mask_encoder_forward.17} parent=0 // pred_fallthru
    _
  // Predicated region
  $region6: #{mask_encoder_forward.17} parent=0 // pred_check
    _
  $region7: #{mask_encoder_forward.17} parent=0 // pred_check_branch
    %13 = sbr.rel (0) target = $region9
  $region8: #{mask_encoder_forward.17} parent=0 // pred_region
    _
  $region9: #{mask_encoder_forward.17} parent=0 // pred_fallthru
    _
  // Predicated region
  $region10: #{mask_encoder_forward.17} parent=0 // pred_check
    _
  $region11: #{mask_encoder_forward.17} parent=0 // pred_check_branch
    %15 = sbr.rel (0) target = $region13
  $region12: #{mask_encoder_forward.17} parent=0 // pred_region
    _
  $region13: #{mask_encoder_forward.17} parent=0 // pred_fallthru
    _
  // Predicated region
  $region14: #{mask_encoder_forward.17} parent=0 // pred_check
    _
  $region15: #{mask_encoder_forward.17} parent=0 // pred_check_branch
    %17 = sbr.rel (0) target = $region17
  $region16: #{mask_encoder_forward.17} parent=0 // pred_region
    _
  $region17: #{mask_encoder_forward.17} parent=0 // pred_fallthru
    _
  // Predicated region
  $region18: #{mask_encoder_forward.17} parent=0 // pred_check
    _
  $region19: #{mask_encoder_forward.17} parent=0 // pred_check_branch
    %19 = sbr.rel (0) target = $region21
  $region20: #{mask_encoder_forward.17} parent=0 // pred_region
    _
  $region21: #{mask_encoder_forward.17} parent=0 // pred_fallthru
    _
  %p21 = scmp.eq.s32.totalorder 0, 0
  // Predicated region
  $region22: #{mask_encoder_forward.17} parent=0 // pred_check
    %p22 = pneg %p21
  $region23: #{mask_encoder_forward.17} parent=0 // pred_check_branch
    %24 = sbr.rel (%p22) target = $region25
  $region24: #{mask_encoder_forward.17} parent=0 // pred_region
    %25 = vst [vmem:[#allocation2] sm:$0xff] 0.0
    %vm26 = vcmask 523264
    %27 = vst.msk [vmem:[#allocation2 + $0x8] sm:$0xff] %vm26, 0.0
    %28 = vst [vmem:[#allocation2 + $0x10] sm:$0xff] 0.0
    %29 = vst.msk [vmem:[#allocation2 + $0x18] sm:$0xff] %vm26, 0.0
  $region25: #{mask_encoder_forward.17} parent=0 // pred_fallthru
    _
  %v30 = vld [vmem:[%s0] sm:$0xf]
  %v31 = vld [vmem:[%s0 + $0x4] sm:$0xf]
  %v32 = vunpack.c.l.bf16 %v30
  %v33 = vunpack.c.l.bf16 %v31
  %vm34 = vcmask 523264
  %v35 = vsel %vm34, %v32, 0.0
  %36 = vadd.xlane.f32.xlu0 %v35
  %v37 = vpop.xlane.xlu0 %36
  %v38 = vsel %vm34, %v33, 0.0
  %39 = vadd.xlane.f32.xlu0 %v38
  %v40 = vpop.xlane.xlu0 %39
  %v41 = vrcp.pop 64.0
  %v42 = vmul.f32 64.0, %v41
  %v43 = vsub.f32 1.0, %v42
  %v44 = vmul.f32 %v41, %v43
  %v45 = vadd.f32 %v41, %v44
  %vm46 = vweird.f32 %v41
  %v47 = vsel %vm46, %v41, %v45
  %v48 = vmul.f32 %v37, %v47
  %v49 = vmul.f32 %v40, %v47
  %v50 = vsub.f32 %v32, %v48
  %v51 = vsub.f32 %v33, %v49
  %v52 = vmul.f32 %v50, %v50
  %v53 = vmul.f32 %v51, %v51
  %v54 = vsel %vm34, %v52, 0.0
  %55 = vadd.xlane.f32.xlu0 %v54
  %v56 = vpop.xlane.xlu0 %55
  %v57 = vsel %vm34, %v53, 0.0
  %58 = vadd.xlane.f32.xlu0 %v57
  %v59 = vpop.xlane.xlu0 %58
  %v60 = vmul.f32 %v56, %v47
  %v61 = vmul.f32 %v59, %v47
  %v62 = vadd.f32 %v60, 1e-05
  %v63 = vadd.f32 %v61, 1e-05
  %v64 = vrsqrt.pop %v62
  %v65 = vmul.f32 %v64, %v62
  %v66 = vmul.f32 %v65, %v64
  %v67 = vmul.f32 0.5, %v66
  %v68 = vsub.f32 1.5, %v67
  %v69 = vmul.f32 %v64, %v68
  %vm70 = vweird.f32 %v62
  %vm71 = vweird.f32 %v64
  %vm72 = vmor %vm70, %vm71
  %v73 = vsel %vm72, %v64, %v69
  %v74 = vrsqrt.pop %v63
  %v75 = vmul.f32 %v74, %v63
  %v76 = vmul.f32 %v75, %v74
  %v77 = vmul.f32 0.5, %v76
  %v78 = vsub.f32 1.5, %v77
  %v79 = vmul.f32 %v74, %v78
  %vm80 = vweird.f32 %v63
  %vm81 = vweird.f32 %v74
  %vm82 = vmor %vm80, %vm81
  %v83 = vsel %vm82, %v74, %v79
  %v84 = vmul.f32 %v50, %v73
  %v85 = vmul.f32 %v51, %v83
  %v86 = vld [vmem:[%s3] sm:$0x1]
  %v88 = vperm.slane %v86, 0
  %v90 = vmul.f32 %v84, %v88
  %v91 = vmul.f32 %v85, %v88
  %v92 = vld [vmem:[%s4] sm:$0x1]
  %v94 = vperm.slane %v92, 0
  %v96 = vadd.f32 %v90, %v94
  %v97 = vadd.f32 %v91, %v94
  %v98 = vpack.c.bf16 %v97, %v96
  %v99 = vld [vmem:[#allocation2] sm:$0xff]
  %v100 = vld [vmem:[#allocation2 + $0x8] sm:$0xff]
  %v101 = vld [vmem:[#allocation2 + $0x10] sm:$0xff]
  %v102 = vld [vmem:[#allocation2 + $0x18] sm:$0xff]
  %v103 = vld [vmem:[%s1] sm:$0xff]
  %v104 = vld [vmem:[%s1 + $0x8] sm:$0xff]
  %v105 = vld [vmem:[%s1 + $0x10] sm:$0xff]
  %v106 = vld [vmem:[%s1 + $0x18] sm:$0xff]
  %v107 = vld [vmem:[%s1 + $0x20] sm:$0xff]
  %v108 = vld [vmem:[%s1 + $0x28] sm:$0xff]
  %v109 = vld [vmem:[%s1 + $0x30] sm:$0xff]
  %v110 = vld [vmem:[%s1 + $0x38] sm:$0xff]
  %v119 = vunpack.c.l.b16 %v103
  %v120 = vunpack.c.h.b16 %v103
  %v121 = vunpack.c.l.b16 %v104
  %v122 = vunpack.c.h.b16 %v104
  %v123 = vunpack.c.l.b16 %v105
  %v124 = vunpack.c.h.b16 %v105
  %v125 = vunpack.c.l.b16 %v106
  %v126 = vunpack.c.h.b16 %v106
  %v127 = vunpack.c.l.b16 %v107
  %v128 = vunpack.c.h.b16 %v107
  %v129 = vunpack.c.l.b16 %v108
  %v130 = vunpack.c.h.b16 %v108
  %v131 = vunpack.c.l.b16 %v109
  %v132 = vunpack.c.h.b16 %v109
  %v133 = vunpack.c.l.b16 %v110
  %v134 = vunpack.c.h.b16 %v110
  %v135 = vpack.c.b16 %v121, %v119
  %v136 = vpack.c.b16 %v122, %v120
  %v137 = vpack.c.b16 %v125, %v123
  %v138 = vpack.c.b16 %v126, %v124
  %v139 = vpack.c.b16 %v129, %v127
  %v140 = vpack.c.b16 %v130, %v128
  %v141 = vpack.c.b16 %v133, %v131
  %v142 = vpack.c.b16 %v134, %v132
  %v152 = vsel %vm34, %v98, 0
  %154 = vmatpush.bf16.msra.mxu0 0
  %155 = vmatpush.bf16.msra.mxu0 0
  %156 = vmatpush.bf16.msra.mxu0 0
  %157 = vmatpush.bf16.msra.mxu0 0
  %158 = vmatpush.bf16.msra.mxu0 %v141
  %159 = vmatpush.bf16.msra.mxu0 %v139
  %160 = vmatpush.bf16.msra.mxu0 %v137
  %161 = vmatpush.bf16.msra.mxu0 %v135
  %162 = vmatmul.bf16.gmra.mxu0 %v152
  %v163 = vpop.f32.mrf.mxu0
  %v164 = vadd.f32 0.0, %v163
  %v165 = vpop.f32.mrf.mxu0
  %v166 = vadd.f32 0.0, %v165
  %167 = vdwg.mxu0
  %168 = vmatpush.bf16.msra.mxu0 0
  %169 = vmatpush.bf16.msra.mxu0 0
  %170 = vmatpush.bf16.msra.mxu0 0
  %171 = vmatpush.bf16.msra.mxu0 0
  %172 = vmatpush.bf16.msra.mxu0 %v142
  %173 = vmatpush.bf16.msra.mxu0 %v140
  %174 = vmatpush.bf16.msra.mxu0 %v138
  %175 = vmatpush.bf16.msra.mxu0 %v136
  %176 = vmatmul.bf16.gmra.mxu0 %v152
  %v177 = vpop.f32.mrf.mxu0
  %v178 = vadd.f32 0.0, %v177
  %v179 = vpop.f32.mrf.mxu0
  %v180 = vadd.f32 0.0, %v179
  %181 = vdwg.mxu0
  %v182 = vadd.f32 %v99, %v164
  %v183 = vadd.f32 %v100, %v178
  %v184 = vadd.f32 %v101, %v166
  %v185 = vadd.f32 %v102, %v180
  %186 = vst [vmem:[#allocation2] sm:$0xff] %v182
  %187 = vst.msk [vmem:[#allocation2 + $0x8] sm:$0xff] %vm34, %v183
  %188 = vst [vmem:[#allocation2 + $0x10] sm:$0xff] %v184
  %189 = vst.msk [vmem:[#allocation2 + $0x18] sm:$0xff] %vm34, %v185
  // Predicated region
  $region26: #{mask_encoder_forward.17} parent=0 // pred_check
    %p190 = pneg %p21
  $region27: #{mask_encoder_forward.17} parent=0 // pred_check_branch
    %192 = sbr.rel (%p190) target = $region29
  $region28: #{mask_encoder_forward.17} parent=0 // pred_region
    %v193 = vld [vmem:[#allocation2] sm:$0xff]
    %v194 = vld [vmem:[#allocation2 + $0x8] sm:$0xff]
    %v195 = vld [vmem:[#allocation2 + $0x10] sm:$0xff]
    %v196 = vld [vmem:[#allocation2 + $0x18] sm:$0xff]
    %v197 = vld [vmem:[%s2] sm:$0x3]
    %v199 = vperm.slane %v197, 0
    %v200 = vperm.slane %v197, 1
    %v203 = vadd.f32 %v193, %v199
    %v204 = vadd.f32 %v194, %v200
    %v205 = vadd.f32 %v195, %v199
    %v206 = vadd.f32 %v196, %v200
    %v207 = vpack.c.bf16 %v204, %v203
    %v208 = vpack.c.bf16 %v206, %v205
    %vm209 = vcmask 1043456
    %vm210 = vcmask 523268
    %vm211 = vmor %vm210, %vm209
    %212 = vst.msk [vmem:[%s5] sm:$0xff] %vm211, %v207
    %213 = vst.msk [vmem:[%s5 + $0x8] sm:$0xff] %vm211, %v208
  $region29: #{mask_encoder_forward.17} parent=0 // pred_fallthru
    _
  // Predicated region
  $region30: #{mask_encoder_forward.17} parent=0 // pred_check
    _
  $region31: #{mask_encoder_forward.17} parent=0 // pred_check_branch
    %215 = sbr.rel (0) target = $region33
  $region32: #{mask_encoder_forward.17} parent=0 // pred_region
    _
  $region33: #{mask_encoder_forward.17} parent=0 // pred_fallthru
    _
  // Predicated region
  $region34: #{mask_encoder_forward.17} parent=0 // pred_check
    _
  $region35: #{mask_encoder_forward.17} parent=0 // pred_check_branch
    %217 = sbr.rel (0) target = $region37
  $region36: #{mask_encoder_forward.17} parent=0 // pred_region
    _
  $region37: #{mask_encoder_forward.17} parent=0 // pred_fallthru
    _

// kernel: mask_encoder_forward.15
$region0: #{mask_encoder_forward.15}
  #allocation0 [shape = 'u32[]', space=smem, size = 0x4, offset = 0x4, fixed_abs, tag = 'smem constant byte address 0x4 - core index']
  #allocation1 [shape = 'u32[72,128]{1,0:T(1,128)}', space=vmem, size = 0x9000, scoped, tag = 'internal scratch']
  #allocation2 [shape = 'f32[8,64]{1,0:T(8,128)}', space=vmem, size = 0x1000, scoped, tag = 'scratch operand']
  %s0 = inlined_call_operand.vmem [shape: bf16[8,768], index: 0, kind: input, shape index: {}]
  %s1 = inlined_call_operand.vmem [shape: bf16[768,64], index: 1, kind: input, shape index: {}]
  %s2 = inlined_call_operand.vmem [shape: f32[8,64], index: 2, kind: output, shape index: {}]
  %s3 = sld [smem:[#allocation0]]
  $region26: #{mask_encoder_forward.15} parent=0
    _
  %s5 = ssub.s32 1, %s3
  %s6 = scalar_select 0, %s5, %s3
  // Predicated region
  $region2: #{mask_encoder_forward.15} parent=0 // pred_check
    _
  $region3: #{mask_encoder_forward.15} parent=0 // pred_check_branch
    %8 = sbr.rel (0) target = $region5
  $region4: #{mask_encoder_forward.15} parent=0 // pred_region
    _
  $region5: #{mask_encoder_forward.15} parent=0 // pred_fallthru
    _
  // Predicated region
  $region6: #{mask_encoder_forward.15} parent=0 // pred_check
    _
  $region7: #{mask_encoder_forward.15} parent=0 // pred_check_branch
    %10 = sbr.rel (0) target = $region9
  $region8: #{mask_encoder_forward.15} parent=0 // pred_region
    _
  $region9: #{mask_encoder_forward.15} parent=0 // pred_fallthru
    _
  %p11 = scmp.eq.s32.totalorder 0, 0
  // Predicated region
  $region10: #{mask_encoder_forward.15} parent=0 // pred_check
    %p12 = pneg %p11
  $region11: #{mask_encoder_forward.15} parent=0 // pred_check_branch
    %14 = sbr.rel (%p12) target = $region13
  $region12: #{mask_encoder_forward.15} parent=0 // pred_region
    %vm15 = vcmask 523264
    %16 = vst.msk [vmem:[#allocation2] sm:$0xff] %vm15, 0.0
  $region13: #{mask_encoder_forward.15} parent=0 // pred_fallthru
    _
  %v17 = vld [vmem:[%s0] sm:$0xff]
  %v18 = vld [vmem:[%s0 + $0x8] sm:$0xff]
  %v19 = vld [vmem:[%s0 + $0x10] sm:$0xff]
  %v20 = vld [vmem:[#allocation2] sm:$0xff]
  %v21 = vld [vmem:[%s1] sm:$0xf]
  %v22 = vld [vmem:[%s1 + $0x4] sm:$0xf]
  %v23 = vld [vmem:[%s1 + $0x8] sm:$0xf]
  %v24 = vld [vmem:[%s1 + $0xc] sm:$0xf]
  %v25 = vld [vmem:[%s1 + $0x10] sm:$0xf]
  %v26 = vld [vmem:[%s1 + $0x14] sm:$0xf]
  %v27 = vld [vmem:[%s1 + $0x18] sm:$0xf]
  %v28 = vld [vmem:[%s1 + $0x1c] sm:$0xf]
  %v29 = vld [vmem:[%s1 + $0x20] sm:$0xf]
  %v30 = vld [vmem:[%s1 + $0x24] sm:$0xf]
  %v31 = vld [vmem:[%s1 + $0x28] sm:$0xf]
  %v32 = vld [vmem:[%s1 + $0x2c] sm:$0xf]
  %v33 = vld [vmem:[%s1 + $0x30] sm:$0xf]
  %v34 = vld [vmem:[%s1 + $0x34] sm:$0xf]
  %v35 = vld [vmem:[%s1 + $0x38] sm:$0xf]
  %v36 = vld [vmem:[%s1 + $0x3c] sm:$0xf]
  %v37 = vld [vmem:[%s1 + $0x40] sm:$0xf]
  %v38 = vld [vmem:[%s1 + $0x44] sm:$0xf]
  %v39 = vld [vmem:[%s1 + $0x48] sm:$0xf]
  %v40 = vld [vmem:[%s1 + $0x4c] sm:$0xf]
  %v41 = vld [vmem:[%s1 + $0x50] sm:$0xf]
  %v42 = vld [vmem:[%s1 + $0x54] sm:$0xf]
  %v43 = vld [vmem:[%s1 + $0x58] sm:$0xf]
  %v44 = vld [vmem:[%s1 + $0x5c] sm:$0xf]
  %v45 = vld [vmem:[%s1 + $0x60] sm:$0xf]
  %v46 = vld [vmem:[%s1 + $0x64] sm:$0xf]
  %v47 = vld [vmem:[%s1 + $0x68] sm:$0xf]
  %v48 = vld [vmem:[%s1 + $0x6c] sm:$0xf]
  %v49 = vld [vmem:[%s1 + $0x70] sm:$0xf]
  %v50 = vld [vmem:[%s1 + $0x74] sm:$0xf]
  %v51 = vld [vmem:[%s1 + $0x78] sm:$0xf]
  %v52 = vld [vmem:[%s1 + $0x7c] sm:$0xf]
  %v53 = vld [vmem:[%s1 + $0x80] sm:$0xf]
  %v54 = vld [vmem:[%s1 + $0x84] sm:$0xf]
  %v55 = vld [vmem:[%s1 + $0x88] sm:$0xf]
  %v56 = vld [vmem:[%s1 + $0x8c] sm:$0xf]
  %v57 = vld [vmem:[%s1 + $0x90] sm:$0xf]
  %v58 = vld [vmem:[%s1 + $0x94] sm:$0xf]
  %v59 = vld [vmem:[%s1 + $0x98] sm:$0xf]
  %v60 = vld [vmem:[%s1 + $0x9c] sm:$0xf]
  %v61 = vld [vmem:[%s1 + $0xa0] sm:$0xf]
  %v62 = vld [vmem:[%s1 + $0xa4] sm:$0xf]
  %v63 = vld [vmem:[%s1 + $0xa8] sm:$0xf]
  %v64 = vld [vmem:[%s1 + $0xac] sm:$0xf]
  %v65 = vld [vmem:[%s1 + $0xb0] sm:$0xf]
  %v66 = vld [vmem:[%s1 + $0xb4] sm:$0xf]
  %v67 = vld [vmem:[%s1 + $0xb8] sm:$0xf]
  %v68 = vld [vmem:[%s1 + $0xbc] sm:$0xf]
  %v69 = vld [vmem:[%s1 + $0xc0] sm:$0xf]
  %v70 = vld [vmem:[%s1 + $0xc4] sm:$0xf]
  %v71 = vld [vmem:[%s1 + $0xc8] sm:$0xf]
  %v72 = vld [vmem:[%s1 + $0xcc] sm:$0xf]
  %v73 = vld [vmem:[%s1 + $0xd0] sm:$0xf]
  %v74 = vld [vmem:[%s1 + $0xd4] sm:$0xf]
  %v75 = vld [vmem:[%s1 + $0xd8] sm:$0xf]
  %v76 = vld [vmem:[%s1 + $0xdc] sm:$0xf]
  %v77 = vld [vmem:[%s1 + $0xe0] sm:$0xf]
  %v78 = vld [vmem:[%s1 + $0xe4] sm:$0xf]
  %v79 = vld [vmem:[%s1 + $0xe8] sm:$0xf]
  %v80 = vld [vmem:[%s1 + $0xec] sm:$0xf]
  %v81 = vld [vmem:[%s1 + $0xf0] sm:$0xf]
  %v82 = vld [vmem:[%s1 + $0xf4] sm:$0xf]
  %v83 = vld [vmem:[%s1 + $0xf8] sm:$0xf]
  %v84 = vld [vmem:[%s1 + $0xfc] sm:$0xf]
  %v85 = vld [vmem:[%s1 + $0x100] sm:$0xf]
  %v86 = vld [vmem:[%s1 + $0x104] sm:$0xf]
  %v87 = vld [vmem:[%s1 + $0x108] sm:$0xf]
  %v88 = vld [vmem:[%s1 + $0x10c] sm:$0xf]
  %v89 = vld [vmem:[%s1 + $0x110] sm:$0xf]
  %v90 = vld [vmem:[%s1 + $0x114] sm:$0xf]
  %v91 = vld [vmem:[%s1 + $0x118] sm:$0xf]
  %v92 = vld [vmem:[%s1 + $0x11c] sm:$0xf]
  %v93 = vld [vmem:[%s1 + $0x120] sm:$0xf]
  %v94 = vld [vmem:[%s1 + $0x124] sm:$0xf]
  %v95 = vld [vmem:[%s1 + $0x128] sm:$0xf]
  %v96 = vld [vmem:[%s1 + $0x12c] sm:$0xf]
  %v97 = vld [vmem:[%s1 + $0x130] sm:$0xf]
  %v98 = vld [vmem:[%s1 + $0x134] sm:$0xf]
  %v99 = vld [vmem:[%s1 + $0x138] sm:$0xf]
  %v100 = vld [vmem:[%s1 + $0x13c] sm:$0xf]
  %v101 = vld [vmem:[%s1 + $0x140] sm:$0xf]
  %v102 = vld [vmem:[%s1 + $0x144] sm:$0xf]
  %v103 = vld [vmem:[%s1 + $0x148] sm:$0xf]
  %v104 = vld [vmem:[%s1 + $0x14c] sm:$0xf]
  %v105 = vld [vmem:[%s1 + $0x150] sm:$0xf]
  %v106 = vld [vmem:[%s1 + $0x154] sm:$0xf]
  %v107 = vld [vmem:[%s1 + $0x158] sm:$0xf]
  %v108 = vld [vmem:[%s1 + $0x15c] sm:$0xf]
  %v109 = vld [vmem:[%s1 + $0x160] sm:$0xf]
  %v110 = vld [vmem:[%s1 + $0x164] sm:$0xf]
  %v111 = vld [vmem:[%s1 + $0x168] sm:$0xf]
  %v112 = vld [vmem:[%s1 + $0x16c] sm:$0xf]
  %v113 = vld [vmem:[%s1 + $0x170] sm:$0xf]
  %v114 = vld [vmem:[%s1 + $0x174] sm:$0xf]
  %v115 = vld [vmem:[%s1 + $0x178] sm:$0xf]
  %v116 = vld [vmem:[%s1 + $0x17c] sm:$0xf]
  %v120 = vunpack.c.l.b16 %v17
  %v121 = vunpack.c.h.b16 %v17
  %v122 = vunpack.c.l.b16 %v18
  %v123 = vunpack.c.h.b16 %v18
  %v124 = vunpack.c.l.b16 %v19
  %v125 = vunpack.c.h.b16 %v19
  %v126 = vpack.c.b16 %v120, %v120
  %v127 = vpack.c.b16 %v121, %v121
  %v128 = vpack.c.b16 %v122, %v122
  %v129 = vpack.c.b16 %v123, %v123
  %v130 = vpack.c.b16 %v124, %v124
  %v131 = vpack.c.b16 %v125, %v125
  %v234 = vunpack.c.l.b16 %v21
  %v235 = vunpack.c.l.b16 %v22
  %v236 = vunpack.c.l.b16 %v23
  %v237 = vunpack.c.l.b16 %v24
  %v238 = vunpack.c.l.b16 %v25
  %v239 = vunpack.c.l.b16 %v26
  %v240 = vunpack.c.l.b16 %v27
  %v241 = vunpack.c.l.b16 %v28
  %v242 = vunpack.c.l.b16 %v29
  %v243 = vunpack.c.l.b16 %v30
  %v244 = vunpack.c.l.b16 %v31
  %v245 = vunpack.c.l.b16 %v32
  %v246 = vunpack.c.l.b16 %v33
  %v247 = vunpack.c.l.b16 %v34
  %v248 = vunpack.c.l.b16 %v35
  %v249 = vunpack.c.l.b16 %v36
  %v250 = vunpack.c.l.b16 %v37
  %v251 = vunpack.c.l.b16 %v38
  %v252 = vunpack.c.l.b16 %v39
  %v253 = vunpack.c.l.b16 %v40
  %v254 = vunpack.c.l.b16 %v41
  %v255 = vunpack.c.l.b16 %v42
  %v256 = vunpack.c.l.b16 %v43
  %v257 = vunpack.c.l.b16 %v44
  %v258 = vunpack.c.l.b16 %v45
  %v259 = vunpack.c.l.b16 %v46
  %v260 = vunpack.c.l.b16 %v47
  %v261 = vunpack.c.l.b16 %v48
  %v262 = vunpack.c.l.b16 %v49
  %v263 = vunpack.c.l.b16 %v50
  %v264 = vunpack.c.l.b16 %v51
  %v265 = vunpack.c.l.b16 %v52
  %v266 = vunpack.c.l.b16 %v53
  %v267 = vunpack.c.l.b16 %v54
  %v268 = vunpack.c.l.b16 %v55
  %v269 = vunpack.c.l.b16 %v56
  %v270 = vunpack.c.l.b16 %v57
  %v271 = vunpack.c.l.b16 %v58
  %v272 = vunpack.c.l.b16 %v59
  %v273 = vunpack.c.l.b16 %v60
  %v274 = vunpack.c.l.b16 %v61
  %v275 = vunpack.c.l.b16 %v62
  %v276 = vunpack.c.l.b16 %v63
  %v277 = vunpack.c.l.b16 %v64
  %v278 = vunpack.c.l.b16 %v65
  %v279 = vunpack.c.l.b16 %v66
  %v280 = vunpack.c.l.b16 %v67
  %v281 = vunpack.c.l.b16 %v68
  %v282 = vunpack.c.l.b16 %v69
  %v283 = vunpack.c.l.b16 %v70
  %v284 = vunpack.c.l.b16 %v71
  %v285 = vunpack.c.l.b16 %v72
  %v286 = vunpack.c.l.b16 %v73
  %v287 = vunpack.c.l.b16 %v74
  %v288 = vunpack.c.l.b16 %v75
  %v289 = vunpack.c.l.b16 %v76
  %v290 = vunpack.c.l.b16 %v77
  %v291 = vunpack.c.l.b16 %v78
  %v292 = vunpack.c.l.b16 %v79
  %v293 = vunpack.c.l.b16 %v80
  %v294 = vunpack.c.l.b16 %v81
  %v295 = vunpack.c.l.b16 %v82
  %v296 = vunpack.c.l.b16 %v83
  %v297 = vunpack.c.l.b16 %v84
  %v298 = vunpack.c.l.b16 %v85
  %v299 = vunpack.c.l.b16 %v86
  %v300 = vunpack.c.l.b16 %v87
  %v301 = vunpack.c.l.b16 %v88
  %v302 = vunpack.c.l.b16 %v89
  %v303 = vunpack.c.l.b16 %v90
  %v304 = vunpack.c.l.b16 %v91
  %v305 = vunpack.c.l.b16 %v92
  %v306 = vunpack.c.l.b16 %v93
  %v307 = vunpack.c.l.b16 %v94
  %v308 = vunpack.c.l.b16 %v95
  %v309 = vunpack.c.l.b16 %v96
  %v310 = vunpack.c.l.b16 %v97
  %v311 = vunpack.c.l.b16 %v98
  %v312 = vunpack.c.l.b16 %v99
  %v313 = vunpack.c.l.b16 %v100
  %v314 = vunpack.c.l.b16 %v101
  %v315 = vunpack.c.l.b16 %v102
  %v316 = vunpack.c.l.b16 %v103
  %v317 = vunpack.c.l.b16 %v104
  %v318 = vunpack.c.l.b16 %v105
  %v319 = vunpack.c.l.b16 %v106
  %v320 = vunpack.c.l.b16 %v107
  %v321 = vunpack.c.l.b16 %v108
  %v322 = vunpack.c.l.b16 %v109
  %v323 = vunpack.c.l.b16 %v110
  %v324 = vunpack.c.l.b16 %v111
  %v325 = vunpack.c.l.b16 %v112
  %v326 = vunpack.c.l.b16 %v113
  %v327 = vunpack.c.l.b16 %v114
  %v328 = vunpack.c.l.b16 %v115
  %v329 = vunpack.c.l.b16 %v116
  %v330 = vpack.c.b16 %v235, %v234
  %v331 = vpack.c.b16 %v237, %v236
  %v332 = vpack.c.b16 %v239, %v238
  %v333 = vpack.c.b16 %v241, %v240
  %v334 = vpack.c.b16 %v243, %v242
  %v335 = vpack.c.b16 %v245, %v244
  %v336 = vpack.c.b16 %v247, %v246
  %v337 = vpack.c.b16 %v249, %v248
  %v338 = vpack.c.b16 %v251, %v250
  %v339 = vpack.c.b16 %v253, %v252
  %v340 = vpack.c.b16 %v255, %v254
  %v341 = vpack.c.b16 %v257, %v256
  %v342 = vpack.c.b16 %v259, %v258
  %v343 = vpack.c.b16 %v261, %v260
  %v344 = vpack.c.b16 %v263, %v262
  %v345 = vpack.c.b16 %v265, %v264
  %v346 = vpack.c.b16 %v267, %v266
  %v347 = vpack.c.b16 %v269, %v268
  %v348 = vpack.c.b16 %v271, %v270
  %v349 = vpack.c.b16 %v273, %v272
  %v350 = vpack.c.b16 %v275, %v274
  %v351 = vpack.c.b16 %v277, %v276
  %v352 = vpack.c.b16 %v279, %v278
  %v353 = vpack.c.b16 %v281, %v280
  %v354 = vpack.c.b16 %v283, %v282
  %v355 = vpack.c.b16 %v285, %v284
  %v356 = vpack.c.b16 %v287, %v286
  %v357 = vpack.c.b16 %v289, %v288
  %v358 = vpack.c.b16 %v291, %v290
  %v359 = vpack.c.b16 %v293, %v292
  %v360 = vpack.c.b16 %v295, %v294
  %v361 = vpack.c.b16 %v297, %v296
  %v362 = vpack.c.b16 %v299, %v298
  %v363 = vpack.c.b16 %v301, %v300
  %v364 = vpack.c.b16 %v303, %v302
  %v365 = vpack.c.b16 %v305, %v304
  %v366 = vpack.c.b16 %v307, %v306
  %v367 = vpack.c.b16 %v309, %v308
  %v368 = vpack.c.b16 %v311, %v310
  %v369 = vpack.c.b16 %v313, %v312
  %v370 = vpack.c.b16 %v315, %v314
  %v371 = vpack.c.b16 %v317, %v316
  %v372 = vpack.c.b16 %v319, %v318
  %v373 = vpack.c.b16 %v321, %v320
  %v374 = vpack.c.b16 %v323, %v322
  %v375 = vpack.c.b16 %v325, %v324
  %v376 = vpack.c.b16 %v327, %v326
  %v377 = vpack.c.b16 %v329, %v328
  %426 = vmatpush.bf16.msra.mxu0 %v337
  %427 = vmatpush.bf16.msra.mxu0 %v336
  %428 = vmatpush.bf16.msra.mxu0 %v335
  %429 = vmatpush.bf16.msra.mxu0 %v334
  %430 = vmatpush.bf16.msra.mxu0 %v333
  %431 = vmatpush.bf16.msra.mxu0 %v332
  %432 = vmatpush.bf16.msra.mxu0 %v331
  %433 = vmatpush.bf16.msra.mxu0 %v330
  %434 = vmatmul.bf16.gmra.mxu0 %v126
  %v435 = vpop.f32.mrf.mxu0
  %v436 = vadd.f32 0.0, %v435
  %v437 = vpop.f32.mrf.mxu0
  %438 = vdwg.mxu0
  %439 = vmatpush.bf16.msra.mxu0 %v345
  %440 = vmatpush.bf16.msra.mxu0 %v344
  %441 = vmatpush.bf16.msra.mxu0 %v343
  %442 = vmatpush.bf16.msra.mxu0 %v342
  %443 = vmatpush.bf16.msra.mxu0 %v341
  %444 = vmatpush.bf16.msra.mxu0 %v340
  %445 = vmatpush.bf16.msra.mxu0 %v339
  %446 = vmatpush.bf16.msra.mxu0 %v338
  %447 = vmatmul.bf16.gmra.mxu0 %v127
  %v448 = vpop.f32.mrf.mxu0
  %v449 = vadd.f32 %v436, %v448
  %v450 = vpop.f32.mrf.mxu0
  %451 = vdwg.mxu0
  %452 = vmatpush.bf16.msra.mxu0 %v353
  %453 = vmatpush.bf16.msra.mxu0 %v352
  %454 = vmatpush.bf16.msra.mxu0 %v351
  %455 = vmatpush.bf16.msra.mxu0 %v350
  %456 = vmatpush.bf16.msra.mxu0 %v349
  %457 = vmatpush.bf16.msra.mxu0 %v348
  %458 = vmatpush.bf16.msra.mxu0 %v347
  %459 = vmatpush.bf16.msra.mxu0 %v346
  %460 = vmatmul.bf16.gmra.mxu0 %v128
  %v461 = vpop.f32.mrf.mxu0
  %v462 = vadd.f32 %v449, %v461
  %v463 = vpop.f32.mrf.mxu0
  %464 = vdwg.mxu0
  %465 = vmatpush.bf16.msra.mxu0 %v361
  %466 = vmatpush.bf16.msra.mxu0 %v360
  %467 = vmatpush.bf16.msra.mxu0 %v359
  %468 = vmatpush.bf16.msra.mxu0 %v358
  %469 = vmatpush.bf16.msra.mxu0 %v357
  %470 = vmatpush.bf16.msra.mxu0 %v356
  %471 = vmatpush.bf16.msra.mxu0 %v355
  %472 = vmatpush.bf16.msra.mxu0 %v354
  %473 = vmatmul.bf16.gmra.mxu0 %v129
  %v474 = vpop.f32.mrf.mxu0
  %v475 = vadd.f32 %v462, %v474
  %v476 = vpop.f32.mrf.mxu0
  %477 = vdwg.mxu0
  %478 = vmatpush.bf16.msra.mxu0 %v369
  %479 = vmatpush.bf16.msra.mxu0 %v368
  %480 = vmatpush.bf16.msra.mxu0 %v367
  %481 = vmatpush.bf16.msra.mxu0 %v366
  %482 = vmatpush.bf16.msra.mxu0 %v365
  %483 = vmatpush.bf16.msra.mxu0 %v364
  %484 = vmatpush.bf16.msra.mxu0 %v363
  %485 = vmatpush.bf16.msra.mxu0 %v362
  %486 = vmatmul.bf16.gmra.mxu0 %v130
  %v487 = vpop.f32.mrf.mxu0
  %v488 = vadd.f32 %v475, %v487
  %v489 = vpop.f32.mrf.mxu0
  %490 = vdwg.mxu0
  %491 = vmatpush.bf16.msra.mxu0 %v377
  %492 = vmatpush.bf16.msra.mxu0 %v376
  %493 = vmatpush.bf16.msra.mxu0 %v375
  %494 = vmatpush.bf16.msra.mxu0 %v374
  %495 = vmatpush.bf16.msra.mxu0 %v373
  %496 = vmatpush.bf16.msra.mxu0 %v372
  %497 = vmatpush.bf16.msra.mxu0 %v371
  %498 = vmatpush.bf16.msra.mxu0 %v370
  %499 = vmatmul.bf16.gmra.mxu0 %v131
  %v500 = vpop.f32.mrf.mxu0
  %v501 = vadd.f32 %v488, %v500
  %v502 = vpop.f32.mrf.mxu0
  %503 = vdwg.mxu0
  %v504 = vadd.f32 %v20, %v501
  %vm505 = vcmask 523264
  %506 = vst.msk [vmem:[#allocation2] sm:$0xff] %vm505, %v504
  // Predicated region
  $region14: #{mask_encoder_forward.15} parent=0 // pred_check
    %p507 = pneg %p11
  $region15: #{mask_encoder_forward.15} parent=0 // pred_check_branch
    %509 = sbr.rel (%p507) target = $region17
  $region16: #{mask_encoder_forward.15} parent=0 // pred_region
    %v510 = vld [vmem:[#allocation2] sm:$0xff]
    %511 = vst.msk [vmem:[%s2] sm:$0xff] %vm505, %v510
  $region17: #{mask_encoder_forward.15} parent=0 // pred_fallthru
    _
  // Predicated region
  $region18: #{mask_encoder_forward.15} parent=0 // pred_check
    _
  $region19: #{mask_encoder_forward.15} parent=0 // pred_check_branch
    %513 = sbr.rel (0) target = $region21
  $region20: #{mask_encoder_forward.15} parent=0 // pred_region
    _
  $region21: #{mask_encoder_forward.15} parent=0 // pred_fallthru
    _
  // Predicated region
  $region22: #{mask_encoder_forward.15} parent=0 // pred_check
    _
  $region23: #{mask_encoder_forward.15} parent=0 // pred_check_branch
    %515 = sbr.rel (0) target = $region25
  $region24: #{mask_encoder_forward.15} parent=0 // pred_region
    _
  $region25: #{mask_encoder_forward.15} parent=0 // pred_fallthru
    _

// kernel: mask_encoder_forward.19
$region0: #{mask_encoder_forward.19}
  #allocation0 [shape = 'u32[]', space=smem, size = 0x4, offset = 0x4, fixed_abs, tag = 'smem constant byte address 0x4 - core index']
  #allocation1 [shape = 'u32[72,128]{1,0:T(1,128)}', space=vmem, size = 0x9000, scoped, tag = 'internal scratch']
  #allocation2 [shape = 'f32[16,64]{1,0:T(8,128)}', space=vmem, size = 0x2000, scoped, tag = 'scratch operand']
  %s0 = inlined_call_operand.vmem [shape: bf16[16,64], index: 0, kind: input, shape index: {}]
  %s1 = inlined_call_operand.vmem [shape: bf16[64,64], index: 1, kind: input, shape index: {}]
  %s2 = inlined_call_operand.vmem [shape: f32[1,64], index: 2, kind: input, shape index: {}]
  %s3 = inlined_call_operand.vmem [shape: bf16[16,64], index: 3, kind: input, shape index: {}]
  %s4 = inlined_call_operand.vmem [shape: bf16[16,64], index: 4, kind: output, shape index: {}]
  %s5 = sld [smem:[#allocation0]]
  $region34: #{mask_encoder_forward.19} parent=0
    _
  %s7 = ssub.s32 1, %s5
  %s8 = scalar_select 0, %s7, %s5
  // Predicated region
  $region2: #{mask_encoder_forward.19} parent=0 // pred_check
    _
  $region3: #{mask_encoder_forward.19} parent=0 // pred_check_branch
    %10 = sbr.rel (0) target = $region5
  $region4: #{mask_encoder_forward.19} parent=0 // pred_region
    _
  $region5: #{mask_encoder_forward.19} parent=0 // pred_fallthru
    _
  // Predicated region
  $region6: #{mask_encoder_forward.19} parent=0 // pred_check
    _
  $region7: #{mask_encoder_forward.19} parent=0 // pred_check_branch
    %12 = sbr.rel (0) target = $region9
  $region8: #{mask_encoder_forward.19} parent=0 // pred_region
    _
  $region9: #{mask_encoder_forward.19} parent=0 // pred_fallthru
    _
  // Predicated region
  $region10: #{mask_encoder_forward.19} parent=0 // pred_check
    _
  $region11: #{mask_encoder_forward.19} parent=0 // pred_check_branch
    %14 = sbr.rel (0) target = $region13
  $region12: #{mask_encoder_forward.19} parent=0 // pred_region
    _
  $region13: #{mask_encoder_forward.19} parent=0 // pred_fallthru
    _
  // Predicated region
  $region14: #{mask_encoder_forward.19} parent=0 // pred_check
    _
  $region15: #{mask_encoder_forward.19} parent=0 // pred_check_branch
    %16 = sbr.rel (0) target = $region17
  $region16: #{mask_encoder_forward.19} parent=0 // pred_region
    _
  $region17: #{mask_encoder_forward.19} parent=0 // pred_fallthru
    _
  %p18 = scmp.eq.s32.totalorder 0, 0
  // Predicated region
  $region18: #{mask_encoder_forward.19} parent=0 // pred_check
    %p19 = pneg %p18
  $region19: #{mask_encoder_forward.19} parent=0 // pred_check_branch
    %21 = sbr.rel (%p19) target = $region21
  $region20: #{mask_encoder_forward.19} parent=0 // pred_region
    %vm22 = vcmask 523264
    %23 = vst.msk [vmem:[#allocation2] sm:$0xff] %vm22, 0.0
    %24 = vst.msk [vmem:[#allocation2 + $0x8] sm:$0xff] %vm22, 0.0
  $region21: #{mask_encoder_forward.19} parent=0 // pred_fallthru
    _
  %v25 = vld [vmem:[%s0] sm:$0xf]
  %v26 = vld [vmem:[%s0 + $0x4] sm:$0xf]
  %v27 = vld [vmem:[#allocation2] sm:$0xff]
  %v28 = vld [vmem:[#allocation2 + $0x8] sm:$0xff]
  %v29 = vld [vmem:[%s1] sm:$0xf]
  %v30 = vld [vmem:[%s1 + $0x4] sm:$0xf]
  %v31 = vld [vmem:[%s1 + $0x8] sm:$0xf]
  %v32 = vld [vmem:[%s1 + $0xc] sm:$0xf]
  %v33 = vld [vmem:[%s1 + $0x10] sm:$0xf]
  %v34 = vld [vmem:[%s1 + $0x14] sm:$0xf]
  %v35 = vld [vmem:[%s1 + $0x18] sm:$0xf]
  %v36 = vld [vmem:[%s1 + $0x1c] sm:$0xf]
  %v39 = vunpack.c.l.b16 %v25
  %v40 = vunpack.c.l.b16 %v26
  %v41 = vpack.c.b16 %v40, %v39
  %v50 = vunpack.c.l.b16 %v29
  %v51 = vunpack.c.l.b16 %v30
  %v52 = vunpack.c.l.b16 %v31
  %v53 = vunpack.c.l.b16 %v32
  %v54 = vunpack.c.l.b16 %v33
  %v55 = vunpack.c.l.b16 %v34
  %v56 = vunpack.c.l.b16 %v35
  %v57 = vunpack.c.l.b16 %v36
  %v58 = vpack.c.b16 %v51, %v50
  %v59 = vpack.c.b16 %v53, %v52
  %v60 = vpack.c.b16 %v55, %v54
  %v61 = vpack.c.b16 %v57, %v56
  %vm66 = vcmask 523264
  %v68 = vsel %vm66, %v41, 0
  %70 = vmatpush.bf16.msra.mxu0 0
  %71 = vmatpush.bf16.msra.mxu0 0
  %72 = vmatpush.bf16.msra.mxu0 0
  %73 = vmatpush.bf16.msra.mxu0 0
  %74 = vmatpush.bf16.msra.mxu0 %v61
  %75 = vmatpush.bf16.msra.mxu0 %v60
  %76 = vmatpush.bf16.msra.mxu0 %v59
  %77 = vmatpush.bf16.msra.mxu0 %v58
  %78 = vmatmul.bf16.gmra.mxu0 %v68
  %v79 = vpop.f32.mrf.mxu0
  %v80 = vadd.f32 0.0, %v79
  %v81 = vpop.f32.mrf.mxu0
  %v82 = vadd.f32 0.0, %v81
  %83 = vdwg.mxu0
  %v84 = vadd.f32 %v27, %v80
  %v85 = vadd.f32 %v28, %v82
  %86 = vst.msk [vmem:[#allocation2] sm:$0xff] %vm66, %v84
  %87 = vst.msk [vmem:[#allocation2 + $0x8] sm:$0xff] %vm66, %v85
  // Predicated region
  $region22: #{mask_encoder_forward.19} parent=0 // pred_check
    %p88 = pneg %p18
  $region23: #{mask_encoder_forward.19} parent=0 // pred_check_branch
    %90 = sbr.rel (%p88) target = $region25
  $region24: #{mask_encoder_forward.19} parent=0 // pred_region
    %v91 = vld [vmem:[#allocation2] sm:$0xff]
    %v92 = vld [vmem:[#allocation2 + $0x8] sm:$0xff]
    %v93 = vld [vmem:[%s2] sm:$0x1]
    %v95 = vperm.slane %v93, 0
    %v97 = vadd.f32 %v91, %v95
    %v98 = vadd.f32 %v92, %v95
    %v99 = vld [vmem:[%s3] sm:$0xf]
    %v100 = vld [vmem:[%s3 + $0x4] sm:$0xf]
    %v101 = vunpack.c.l.bf16 %v99
    %v102 = vunpack.c.l.bf16 %v100
    %v103 = vadd.f32 %v97, %v101
    %v104 = vadd.f32 %v98, %v102
    %v105 = vpack.c.bf16 %v103, %v103
    %v106 = vpack.c.bf16 %v104, %v104
    %vm107 = vcmask 519168
    %108 = vst.msk [vmem:[%s4] sm:$0xf] %vm107, %v105
    %109 = vst.msk [vmem:[%s4 + $0x4] sm:$0xf] %vm107, %v106
  $region25: #{mask_encoder_forward.19} parent=0 // pred_fallthru
    _
  // Predicated region
  $region26: #{mask_encoder_forward.19} parent=0 // pred_check
    _
  $region27: #{mask_encoder_forward.19} parent=0 // pred_check_branch
    %111 = sbr.rel (0) target = $region29
  $region28: #{mask_encoder_forward.19} parent=0 // pred_region
    _
  $region29: #{mask_encoder_forward.19} parent=0 // pred_fallthru
    _
  // Predicated region
  $region30: #{mask_encoder_forward.19} parent=0 // pred_check
    _
  $region31: #{mask_encoder_forward.19} parent=0 // pred_check_branch
    %113 = sbr.rel (0) target = $region33
  $region32: #{mask_encoder_forward.19} parent=0 // pred_region
    _
  $region33: #{mask_encoder_forward.19} parent=0 // pred_fallthru
    _

// kernel: mask_encoder_forward.20
$region0: #{mask_encoder_forward.20}
  #allocation0 [shape = 'u32[]', space=smem, size = 0x4, offset = 0x4, fixed_abs, tag = 'smem constant byte address 0x4 - core index']
  #allocation1 [shape = 'u32[72,128]{1,0:T(1,128)}', space=vmem, size = 0x9000, scoped, tag = 'internal scratch']
  #allocation2 [shape = 'f32[16,256]{1,0:T(8,128)}', space=vmem, size = 0x4000, scoped, tag = 'scratch operand']
  %s0 = inlined_call_operand.vmem [shape: bf16[16,64], index: 0, kind: input, shape index: {}]
  %s1 = inlined_call_operand.vmem [shape: bf16[64,256], index: 1, kind: input, shape index: {}]
  %s2 = inlined_call_operand.vmem [shape: f32[1,256], index: 2, kind: input, shape index: {}]
  %s3 = inlined_call_operand.vmem [shape: f32[1,64], index: 3, kind: input, shape index: {}]
  %s4 = inlined_call_operand.vmem [shape: f32[1,64], index: 4, kind: input, shape index: {}]
  %s5 = inlined_call_operand.vmem [shape: bf16[16,256], index: 5, kind: output, shape index: {}]
  %s6 = sld [smem:[#allocation0]]
  $region38: #{mask_encoder_forward.20} parent=0
    _
  %s8 = ssub.s32 1, %s6
  %s9 = scalar_select 0, %s8, %s6
  // Predicated region
  $region2: #{mask_encoder_forward.20} parent=0 // pred_check
    _
  $region3: #{mask_encoder_forward.20} parent=0 // pred_check_branch
    %11 = sbr.rel (0) target = $region5
  $region4: #{mask_encoder_forward.20} parent=0 // pred_region
    _
  $region5: #{mask_encoder_forward.20} parent=0 // pred_fallthru
    _
  // Predicated region
  $region6: #{mask_encoder_forward.20} parent=0 // pred_check
    _
  $region7: #{mask_encoder_forward.20} parent=0 // pred_check_branch
    %13 = sbr.rel (0) target = $region9
  $region8: #{mask_encoder_forward.20} parent=0 // pred_region
    _
  $region9: #{mask_encoder_forward.20} parent=0 // pred_fallthru
    _
  // Predicated region
  $region10: #{mask_encoder_forward.20} parent=0 // pred_check
    _
  $region11: #{mask_encoder_forward.20} parent=0 // pred_check_branch
    %15 = sbr.rel (0) target = $region13
  $region12: #{mask_encoder_forward.20} parent=0 // pred_region
    _
  $region13: #{mask_encoder_forward.20} parent=0 // pred_fallthru
    _
  // Predicated region
  $region14: #{mask_encoder_forward.20} parent=0 // pred_check
    _
  $region15: #{mask_encoder_forward.20} parent=0 // pred_check_branch
    %17 = sbr.rel (0) target = $region17
  $region16: #{mask_encoder_forward.20} parent=0 // pred_region
    _
  $region17: #{mask_encoder_forward.20} parent=0 // pred_fallthru
    _
  // Predicated region
  $region18: #{mask_encoder_forward.20} parent=0 // pred_check
    _
  $region19: #{mask_encoder_forward.20} parent=0 // pred_check_branch
    %19 = sbr.rel (0) target = $region21
  $region20: #{mask_encoder_forward.20} parent=0 // pred_region
    _
  $region21: #{mask_encoder_forward.20} parent=0 // pred_fallthru
    _
  %p21 = scmp.eq.s32.totalorder 0, 0
  // Predicated region
  $region22: #{mask_encoder_forward.20} parent=0 // pred_check
    %p22 = pneg %p21
  $region23: #{mask_encoder_forward.20} parent=0 // pred_check_branch
    %24 = sbr.rel (%p22) target = $region25
  $region24: #{mask_encoder_forward.20} parent=0 // pred_region
    %25 = vst [vmem:[#allocation2] sm:$0xff] 0.0
    %26 = vst [vmem:[#allocation2 + $0x8] sm:$0xff] 0.0
    %27 = vst [vmem:[#allocation2 + $0x10] sm:$0xff] 0.0
    %28 = vst [vmem:[#allocation2 + $0x18] sm:$0xff] 0.0
  $region25: #{mask_encoder_forward.20} parent=0 // pred_fallthru
    _
  %v29 = vld [vmem:[%s0] sm:$0xf]
  %v30 = vld [vmem:[%s0 + $0x4] sm:$0xf]
  %v31 = vunpack.c.l.bf16 %v29
  %v32 = vunpack.c.l.bf16 %v30
  %vm33 = vcmask 523264
  %v34 = vsel %vm33, %v31, 0.0
  %35 = vadd.xlane.f32.xlu0 %v34
  %v36 = vpop.xlane.xlu0 %35
  %v37 = vsel %vm33, %v32, 0.0
  %38 = vadd.xlane.f32.xlu0 %v37
  %v39 = vpop.xlane.xlu0 %38
  %v40 = vrcp.pop 64.0
  %v41 = vmul.f32 64.0, %v40
  %v42 = vsub.f32 1.0, %v41
  %v43 = vmul.f32 %v40, %v42
  %v44 = vadd.f32 %v40, %v43
  %vm45 = vweird.f32 %v40
  %v46 = vsel %vm45, %v40, %v44
  %v47 = vmul.f32 %v36, %v46
  %v48 = vmul.f32 %v39, %v46
  %v49 = vsub.f32 %v31, %v47
  %v50 = vsub.f32 %v32, %v48
  %v51 = vmul.f32 %v49, %v49
  %v52 = vmul.f32 %v50, %v50
  %v53 = vsel %vm33, %v51, 0.0
  %54 = vadd.xlane.f32.xlu0 %v53
  %v55 = vpop.xlane.xlu0 %54
  %v56 = vsel %vm33, %v52, 0.0
  %57 = vadd.xlane.f32.xlu0 %v56
  %v58 = vpop.xlane.xlu0 %57
  %v59 = vmul.f32 %v55, %v46
  %v60 = vmul.f32 %v58, %v46
  %v61 = vadd.f32 %v59, 1e-05
  %v62 = vadd.f32 %v60, 1e-05
  %v63 = vrsqrt.pop %v61
  %v64 = vmul.f32 %v63, %v61
  %v65 = vmul.f32 %v64, %v63
  %v66 = vmul.f32 0.5, %v65
  %v67 = vsub.f32 1.5, %v66
  %v68 = vmul.f32 %v63, %v67
  %vm69 = vweird.f32 %v61
  %vm70 = vweird.f32 %v63
  %vm71 = vmor %vm69, %vm70
  %v72 = vsel %vm71, %v63, %v68
  %v73 = vrsqrt.pop %v62
  %v74 = vmul.f32 %v73, %v62
  %v75 = vmul.f32 %v74, %v73
  %v76 = vmul.f32 0.5, %v75
  %v77 = vsub.f32 1.5, %v76
  %v78 = vmul.f32 %v73, %v77
  %vm79 = vweird.f32 %v62
  %vm80 = vweird.f32 %v73
  %vm81 = vmor %vm79, %vm80
  %v82 = vsel %vm81, %v73, %v78
  %v83 = vmul.f32 %v49, %v72
  %v84 = vmul.f32 %v50, %v82
  %v85 = vld [vmem:[%s3] sm:$0x1]
  %v87 = vperm.slane %v85, 0
  %v89 = vmul.f32 %v83, %v87
  %v90 = vmul.f32 %v84, %v87
  %v91 = vld [vmem:[%s4] sm:$0x1]
  %v93 = vperm.slane %v91, 0
  %v95 = vadd.f32 %v89, %v93
  %v96 = vadd.f32 %v90, %v93
  %v97 = vpack.c.bf16 %v96, %v95
  %v98 = vld [vmem:[#allocation2] sm:$0xff]
  %v99 = vld [vmem:[#allocation2 + $0x8] sm:$0xff]
  %v100 = vld [vmem:[#allocation2 + $0x10] sm:$0xff]
  %v101 = vld [vmem:[#allocation2 + $0x18] sm:$0xff]
  %v102 = vld [vmem:[%s1] sm:$0xff]
  %v103 = vld [vmem:[%s1 + $0x8] sm:$0xff]
  %v104 = vld [vmem:[%s1 + $0x10] sm:$0xff]
  %v105 = vld [vmem:[%s1 + $0x18] sm:$0xff]
  %v106 = vld [vmem:[%s1 + $0x20] sm:$0xff]
  %v107 = vld [vmem:[%s1 + $0x28] sm:$0xff]
  %v108 = vld [vmem:[%s1 + $0x30] sm:$0xff]
  %v109 = vld [vmem:[%s1 + $0x38] sm:$0xff]
  %v118 = vunpack.c.l.b16 %v102
  %v119 = vunpack.c.h.b16 %v102
  %v120 = vunpack.c.l.b16 %v103
  %v121 = vunpack.c.h.b16 %v103
  %v122 = vunpack.c.l.b16 %v104
  %v123 = vunpack.c.h.b16 %v104
  %v124 = vunpack.c.l.b16 %v105
  %v125 = vunpack.c.h.b16 %v105
  %v126 = vunpack.c.l.b16 %v106
  %v127 = vunpack.c.h.b16 %v106
  %v128 = vunpack.c.l.b16 %v107
  %v129 = vunpack.c.h.b16 %v107
  %v130 = vunpack.c.l.b16 %v108
  %v131 = vunpack.c.h.b16 %v108
  %v132 = vunpack.c.l.b16 %v109
  %v133 = vunpack.c.h.b16 %v109
  %v134 = vpack.c.b16 %v120, %v118
  %v135 = vpack.c.b16 %v121, %v119
  %v136 = vpack.c.b16 %v124, %v122
  %v137 = vpack.c.b16 %v125, %v123
  %v138 = vpack.c.b16 %v128, %v126
  %v139 = vpack.c.b16 %v129, %v127
  %v140 = vpack.c.b16 %v132, %v130
  %v141 = vpack.c.b16 %v133, %v131
  %v151 = vsel %vm33, %v97, 0
  %153 = vmatpush.bf16.msra.mxu0 0
  %154 = vmatpush.bf16.msra.mxu0 0
  %155 = vmatpush.bf16.msra.mxu0 0
  %156 = vmatpush.bf16.msra.mxu0 0
  %157 = vmatpush.bf16.msra.mxu0 %v140
  %158 = vmatpush.bf16.msra.mxu0 %v138
  %159 = vmatpush.bf16.msra.mxu0 %v136
  %160 = vmatpush.bf16.msra.mxu0 %v134
  %161 = vmatmul.bf16.gmra.mxu0 %v151
  %v162 = vpop.f32.mrf.mxu0
  %v163 = vadd.f32 0.0, %v162
  %v164 = vpop.f32.mrf.mxu0
  %v165 = vadd.f32 0.0, %v164
  %166 = vdwg.mxu0
  %167 = vmatpush.bf16.msra.mxu0 0
  %168 = vmatpush.bf16.msra.mxu0 0
  %169 = vmatpush.bf16.msra.mxu0 0
  %170 = vmatpush.bf16.msra.mxu0 0
  %171 = vmatpush.bf16.msra.mxu0 %v141
  %172 = vmatpush.bf16.msra.mxu0 %v139
  %173 = vmatpush.bf16.msra.mxu0 %v137
  %174 = vmatpush.bf16.msra.mxu0 %v135
  %175 = vmatmul.bf16.gmra.mxu0 %v151
  %v176 = vpop.f32.mrf.mxu0
  %v177 = vadd.f32 0.0, %v176
  %v178 = vpop.f32.mrf.mxu0
  %v179 = vadd.f32 0.0, %v178
  %180 = vdwg.mxu0
  %v181 = vadd.f32 %v98, %v163
  %v182 = vadd.f32 %v99, %v177
  %v183 = vadd.f32 %v100, %v165
  %v184 = vadd.f32 %v101, %v179
  %185 = vst [vmem:[#allocation2] sm:$0xff] %v181
  %186 = vst [vmem:[#allocation2 + $0x8] sm:$0xff] %v182
  %187 = vst [vmem:[#allocation2 + $0x10] sm:$0xff] %v183
  %188 = vst [vmem:[#allocation2 + $0x18] sm:$0xff] %v184
  // Predicated region
  $region26: #{mask_encoder_forward.20} parent=0 // pred_check
    %p189 = pneg %p21
  $region27: #{mask_encoder_forward.20} parent=0 // pred_check_branch
    %191 = sbr.rel (%p189) target = $region29
  $region28: #{mask_encoder_forward.20} parent=0 // pred_region
    %v192 = vld [vmem:[#allocation2] sm:$0xff]
    %v193 = vld [vmem:[#allocation2 + $0x8] sm:$0xff]
    %v194 = vld [vmem:[#allocation2 + $0x10] sm:$0xff]
    %v195 = vld [vmem:[#allocation2 + $0x18] sm:$0xff]
    %v196 = vld [vmem:[%s2] sm:$0x3]
    %v198 = vperm.slane %v196, 0
    %v199 = vperm.slane %v196, 1
    %v202 = vadd.f32 %v192, %v198
    %v203 = vadd.f32 %v193, %v199
    %v204 = vadd.f32 %v194, %v198
    %v205 = vadd.f32 %v195, %v199
    %v206 = vmul.f32 %v202, 1.702
    %v207 = vmul.f32 %v203, 1.702
    %v208 = vmul.f32 %v204, 1.702
    %v209 = vmul.f32 %v205, 1.702
    %v210 = vxor.u32 %v206, 2147483648
    %v211 = vxor.u32 %v207, 2147483648
    %v212 = vxor.u32 %v208, 2147483648
    %v213 = vxor.u32 %v209, 2147483648
    %v214 = vmul.f32 %v210, 1.442695
    %v215 = vpow.pop %v214
    %v216 = vmul.f32 %v211, 1.442695
    %v217 = vpow.pop %v216
    %v218 = vmul.f32 %v212, 1.442695
    %v219 = vpow.pop %v218
    %v220 = vmul.f32 %v213, 1.442695
    %v221 = vpow.pop %v220
    %v222 = vadd.f32 %v215, 1.0
    %v223 = vadd.f32 %v217, 1.0
    %v224 = vadd.f32 %v219, 1.0
    %v225 = vadd.f32 %v221, 1.0
    %v226 = vrcp.pop %v222
    %v227 = vmul.f32 %v222, %v226
    %v228 = vsub.f32 1.0, %v227
    %v229 = vmul.f32 %v226, %v228
    %v230 = vadd.f32 %v226, %v229
    %vm231 = vweird.f32 %v222
    %vm232 = vweird.f32 %v226
    %vm233 = vmor %vm231, %vm232
    %v234 = vsel %vm233, %v226, %v230
    %v235 = vand.u32 2147483647, %v222
    %vm236 = vcmp.eq.f32.partialorder %v235, 8.507059e+37
    %v237 = vand.u32 %v222, 2147483648
    %v238 = vor.u32 1.1754944e-38, %v237
    %v239 = vsel %vm236, %v238, %v234
    %v240 = vmul.f32 1.0, %v239
    %v241 = vrcp.pop %v223
    %v242 = vmul.f32 %v223, %v241
    %v243 = vsub.f32 1.0, %v242
    %v244 = vmul.f32 %v241, %v243
    %v245 = vadd.f32 %v241, %v244
    %vm246 = vweird.f32 %v223
    %vm247 = vweird.f32 %v241
    %vm248 = vmor %vm246, %vm247
    %v249 = vsel %vm248, %v241, %v245
    %v250 = vand.u32 2147483647, %v223
    %vm251 = vcmp.eq.f32.partialorder %v250, 8.507059e+37
    %v252 = vand.u32 %v223, 2147483648
    %v253 = vor.u32 1.1754944e-38, %v252
    %v254 = vsel %vm251, %v253, %v249
    %v255 = vmul.f32 1.0, %v254
    %v256 = vrcp.pop %v224
    %v257 = vmul.f32 %v224, %v256
    %v258 = vsub.f32 1.0, %v257
    %v259 = vmul.f32 %v256, %v258
    %v260 = vadd.f32 %v256, %v259
    %vm261 = vweird.f32 %v224
    %vm262 = vweird.f32 %v256
    %vm263 = vmor %vm261, %vm262
    %v264 = vsel %vm263, %v256, %v260
    %v265 = vand.u32 2147483647, %v224
    %vm266 = vcmp.eq.f32.partialorder %v265, 8.507059e+37
    %v267 = vand.u32 %v224, 2147483648
    %v268 = vor.u32 1.1754944e-38, %v267
    %v269 = vsel %vm266, %v268, %v264
    %v270 = vmul.f32 1.0, %v269
    %v271 = vrcp.pop %v225
    %v272 = vmul.f32 %v225, %v271
    %v273 = vsub.f32 1.0, %v272
    %v274 = vmul.f32 %v271, %v273
    %v275 = vadd.f32 %v271, %v274
    %vm276 = vweird.f32 %v225
    %vm277 = vweird.f32 %v271
    %vm278 = vmor %vm276, %vm277
    %v279 = vsel %vm278, %v271, %v275
    %v280 = vand.u32 2147483647, %v225
    %vm281 = vcmp.eq.f32.partialorder %v280, 8.507059e+37
    %v282 = vand.u32 %v225, 2147483648
    %v283 = vor.u32 1.1754944e-38, %v282
    %v284 = vsel %vm281, %v283, %v279
    %v285 = vmul.f32 1.0, %v284
    %v286 = vmul.f32 %v202, %v240
    %v287 = vmul.f32 %v203, %v255
    %v288 = vmul.f32 %v204, %v270
    %v289 = vmul.f32 %v205, %v285
    %v290 = vpack.c.bf16 %v287, %v286
    %v291 = vpack.c.bf16 %v289, %v288
    %292 = vst [vmem:[%s5] sm:$0xff] %v290
    %293 = vst [vmem:[%s5 + $0x8] sm:$0xff] %v291
  $region29: #{mask_encoder_forward.20} parent=0 // pred_fallthru
    _
  // Predicated region
  $region30: #{mask_encoder_forward.20} parent=0 // pred_check
    _
  $region31: #{mask_encoder_forward.20} parent=0 // pred_check_branch
    %295 = sbr.rel (0) target = $region33
  $region32: #{mask_encoder_forward.20} parent=0 // pred_region
    _
  $region33: #{mask_encoder_forward.20} parent=0 // pred_fallthru
    _
  // Predicated region
  $region34: #{mask_encoder_forward.20} parent=0 // pred_check
    _
  $region35: #{mask_encoder_forward.20} parent=0 // pred_check_branch
    %297 = sbr.rel (0) target = $region37
  $region36: #{mask_encoder_forward.20} parent=0 // pred_region
    _
  $region37: #{mask_encoder_forward.20} parent=0 // pred_fallthru
    _

// kernel: mask_encoder_forward.21
$region0: #{mask_encoder_forward.21}
  #allocation0 [shape = 'u32[]', space=smem, size = 0x4, offset = 0x4, fixed_abs, tag = 'smem constant byte address 0x4 - core index']
  #allocation1 [shape = 'u32[72,128]{1,0:T(1,128)}', space=vmem, size = 0x9000, scoped, tag = 'internal scratch']
  #allocation2 [shape = 'f32[16,64]{1,0:T(8,128)}', space=vmem, size = 0x2000, scoped, tag = 'scratch operand']
  %s0 = inlined_call_operand.vmem [shape: bf16[16,256], index: 0, kind: input, shape index: {}]
  %s1 = inlined_call_operand.vmem [shape: bf16[256,64], index: 1, kind: input, shape index: {}]
  %s2 = inlined_call_operand.vmem [shape: f32[1,64], index: 2, kind: input, shape index: {}]
  %s3 = inlined_call_operand.vmem [shape: bf16[16,64], index: 3, kind: input, shape index: {}]
  %s4 = inlined_call_operand.vmem [shape: bf16[16,64], index: 4, kind: output, shape index: {}]
  %s5 = sld [smem:[#allocation0]]
  $region34: #{mask_encoder_forward.21} parent=0
    _
  %s7 = ssub.s32 1, %s5
  %s8 = scalar_select 0, %s7, %s5
  // Predicated region
  $region2: #{mask_encoder_forward.21} parent=0 // pred_check
    _
  $region3: #{mask_encoder_forward.21} parent=0 // pred_check_branch
    %10 = sbr.rel (0) target = $region5
  $region4: #{mask_encoder_forward.21} parent=0 // pred_region
    _
  $region5: #{mask_encoder_forward.21} parent=0 // pred_fallthru
    _
  // Predicated region
  $region6: #{mask_encoder_forward.21} parent=0 // pred_check
    _
  $region7: #{mask_encoder_forward.21} parent=0 // pred_check_branch
    %12 = sbr.rel (0) target = $region9
  $region8: #{mask_encoder_forward.21} parent=0 // pred_region
    _
  $region9: #{mask_encoder_forward.21} parent=0 // pred_fallthru
    _
  // Predicated region
  $region10: #{mask_encoder_forward.21} parent=0 // pred_check
    _
  $region11: #{mask_encoder_forward.21} parent=0 // pred_check_branch
    %14 = sbr.rel (0) target = $region13
  $region12: #{mask_encoder_forward.21} parent=0 // pred_region
    _
  $region13: #{mask_encoder_forward.21} parent=0 // pred_fallthru
    _
  // Predicated region
  $region14: #{mask_encoder_forward.21} parent=0 // pred_check
    _
  $region15: #{mask_encoder_forward.21} parent=0 // pred_check_branch
    %16 = sbr.rel (0) target = $region17
  $region16: #{mask_encoder_forward.21} parent=0 // pred_region
    _
  $region17: #{mask_encoder_forward.21} parent=0 // pred_fallthru
    _
  %p17 = scmp.eq.s32.totalorder 0, 0
  // Predicated region
  $region18: #{mask_encoder_forward.21} parent=0 // pred_check
    %p18 = pneg %p17
  $region19: #{mask_encoder_forward.21} parent=0 // pred_check_branch
    %20 = sbr.rel (%p18) target = $region21
  $region20: #{mask_encoder_forward.21} parent=0 // pred_region
    %vm21 = vcmask 523264
    %22 = vst.msk [vmem:[#allocation2] sm:$0xff] %vm21, 0.0
    %23 = vst.msk [vmem:[#allocation2 + $0x8] sm:$0xff] %vm21, 0.0
  $region21: #{mask_encoder_forward.21} parent=0 // pred_fallthru
    _
  %v24 = vld [vmem:[%s0] sm:$0xff]
  %v25 = vld [vmem:[%s0 + $0x8] sm:$0xff]
  %v26 = vld [vmem:[#allocation2] sm:$0xff]
  %v27 = vld [vmem:[#allocation2 + $0x8] sm:$0xff]
  %v28 = vld [vmem:[%s1] sm:$0xf]
  %v29 = vld [vmem:[%s1 + $0x4] sm:$0xf]
  %v30 = vld [vmem:[%s1 + $0x8] sm:$0xf]
  %v31 = vld [vmem:[%s1 + $0xc] sm:$0xf]
  %v32 = vld [vmem:[%s1 + $0x10] sm:$0xf]
  %v33 = vld [vmem:[%s1 + $0x14] sm:$0xf]
  %v34 = vld [vmem:[%s1 + $0x18] sm:$0xf]
  %v35 = vld [vmem:[%s1 + $0x1c] sm:$0xf]
  %v36 = vld [vmem:[%s1 + $0x20] sm:$0xf]
  %v37 = vld [vmem:[%s1 + $0x24] sm:$0xf]
  %v38 = vld [vmem:[%s1 + $0x28] sm:$0xf]
  %v39 = vld [vmem:[%s1 + $0x2c] sm:$0xf]
  %v40 = vld [vmem:[%s1 + $0x30] sm:$0xf]
  %v41 = vld [vmem:[%s1 + $0x34] sm:$0xf]
  %v42 = vld [vmem:[%s1 + $0x38] sm:$0xf]
  %v43 = vld [vmem:[%s1 + $0x3c] sm:$0xf]
  %v44 = vld [vmem:[%s1 + $0x40] sm:$0xf]
  %v45 = vld [vmem:[%s1 + $0x44] sm:$0xf]
  %v46 = vld [vmem:[%s1 + $0x48] sm:$0xf]
  %v47 = vld [vmem:[%s1 + $0x4c] sm:$0xf]
  %v48 = vld [vmem:[%s1 + $0x50] sm:$0xf]
  %v49 = vld [vmem:[%s1 + $0x54] sm:$0xf]
  %v50 = vld [vmem:[%s1 + $0x58] sm:$0xf]
  %v51 = vld [vmem:[%s1 + $0x5c] sm:$0xf]
  %v52 = vld [vmem:[%s1 + $0x60] sm:$0xf]
  %v53 = vld [vmem:[%s1 + $0x64] sm:$0xf]
  %v54 = vld [vmem:[%s1 + $0x68] sm:$0xf]
  %v55 = vld [vmem:[%s1 + $0x6c] sm:$0xf]
  %v56 = vld [vmem:[%s1 + $0x70] sm:$0xf]
  %v57 = vld [vmem:[%s1 + $0x74] sm:$0xf]
  %v58 = vld [vmem:[%s1 + $0x78] sm:$0xf]
  %v59 = vld [vmem:[%s1 + $0x7c] sm:$0xf]
  %v62 = vunpack.c.l.b16 %v24
  %v63 = vunpack.c.h.b16 %v24
  %v64 = vunpack.c.l.b16 %v25
  %v65 = vunpack.c.h.b16 %v25
  %v66 = vpack.c.b16 %v64, %v62
  %v67 = vpack.c.b16 %v65, %v63
  %v102 = vunpack.c.l.b16 %v28
  %v103 = vunpack.c.l.b16 %v29
  %v104 = vunpack.c.l.b16 %v30
  %v105 = vunpack.c.l.b16 %v31
  %v106 = vunpack.c.l.b16 %v32
  %v107 = vunpack.c.l.b16 %v33
  %v108 = vunpack.c.l.b16 %v34
  %v109 = vunpack.c.l.b16 %v35
  %v110 = vunpack.c.l.b16 %v36
  %v111 = vunpack.c.l.b16 %v37
  %v112 = vunpack.c.l.b16 %v38
  %v113 = vunpack.c.l.b16 %v39
  %v114 = vunpack.c.l.b16 %v40
  %v115 = vunpack.c.l.b16 %v41
  %v116 = vunpack.c.l.b16 %v42
  %v117 = vunpack.c.l.b16 %v43
  %v118 = vunpack.c.l.b16 %v44
  %v119 = vunpack.c.l.b16 %v45
  %v120 = vunpack.c.l.b16 %v46
  %v121 = vunpack.c.l.b16 %v47
  %v122 = vunpack.c.l.b16 %v48
  %v123 = vunpack.c.l.b16 %v49
  %v124 = vunpack.c.l.b16 %v50
  %v125 = vunpack.c.l.b16 %v51
  %v126 = vunpack.c.l.b16 %v52
  %v127 = vunpack.c.l.b16 %v53
  %v128 = vunpack.c.l.b16 %v54
  %v129 = vunpack.c.l.b16 %v55
  %v130 = vunpack.c.l.b16 %v56
  %v131 = vunpack.c.l.b16 %v57
  %v132 = vunpack.c.l.b16 %v58
  %v133 = vunpack.c.l.b16 %v59
  %v134 = vpack.c.b16 %v103, %v102
  %v135 = vpack.c.b16 %v105, %v104
  %v136 = vpack.c.b16 %v107, %v106
  %v137 = vpack.c.b16 %v109, %v108
  %v138 = vpack.c.b16 %v111, %v110
  %v139 = vpack.c.b16 %v113, %v112
  %v140 = vpack.c.b16 %v115, %v114
  %v141 = vpack.c.b16 %v117, %v116
  %v142 = vpack.c.b16 %v119, %v118
  %v143 = vpack.c.b16 %v121, %v120
  %v144 = vpack.c.b16 %v123, %v122
  %v145 = vpack.c.b16 %v125, %v124
  %v146 = vpack.c.b16 %v127, %v126
  %v147 = vpack.c.b16 %v129, %v128
  %v148 = vpack.c.b16 %v131, %v130
  %v149 = vpack.c.b16 %v133, %v132
  %166 = vmatpush.bf16.msra.mxu0 %v141
  %167 = vmatpush.bf16.msra.mxu0 %v140
  %168 = vmatpush.bf16.msra.mxu0 %v139
  %169 = vmatpush.bf16.msra.mxu0 %v138
  %170 = vmatpush.bf16.msra.mxu0 %v137
  %171 = vmatpush.bf16.msra.mxu0 %v136
  %172 = vmatpush.bf16.msra.mxu0 %v135
  %173 = vmatpush.bf16.msra.mxu0 %v134
  %174 = vmatmul.bf16.gmra.mxu0 %v66
  %v175 = vpop.f32.mrf.mxu0
  %v176 = vadd.f32 0.0, %v175
  %v177 = vpop.f32.mrf.mxu0
  %v178 = vadd.f32 0.0, %v177
  %179 = vdwg.mxu0
  %180 = vmatpush.bf16.msra.mxu0 %v149
  %181 = vmatpush.bf16.msra.mxu0 %v148
  %182 = vmatpush.bf16.msra.mxu0 %v147
  %183 = vmatpush.bf16.msra.mxu0 %v146
  %184 = vmatpush.bf16.msra.mxu0 %v145
  %185 = vmatpush.bf16.msra.mxu0 %v144
  %186 = vmatpush.bf16.msra.mxu0 %v143
  %187 = vmatpush.bf16.msra.mxu0 %v142
  %188 = vmatmul.bf16.gmra.mxu0 %v67
  %v189 = vpop.f32.mrf.mxu0
  %v190 = vadd.f32 %v176, %v189
  %v191 = vpop.f32.mrf.mxu0
  %v192 = vadd.f32 %v178, %v191
  %193 = vdwg.mxu0
  %v194 = vadd.f32 %v26, %v190
  %v195 = vadd.f32 %v27, %v192
  %vm196 = vcmask 523264
  %197 = vst.msk [vmem:[#allocation2] sm:$0xff] %vm196, %v194
  %198 = vst.msk [vmem:[#allocation2 + $0x8] sm:$0xff] %vm196, %v195
  // Predicated region
  $region22: #{mask_encoder_forward.21} parent=0 // pred_check
    %p199 = pneg %p17
  $region23: #{mask_encoder_forward.21} parent=0 // pred_check_branch
    %201 = sbr.rel (%p199) target = $region25
  $region24: #{mask_encoder_forward.21} parent=0 // pred_region
    %v202 = vld [vmem:[#allocation2] sm:$0xff]
    %v203 = vld [vmem:[#allocation2 + $0x8] sm:$0xff]
    %v204 = vld [vmem:[%s2] sm:$0x1]
    %v206 = vperm.slane %v204, 0
    %v208 = vadd.f32 %v202, %v206
    %v209 = vadd.f32 %v203, %v206
    %v210 = vld [vmem:[%s3] sm:$0xf]
    %v211 = vld [vmem:[%s3 + $0x4] sm:$0xf]
    %v212 = vunpack.c.l.bf16 %v210
    %v213 = vunpack.c.l.bf16 %v211
    %v214 = vadd.f32 %v208, %v212
    %v215 = vadd.f32 %v209, %v213
    %v216 = vpack.c.bf16 %v214, %v214
    %v217 = vpack.c.bf16 %v215, %v215
    %vm218 = vcmask 519168
    %219 = vst.msk [vmem:[%s4] sm:$0xf] %vm218, %v216
    %220 = vst.msk [vmem:[%s4 + $0x4] sm:$0xf] %vm218, %v217
  $region25: #{mask_encoder_forward.21} parent=0 // pred_fallthru
    _
  // Predicated region
  $region26: #{mask_encoder_forward.21} parent=0 // pred_check
    _
  $region27: #{mask_encoder_forward.21} parent=0 // pred_check_branch
    %222 = sbr.rel (0) target = $region29
  $region28: #{mask_encoder_forward.21} parent=0 // pred_region
    _
  $region29: #{mask_encoder_forward.21} parent=0 // pred_fallthru
    _
  // Predicated region
  $region30: #{mask_encoder_forward.21} parent=0 // pred_check
    _
  $region31: #{mask_encoder_forward.21} parent=0 // pred_check_branch
    %224 = sbr.rel (0) target = $region33
  $region32: #{mask_encoder_forward.21} parent=0 // pred_region
    _
  $region33: #{mask_encoder_forward.21} parent=0 // pred_fallthru
    _

// kernel: mask_encoder_forward.27
$region0: #{mask_encoder_forward.27}
  #allocation0 [shape = 'u32[]', space=smem, size = 0x4, offset = 0x4, fixed_abs, tag = 'smem constant byte address 0x4 - core index']
  #allocation1 [shape = 'u32[72,128]{1,0:T(1,128)}', space=vmem, size = 0x9000, scoped, tag = 'internal scratch']
  #allocation2 [shape = 'f32[2,32]{1,0:T(2,128)}', space=vmem, size = 0x400, scoped, tag = 'scratch operand']
  %s0 = inlined_call_operand.vmem [shape: bf16[2,64], index: 0, kind: input, shape index: {}]
  %s1 = inlined_call_operand.vmem [shape: bf16[64,32], index: 1, kind: input, shape index: {}]
  %s2 = inlined_call_operand.vmem [shape: f32[1,64], index: 2, kind: input, shape index: {}]
  %s3 = inlined_call_operand.vmem [shape: f32[1,64], index: 3, kind: input, shape index: {}]
  %s4 = inlined_call_operand.hbm [shape: f32[2,32], index: 4, kind: output, shape index: {}]
  %s5 = sld [smem:[#allocation0]]
  $region34: #{mask_encoder_forward.27} parent=0
    _
  %s7 = ssub.s32 1, %s5
  %s8 = scalar_select 0, %s7, %s5
  $region1: #{mask_encoder_forward.27} parent=0
    #allocation3 [shape = 'u8[1024]{0}', space=vmem, size = 0x400, scoped, tag = 'output window, operand 0, single buffered']
    #allocation4 [shape = 's32[1]{0}', space=sflag, size = 0x4, scoped, tag = 'scoped memory for mask_encoder_forward.27']
    %9 = vsyncpa [#allocation4], 0
    // Predicated region
    $region2: #{mask_encoder_forward.27} parent=1 // pred_check
      _
    $region3: #{mask_encoder_forward.27} parent=1 // pred_check_branch
      %11 = sbr.rel (0) target = $region5
    $region4: #{mask_encoder_forward.27} parent=1 // pred_region
      _
    $region5: #{mask_encoder_forward.27} parent=1 // pred_fallthru
      _
    // Predicated region
    $region6: #{mask_encoder_forward.27} parent=1 // pred_check
      _
    $region7: #{mask_encoder_forward.27} parent=1 // pred_check_branch
      %13 = sbr.rel (0) target = $region9
    $region8: #{mask_encoder_forward.27} parent=1 // pred_region
      _
    $region9: #{mask_encoder_forward.27} parent=1 // pred_fallthru
      _
    // Predicated region
    $region10: #{mask_encoder_forward.27} parent=1 // pred_check
      _
    $region11: #{mask_encoder_forward.27} parent=1 // pred_check_branch
      %15 = sbr.rel (0) target = $region13
    $region12: #{mask_encoder_forward.27} parent=1 // pred_region
      _
    $region13: #{mask_encoder_forward.27} parent=1 // pred_fallthru
      _
    // Predicated region
    $region14: #{mask_encoder_forward.27} parent=1 // pred_check
      _
    $region15: #{mask_encoder_forward.27} parent=1 // pred_check_branch
      %17 = sbr.rel (0) target = $region17
    $region16: #{mask_encoder_forward.27} parent=1 // pred_region
      _
    $region17: #{mask_encoder_forward.27} parent=1 // pred_fallthru
      _
    %p19 = scmp.eq.s32.totalorder 0, 0
    // Predicated region
    $region18: #{mask_encoder_forward.27} parent=1 // pred_check
      %p20 = pneg %p19
    $region19: #{mask_encoder_forward.27} parent=1 // pred_check_branch
      %22 = sbr.rel (%p20) target = $region21
    $region20: #{mask_encoder_forward.27} parent=1 // pred_region
      %vm23 = vcmask 254976
      %24 = vst.msk [vmem:[#allocation2] sm:$0x3] %vm23, 0.0
    $region21: #{mask_encoder_forward.27} parent=1 // pred_fallthru
      _
    %v25 = vld [vmem:[%s0] sm:$0x1]
    %v26 = vunpack.c.l.bf16 %v25
    %vm27 = vcmask 517120
    %v28 = vsel %vm27, %v26, 0.0
    %29 = vadd.xlane.f32.xlu0 %v28
    %v30 = vpop.xlane.xlu0 %29
    %v31 = vrcp.pop 64.0
    %v32 = vmul.f32 64.0, %v31
    %v33 = vsub.f32 1.0, %v32
    %v34 = vmul.f32 %v31, %v33
    %v35 = vadd.f32 %v31, %v34
    %vm36 = vweird.f32 %v31
    %v37 = vsel %vm36, %v31, %v35
    %v38 = vmul.f32 %v30, %v37
    %v39 = vsub.f32 %v26, %v38
    %v40 = vmul.f32 %v39, %v39
    %v41 = vsel %vm27, %v40, 0.0
    %42 = vadd.xlane.f32.xlu0 %v41
    %v43 = vpop.xlane.xlu0 %42
    %v44 = vmul.f32 %v43, %v37
    %v45 = vadd.f32 %v44, 1e-05
    %v46 = vrsqrt.pop %v45
    %v47 = vmul.f32 %v46, %v45
    %v48 = vmul.f32 %v47, %v46
    %v49 = vmul.f32 0.5, %v48
    %v50 = vsub.f32 1.5, %v49
    %v51 = vmul.f32 %v46, %v50
    %vm52 = vweird.f32 %v45
    %vm53 = vweird.f32 %v46
    %vm54 = vmor %vm52, %vm53
    %v55 = vsel %vm54, %v46, %v51
    %v56 = vmul.f32 %v39, %v55
    %v57 = vld [vmem:[%s2] sm:$0x1]
    %v59 = vperm.slane %v57, 0
    %v61 = vmul.f32 %v56, %v59
    %v62 = vld [vmem:[%s3] sm:$0x1]
    %v64 = vperm.slane %v62, 0
    %v66 = vadd.f32 %v61, %v64
    %v67 = vpack.c.bf16 %v66, %v66
    %v68 = vld [vmem:[#allocation2] sm:$0x3]
    %v69 = vld [vmem:[%s1] sm:$0xf]
    %v70 = vld [vmem:[%s1 + $0x4] sm:$0xf]
    %v71 = vld [vmem:[%s1 + $0x8] sm:$0xf]
    %v72 = vld [vmem:[%s1 + $0xc] sm:$0xf]
    %v73 = vld [vmem:[%s1 + $0x10] sm:$0xf]
    %v74 = vld [vmem:[%s1 + $0x14] sm:$0xf]
    %v75 = vld [vmem:[%s1 + $0x18] sm:$0xf]
    %v76 = vld [vmem:[%s1 + $0x1c] sm:$0xf]
    %v85 = vunpack.c.l.b16 %v69
    %v86 = vunpack.c.l.b16 %v70
    %v87 = vunpack.c.l.b16 %v71
    %v88 = vunpack.c.l.b16 %v72
    %v89 = vunpack.c.l.b16 %v73
    %v90 = vunpack.c.l.b16 %v74
    %v91 = vunpack.c.l.b16 %v75
    %v92 = vunpack.c.l.b16 %v76
    %v93 = vpack.c.b16 %v86, %v85
    %v94 = vpack.c.b16 %v88, %v87
    %v95 = vpack.c.b16 %v90, %v89
    %v96 = vpack.c.b16 %v92, %v91
    %vm101 = vcmask 523264
    %v103 = vsel %vm101, %v67, 0
    %105 = vmatpush.bf16.msra.mxu0 0
    %106 = vmatpush.bf16.msra.mxu0 0
    %107 = vmatpush.bf16.msra.mxu0 0
    %108 = vmatpush.bf16.msra.mxu0 0
    %109 = vmatpush.bf16.msra.mxu0 %v96
    %110 = vmatpush.bf16.msra.mxu0 %v95
    %111 = vmatpush.bf16.msra.mxu0 %v94
    %112 = vmatpush.bf16.msra.mxu0 %v93
    %113 = vmatmul.bf16.gmra.mxu0 %v103
    %v114 = vpop.f32.mrf.mxu0
    %v115 = vadd.f32 0.0, %v114
    %v116 = vpop.f32.mrf.mxu0
    %117 = vdwg.mxu0
    %v118 = vadd.f32 %v68, %v115
    %vm119 = vcmask 254976
    %120 = vst.msk [vmem:[#allocation2] sm:$0x3] %vm119, %v118
    // Predicated region
    $region22: #{mask_encoder_forward.27} parent=1 // pred_check
      %p121 = pneg %p19
    $region23: #{mask_encoder_forward.27} parent=1 // pred_check_branch
      %123 = sbr.rel (%p121) target = $region25
    $region24: #{mask_encoder_forward.27} parent=1 // pred_region
      %v124 = vld [vmem:[#allocation2] sm:$0x3]
      %125 = vst.msk [vmem:[#allocation3] sm:$0x3] %vm119, %v124
    $region25: #{mask_encoder_forward.27} parent=1 // pred_fallthru
      _
    // Predicated region
    $region26: #{mask_encoder_forward.27} parent=1 // pred_check
      _
    $region27: #{mask_encoder_forward.27} parent=1 // pred_check_branch
      %127 = sbr.rel (0) target = $region29
    $region28: #{mask_encoder_forward.27} parent=1 // pred_region
      %129 = vsyncadd [#allocation4], 0
      %s131 = sshll.u32 [#allocation3], 4
      %s132 = int_to_ptr.vmem [resolvable:$true] %s131
      %s133 = sshll.u32 %s4, 4
      %s134 = int_to_ptr.hbm [resolvable:$true] %s133
      %136 = dma.vmem_to_hbm [thread:$0]  %s132, 32, %s134, [#allocation4]
    $region29: #{mask_encoder_forward.27} parent=1 // pred_fallthru
      _
    // Predicated region
    $region30: #{mask_encoder_forward.27} parent=1 // pred_check
      _
    $region31: #{mask_encoder_forward.27} parent=1 // pred_check_branch
      %138 = sbr.rel (0) target = $region33
    $region32: #{mask_encoder_forward.27} parent=1 // pred_region
      %140 = dma.done [#allocation4], 32
    $region33: #{mask_encoder_forward.27} parent=1 // pred_fallthru
      _
    %141 = vsyncpa [#allocation4], 1

</llo_original>
